<compile_context>
chip_gen: v5e
topology: v5e:2x2
jax: 0.10.0
libtpu: 0.0.40
codegen_flags: <defaults>
</compile_context>

<pallas_src>
import jax
import jax.numpy as jnp
from jax.experimental import pallas as pl
from jax.experimental.pallas import tpu as pltpu

_VMEM = pl.BlockSpec(memory_space=pltpu.MemorySpace.VMEM)
_SMEM = pl.BlockSpec(memory_space=pltpu.MemorySpace.SMEM)
_NEG = -1e30  # argmax mask for padded vocab columns (never written to output)


def _round_up(x, m):
    return ((x + m - 1) // m) * m


# ----------------------------------------------------------------------------
# Fused Seq2Seq kernel (encoder + decoder in one launch)
# ----------------------------------------------------------------------------
def _make_seq2seq_kernel(n_layers, hid_dim, src_len, dec_steps, out_dim):
    H = hid_dim
    n_rest = n_layers - 1

    def cell_from_gates(gates, c):
        # 2 wide EUP passes on the lane-dense (B_pad, 4H) gates value, then slice
        sig = jax.nn.sigmoid(gates)
        th = jnp.tanh(gates)
        i_g = sig[:, 0 * H:1 * H]
        f_g = sig[:, 1 * H:2 * H]
        g_g = th[:, 2 * H:3 * H]
        o_g = sig[:, 3 * H:4 * H]
        c_new = f_g * c + i_g * g_g
        h_new = o_g * jnp.tanh(c_new)
        return h_new, c_new

    def kernel(enc_gates_ref, trg_gates_ref, tf_ref, *refs):
        # layer 0 params: (whh, b)   (W_ih already folded into precomputed gates)
        # layer l>=1    : (wih, whh, b)
        pos = 0
        enc_l0 = refs[pos:pos + 2]; pos += 2
        enc_rest = [refs[pos + 3 * l: pos + 3 * l + 3] for l in range(n_rest)]
        pos += 3 * n_rest
        dec_l0 = refs[pos:pos + 2]; pos += 2
        dec_rest = [refs[pos + 3 * l: pos + 3 * l + 3] for l in range(n_rest)]
        pos += 3 * n_rest
        (dec_emb_w_ref, fc_w_ref, fc_b_ref,
         out_ref, h_scr, c_scr, xg_scr) = refs[pos:pos + 7]

        b_pad = out_ref.shape[1]
        v_pad = out_ref.shape[2]

        def stacked_step(xg, l0, rest):
            # layer 0: input projection precomputed -> only h @ W_hh on the chain
            whh0, b0 = l0
            gates = (xg
                     + jnp.dot(h_scr[0], whh0[...],
                               preferred_element_type=jnp.float32)
                     + b0[...])
            h_new, c_new = cell_from_gates(gates, c_scr[0])
            h_scr[0] = h_new
            c_scr[0] = c_new
            x = h_new
            for l, (wih, whh, b) in enumerate(rest, start=1):
                gates = (jnp.dot(x, wih[...], preferred_element_type=jnp.float32)
                         + jnp.dot(h_scr[l], whh[...],
                                   preferred_element_type=jnp.float32)
                         + b[...])
                h_new, c_new = cell_from_gates(gates, c_scr[l])
                h_scr[l] = h_new
                c_scr[l] = c_new
                x = h_new
            return x

        # zero-init recurrent state (encoder final state feeds decoder directly)
        h_scr[...] = jnp.zeros_like(h_scr)
        c_scr[...] = jnp.zeros_like(c_scr)

        # outputs[0] stays zero (written in-kernel, no wrapper-side copy)
        out_ref[0] = jnp.zeros((b_pad, v_pad), jnp.float32)

        # ----------------------- encoder time loop (unrolled) ----------------
        for t in range(src_len):
            stacked_step(enc_gates_ref[t], enc_l0, enc_rest)

        # ----------------------- decoder time loop (unrolled) ----------------
        # xg_scr holds the layer-0 input gates (x @ W_ih) of the current input.
        xg_scr[...] = trg_gates_ref[0]                      # input = trg[0]
        lane_iota = jax.lax.broadcasted_iota(jnp.int32, (b_pad, v_pad), 1)

        for j in range(dec_steps):
            h_top = stacked_step(xg_scr[...], dec_l0, dec_rest)
            logits = (jnp.dot(h_top, fc_w_ref[...],
                              preferred_element_type=jnp.float32)
                      + fc_b_ref[...])                      # (B_pad, V_pad)
            out_ref[j + 1] = logits

            if j < dec_steps - 1:                           # last step: no feedback
                tf = tf_ref[j]

                @pl.when(tf == 1)
                def _():
                    # teacher forcing: next input gates precomputed in wrapper
                    xg_scr[...] = trg_gates_ref[j + 1]

                @pl.when(tf == 0)
                def _():
                    # argmax over real vocab columns ("first max wins"), then
                    # one-hot @ (embedding @ W_ih) combined table
                    masked = jnp.where(lane_iota < out_dim, logits, _NEG)
                    row_max = jnp.max(masked, axis=-1, keepdims=True)
                    cand = jnp.where(masked == row_max, lane_iota, v_pad)
                    arg = jnp.min(cand, axis=-1, keepdims=True)
                    top1_oh = (lane_iota == arg).astype(jnp.float32)
                    xg_scr[...] = jnp.dot(top1_oh, dec_emb_w_ref[...],
                                          preferred_element_type=jnp.float32)

    return kernel


# ----------------------------------------------------------------------------
# Forward pass (jit-compiled end to end)
# ----------------------------------------------------------------------------
def seq2seq_forward(params, src, trg, rng_key, teacher_forcing_ratio=0.5):
    """Mirrors Seq2Seq.forward: returns (trg_len, B, V); outputs[0] stays 0."""
    src_len, batch = src.shape
    trg_len, _ = trg.shape
    n_layers = len(params["enc_lstm"])
    hid_dim = params["enc_lstm"][0]["whh"].shape[0]
    output_dim = params["fc_w"].shape[1]
    enc_emb_dim = params["enc_embedding"].shape[1]
    dec_emb_dim = params["dec_embedding"].shape[1]

    b_pad = _round_up(batch, 8)            # full f32 sublane tile
    v_pad = _round_up(output_dim, 128)     # lane-dense logits
    dec_steps = trg_len - 1

    # ---- wrapper-side prep (fused by XLA, all off the serial chain) ----
    # encoder: embed src and precompute layer-0 input projection for every step
    src_emb = jnp.take(params["enc_embedding"], src, axis=0)        # (S,B,E)
    src_emb = jnp.pad(src_emb, ((0, 0), (0, b_pad - batch), (0, 0)))
    enc_gates = jnp.einsum("sbe,eg->sbg", src_emb,
                           params["enc_lstm"][0]["wih"])            # (S,Bp,4H)

    # decoder teacher-forced path: embed trg and precompute layer-0 projection
    trg_emb = jnp.take(params["dec_embedding"], trg, axis=0)        # (T,B,E)
    trg_emb = jnp.pad(trg_emb, ((0, 0), (0, b_pad - batch), (0, 0)))
    trg_gates = jnp.einsum("tbe,eg->tbg", trg_emb,
                           params["dec_lstm"][0]["wih"])            # (T,Bp,4H)

    # decoder argmax-feedback path: combined (embedding @ W_ih) table, V-padded
    dec_emb_w = jnp.zeros((v_pad, 4 * hid_dim), jnp.float32)
    dec_emb_w = dec_emb_w.at[:output_dim].set(
        params["dec_embedding"] @ params["dec_lstm"][0]["wih"])     # (Vp,4H)

    fc_w_pad = jnp.zeros((hid_dim, v_pad), jnp.float32)
    fc_w_pad = fc_w_pad.at[:, :output_dim].set(params["fc_w"])
    fc_b_pad = jnp.zeros((1, v_pad), jnp.float32)
    fc_b_pad = fc_b_pad.at[:, :output_dim].set(params["fc_b"])

    tf_flags = (jax.random.uniform(rng_key, (dec_steps,))
                < teacher_forcing_ratio).astype(jnp.int32)          # SMEM table

    weight_args = []
    p0 = params["enc_lstm"][0]
    weight_args += [p0["whh"], p0["b"]]                 # layer 0: wih folded out
    for p in params["enc_lstm"][1:]:
        weight_args += [p["wih"], p["whh"], p["b"]]
    d0 = params["dec_lstm"][0]
    weight_args += [d0["whh"], d0["b"]]
    for p in params["dec_lstm"][1:]:
        weight_args += [p["wih"], p["whh"], p["b"]]

    kernel = _make_seq2seq_kernel(n_layers, hid_dim, src_len, dec_steps,
                                  output_dim)

    # rough advisory cost estimate for XLA's scheduler
    n_cells = (src_len + dec_steps) * n_layers
    flops = (2 * n_cells * b_pad * (max(enc_emb_dim, dec_emb_dim) + hid_dim)
             * 4 * hid_dim
             + 2 * dec_steps * b_pad * hid_dim * v_pad
             + 2 * dec_steps * b_pad * v_pad * 4 * hid_dim)
    transcendentals = n_cells * b_pad * 5 * hid_dim
    bytes_accessed = 4 * (enc_gates.size + trg_gates.size + dec_emb_w.size
                          + fc_w_pad.size + fc_b_pad.size
                          + trg_len * b_pad * v_pad
                          + sum(int(w.size) for w in weight_args))

    out = pl.pallas_call(
        kernel,
        out_shape=jax.ShapeDtypeStruct((trg_len, b_pad, v_pad), jnp.float32),
        in_specs=[_VMEM, _VMEM, _SMEM] + [_VMEM] * (len(weight_args) + 3),
        out_specs=_VMEM,
        scratch_shapes=[
            pltpu.VMEM((n_layers, b_pad, hid_dim), jnp.float32),   # h state
            pltpu.VMEM((n_layers, b_pad, hid_dim), jnp.float32),   # c state
            pltpu.VMEM((b_pad, 4 * hid_dim), jnp.float32),         # next-input gates
        ],
        cost_estimate=pl.CostEstimate(flops=int(flops),
                                      transcendentals=int(transcendentals),
                                      bytes_accessed=int(bytes_accessed)),
    )(enc_gates, trg_gates, tf_flags, *weight_args,
      dec_emb_w, fc_w_pad, fc_b_pad)

    return out[:, :batch, :output_dim]


# ----------------------------------------------------------------------------
# Parameter construction (deterministic, PyTorch-like uniform init)
# ----------------------------------------------------------------------------
def _uniform(key, shape, scale):
    return jax.random.uniform(key, shape, jnp.float32, -scale, scale)


def make_lstm_params(key, input_size, hid_dim, n_layers):
    params = []
    scale = 1.0 / jnp.sqrt(hid_dim)
    for layer in range(n_layers):
        in_sz = input_size if layer == 0 else hid_dim
        key, k1, k2, k3, k4 = jax.random.split(key, 5)
        wih = _uniform(k1, (in_sz, 4 * hid_dim), scale)      # (E, 4H) pre-T
        whh = _uniform(k2, (hid_dim, 4 * hid_dim), scale)    # (H, 4H) pre-T
        b_ih = _uniform(k3, (4 * hid_dim,), scale)
        b_hh = _uniform(k4, (4 * hid_dim,), scale)
        b = (b_ih + b_hh).reshape(1, 4 * hid_dim)
        params.append({"wih": wih, "whh": whh, "b": b})
    return params


def make_seq2seq_params(key, input_dim, output_dim, enc_emb, dec_emb,
                        hid_dim, n_layers):
    keys = jax.random.split(key, 6)
    enc_embedding = jax.random.normal(keys[0], (input_dim, enc_emb), jnp.float32)
    dec_embedding = jax.random.normal(keys[1], (output_dim, dec_emb), jnp.float32)
    enc_lstm = make_lstm_params(keys[2], enc_emb, hid_dim, n_layers)
    dec_lstm = make_lstm_params(keys[3], dec_emb, hid_dim, n_layers)
    scale = 1.0 / jnp.sqrt(hid_dim)
    fc_w = _uniform(keys[4], (hid_dim, output_dim), scale)   # (H, V) pre-T
    fc_b = _uniform(keys[5], (output_dim,), scale).reshape(1, output_dim)
    return {
        "enc_embedding": enc_embedding,
        "dec_embedding": dec_embedding,
        "enc_lstm": enc_lstm,
        "dec_lstm": dec_lstm,
        "fc_w": fc_w,
        "fc_b": fc_b,
    }


# ----------------------------------------------------------------------------
# main
# ----------------------------------------------------------------------------
if __name__ == "__main__":
    INPUT_DIM = 20     # encoder vocab
    OUTPUT_DIM = 24    # decoder vocab (decoder.output_dim)
    ENC_EMB = 32
    DEC_EMB = 32
    HID_DIM = 32
    N_LAYERS = 2
    SRC_LEN = 7
    TRG_LEN = 8
    BATCH = 2

    root = jax.random.PRNGKey(0)
    k_params, k_src, k_trg, k_tf = jax.random.split(root, 4)

    params = make_seq2seq_params(k_params, INPUT_DIM, OUTPUT_DIM,
                                 ENC_EMB, DEC_EMB, HID_DIM, N_LAYERS)

    src = jax.random.randint(k_src, (SRC_LEN, BATCH), 0, INPUT_DIM, jnp.int32)
    trg = jax.random.randint(k_trg, (TRG_LEN, BATCH), 0, OUTPUT_DIM, jnp.int32)

    forward = jax.jit(seq2seq_forward)
    outputs = forward(params, src, trg, k_tf, 0.5)
    outputs = jax.block_until_ready(outputs)

    assert outputs.shape == (TRG_LEN, BATCH, OUTPUT_DIM)
    assert bool(jnp.all(outputs[0] == 0.0))
    assert bool(jnp.all(jnp.isfinite(outputs)))
    print("KERNEL_OK")
</pallas_src>

<mosaic_0001>
module attributes {stable_mosaic.version = 11 : i64} {
  func.func @kernel(%arg0: memref<7x8x128xf32, #tpu.memory_space<vmem>>, %arg1: memref<8x8x128xf32, #tpu.memory_space<vmem>>, %arg2: memref<7xi32, #tpu.memory_space<smem>>, %arg3: memref<32x128xf32, #tpu.memory_space<vmem>>, %arg4: memref<1x128xf32, #tpu.memory_space<vmem>>, %arg5: memref<32x128xf32, #tpu.memory_space<vmem>>, %arg6: memref<32x128xf32, #tpu.memory_space<vmem>>, %arg7: memref<1x128xf32, #tpu.memory_space<vmem>>, %arg8: memref<32x128xf32, #tpu.memory_space<vmem>>, %arg9: memref<1x128xf32, #tpu.memory_space<vmem>>, %arg10: memref<32x128xf32, #tpu.memory_space<vmem>>, %arg11: memref<32x128xf32, #tpu.memory_space<vmem>>, %arg12: memref<1x128xf32, #tpu.memory_space<vmem>>, %arg13: memref<128x128xf32, #tpu.memory_space<vmem>>, %arg14: memref<32x128xf32, #tpu.memory_space<vmem>>, %arg15: memref<1x128xf32, #tpu.memory_space<vmem>>, %arg16: memref<8x8x128xf32, #tpu.memory_space<vmem>>, %arg17: memref<2x8x32xf32, #tpu.memory_space<vmem>>, %arg18: memref<2x8x32xf32, #tpu.memory_space<vmem>>, %arg19: memref<8x128xf32, #tpu.memory_space<vmem>>) attributes {dimension_semantics = [], scalar_prefetch = 0 : i64, scratch_operands = 3 : i64, tpu.core_type = #tpu.core_type<tc>} {
    %cst = arith.constant 0.000000e+00 : f32
    %0 = vector.broadcast %cst : f32 to vector<2x8x32xf32>
    %c0 = arith.constant 0 : index
    %c0_0 = arith.constant 0 : index
    %c0_1 = arith.constant 0 : index
    %1 = vector.load %arg17[%c0, %c0_0, %c0_1] : memref<2x8x32xf32, #tpu.memory_space<vmem>>, vector<2x8x32xf32>
    tpu.vector_store %arg17[%c0, %c0_0, %c0_1], %0 {strides = array<i32>} : memref<2x8x32xf32, #tpu.memory_space<vmem>>, vector<2x8x32xf32>,
    %cst_2 = arith.constant 0.000000e+00 : f32
    %2 = vector.broadcast %cst_2 : f32 to vector<2x8x32xf32>
    %c0_3 = arith.constant 0 : index
    %c0_4 = arith.constant 0 : index
    %c0_5 = arith.constant 0 : index
    %3 = vector.load %arg18[%c0_3, %c0_4, %c0_5] : memref<2x8x32xf32, #tpu.memory_space<vmem>>, vector<2x8x32xf32>
    tpu.vector_store %arg18[%c0_3, %c0_4, %c0_5], %2 {strides = array<i32>} : memref<2x8x32xf32, #tpu.memory_space<vmem>>, vector<2x8x32xf32>,
    %cst_6 = arith.constant 0.000000e+00 : f32
    %4 = vector.broadcast %cst_6 : f32 to vector<8x128xf32>
    %c0_7 = arith.constant 0 : index
    %c0_8 = arith.constant 0 : index
    %c0_9 = arith.constant 0 : index
    %5 = vector.load %arg16[%c0_7, %c0_8, %c0_9] : memref<8x8x128xf32, #tpu.memory_space<vmem>>, vector<1x8x128xf32>
    %6 = vector.shape_cast %5 : vector<1x8x128xf32> to vector<8x128xf32>
    %7 = vector.shape_cast %4 : vector<8x128xf32> to vector<1x8x128xf32>
    tpu.vector_store %arg16[%c0_7, %c0_8, %c0_9], %7 {strides = array<i32>} : memref<8x8x128xf32, #tpu.memory_space<vmem>>, vector<1x8x128xf32>,
    %c0_10 = arith.constant 0 : index
    %c0_11 = arith.constant 0 : index
    %c0_12 = arith.constant 0 : index
    %8 = vector.load %arg0[%c0_10, %c0_11, %c0_12] : memref<7x8x128xf32, #tpu.memory_space<vmem>>, vector<1x8x128xf32>
    %9 = vector.shape_cast %8 : vector<1x8x128xf32> to vector<8x128xf32>
    %c0_13 = arith.constant 0 : index
    %c0_14 = arith.constant 0 : index
    %c0_15 = arith.constant 0 : index
    %10 = vector.load %arg17[%c0_13, %c0_14, %c0_15] : memref<2x8x32xf32, #tpu.memory_space<vmem>>, vector<1x8x32xf32>
    %11 = vector.shape_cast %10 : vector<1x8x32xf32> to vector<8x32xf32>
    %c0_16 = arith.constant 0 : index
    %c0_17 = arith.constant 0 : index
    %12 = vector.load %arg3[%c0_16, %c0_17] : memref<32x128xf32, #tpu.memory_space<vmem>>, vector<32x128xf32>
    %cst_18 = arith.constant dense<0.000000e+00> : vector<8x128xf32>
    %13 = tpu.matmul %11, %12, %cst_18 {dimension_numbers = #tpu.dot_dimension_numbers<[1], [0], [0], [1], [0, 0, 1, 1], [], []>} : vector<8x32xf32>, vector<32x128xf32>, vector<8x128xf32> -> vector<8x128xf32>
    %14 = arith.addf %9, %13 : vector<8x128xf32>
    %c0_19 = arith.constant 0 : index
    %c0_20 = arith.constant 0 : index
    %15 = vector.load %arg4[%c0_19, %c0_20] : memref<1x128xf32, #tpu.memory_space<vmem>>, vector<1x128xf32>
    %16 = vector.broadcast %15 : vector<1x128xf32> to vector<8x128xf32>
    %17 = arith.addf %14, %16 : vector<8x128xf32>
    %c0_21 = arith.constant 0 : index
    %c0_22 = arith.constant 0 : index
    %c0_23 = arith.constant 0 : index
    %18 = vector.load %arg18[%c0_21, %c0_22, %c0_23] : memref<2x8x32xf32, #tpu.memory_space<vmem>>, vector<1x8x32xf32>
    %19 = vector.shape_cast %18 : vector<1x8x32xf32> to vector<8x32xf32>
    %20 = arith.negf %17 : vector<8x128xf32>
    %21 = math.exp %20 : vector<8x128xf32>
    %cst_24 = arith.constant 1.000000e+00 : f32
    %22 = vector.broadcast %cst_24 : f32 to vector<8x128xf32>
    %23 = arith.addf %22, %21 : vector<8x128xf32>
    %24 = arith.divf %22, %23 : vector<8x128xf32>
    %25 = math.tanh %17 : vector<8x128xf32>
    %26 = vector.extract_strided_slice %24 {offsets = [0, 0], sizes = [8, 32], strides = [1, 1]} : vector<8x128xf32> to vector<8x32xf32>
    %27 = vector.extract_strided_slice %24 {offsets = [0, 32], sizes = [8, 32], strides = [1, 1]} : vector<8x128xf32> to vector<8x32xf32>
    %28 = vector.extract_strided_slice %25 {offsets = [0, 64], sizes = [8, 32], strides = [1, 1]} : vector<8x128xf32> to vector<8x32xf32>
    %29 = vector.extract_strided_slice %24 {offsets = [0, 96], sizes = [8, 32], strides = [1, 1]} : vector<8x128xf32> to vector<8x32xf32>
    %30 = arith.mulf %27, %19 : vector<8x32xf32>
    %31 = arith.mulf %26, %28 : vector<8x32xf32>
    %32 = arith.addf %30, %31 : vector<8x32xf32>
    %33 = math.tanh %32 : vector<8x32xf32>
    %34 = arith.mulf %29, %33 : vector<8x32xf32>
    %c0_25 = arith.constant 0 : index
    %c0_26 = arith.constant 0 : index
    %c0_27 = arith.constant 0 : index
    %35 = vector.load %arg17[%c0_25, %c0_26, %c0_27] : memref<2x8x32xf32, #tpu.memory_space<vmem>>, vector<1x8x32xf32>
    %36 = vector.shape_cast %35 : vector<1x8x32xf32> to vector<8x32xf32>
    %37 = vector.shape_cast %34 : vector<8x32xf32> to vector<1x8x32xf32>
    tpu.vector_store %arg17[%c0_25, %c0_26, %c0_27], %37 {strides = array<i32>} : memref<2x8x32xf32, #tpu.memory_space<vmem>>, vector<1x8x32xf32>,
    %c0_28 = arith.constant 0 : index
    %c0_29 = arith.constant 0 : index
    %c0_30 = arith.constant 0 : index
    %38 = vector.load %arg18[%c0_28, %c0_29, %c0_30] : memref<2x8x32xf32, #tpu.memory_space<vmem>>, vector<1x8x32xf32>
    %39 = vector.shape_cast %38 : vector<1x8x32xf32> to vector<8x32xf32>
    %40 = vector.shape_cast %32 : vector<8x32xf32> to vector<1x8x32xf32>
    tpu.vector_store %arg18[%c0_28, %c0_29, %c0_30], %40 {strides = array<i32>} : memref<2x8x32xf32, #tpu.memory_space<vmem>>, vector<1x8x32xf32>,
    %c0_31 = arith.constant 0 : index
    %c0_32 = arith.constant 0 : index
    %41 = vector.load %arg5[%c0_31, %c0_32] : memref<32x128xf32, #tpu.memory_space<vmem>>, vector<32x128xf32>
    %cst_33 = arith.constant dense<0.000000e+00> : vector<8x128xf32>
    %42 = tpu.matmul %34, %41, %cst_33 {dimension_numbers = #tpu.dot_dimension_numbers<[1], [0], [0], [1], [0, 0, 1, 1], [], []>} : vector<8x32xf32>, vector<32x128xf32>, vector<8x128xf32> -> vector<8x128xf32>
    %c1 = arith.constant 1 : index
    %c0_34 = arith.constant 0 : index
    %c0_35 = arith.constant 0 : index
    %43 = vector.load %arg17[%c1, %c0_34, %c0_35] : memref<2x8x32xf32, #tpu.memory_space<vmem>>, vector<1x8x32xf32>
    %44 = vector.shape_cast %43 : vector<1x8x32xf32> to vector<8x32xf32>
    %c0_36 = arith.constant 0 : index
    %c0_37 = arith.constant 0 : index
    %45 = vector.load %arg6[%c0_36, %c0_37] : memref<32x128xf32, #tpu.memory_space<vmem>>, vector<32x128xf32>
    %cst_38 = arith.constant dense<0.000000e+00> : vector<8x128xf32>
    %46 = tpu.matmul %44, %45, %cst_38 {dimension_numbers = #tpu.dot_dimension_numbers<[1], [0], [0], [1], [0, 0, 1, 1], [], []>} : vector<8x32xf32>, vector<32x128xf32>, vector<8x128xf32> -> vector<8x128xf32>
    %47 = arith.addf %42, %46 : vector<8x128xf32>
    %c0_39 = arith.constant 0 : index
    %c0_40 = arith.constant 0 : index
    %48 = vector.load %arg7[%c0_39, %c0_40] : memref<1x128xf32, #tpu.memory_space<vmem>>, vector<1x128xf32>
    %49 = vector.broadcast %48 : vector<1x128xf32> to vector<8x128xf32>
    %50 = arith.addf %47, %49 : vector<8x128xf32>
    %c1_41 = arith.constant 1 : index
    %c0_42 = arith.constant 0 : index
    %c0_43 = arith.constant 0 : index
    %51 = vector.load %arg18[%c1_41, %c0_42, %c0_43] : memref<2x8x32xf32, #tpu.memory_space<vmem>>, vector<1x8x32xf32>
    %52 = vector.shape_cast %51 : vector<1x8x32xf32> to vector<8x32xf32>
    %53 = arith.negf %50 : vector<8x128xf32>
    %54 = math.exp %53 : vector<8x128xf32>
    %cst_44 = arith.constant 1.000000e+00 : f32
    %55 = vector.broadcast %cst_44 : f32 to vector<8x128xf32>
    %56 = arith.addf %55, %54 : vector<8x128xf32>
    %57 = arith.divf %55, %56 : vector<8x128xf32>
    %58 = math.tanh %50 : vector<8x128xf32>
    %59 = vector.extract_strided_slice %57 {offsets = [0, 0], sizes = [8, 32], strides = [1, 1]} : vector<8x128xf32> to vector<8x32xf32>
    %60 = vector.extract_strided_slice %57 {offsets = [0, 32], sizes = [8, 32], strides = [1, 1]} : vector<8x128xf32> to vector<8x32xf32>
    %61 = vector.extract_strided_slice %58 {offsets = [0, 64], sizes = [8, 32], strides = [1, 1]} : vector<8x128xf32> to vector<8x32xf32>
    %62 = vector.extract_strided_slice %57 {offsets = [0, 96], sizes = [8, 32], strides = [1, 1]} : vector<8x128xf32> to vector<8x32xf32>
    %63 = arith.mulf %60, %52 : vector<8x32xf32>
    %64 = arith.mulf %59, %61 : vector<8x32xf32>
    %65 = arith.addf %63, %64 : vector<8x32xf32>
    %66 = math.tanh %65 : vector<8x32xf32>
    %67 = arith.mulf %62, %66 : vector<8x32xf32>
    %c1_45 = arith.constant 1 : index
    %c0_46 = arith.constant 0 : index
    %c0_47 = arith.constant 0 : index
    %68 = vector.load %arg17[%c1_45, %c0_46, %c0_47] : memref<2x8x32xf32, #tpu.memory_space<vmem>>, vector<1x8x32xf32>
    %69 = vector.shape_cast %68 : vector<1x8x32xf32> to vector<8x32xf32>
    %70 = vector.shape_cast %67 : vector<8x32xf32> to vector<1x8x32xf32>
    tpu.vector_store %arg17[%c1_45, %c0_46, %c0_47], %70 {strides = array<i32>} : memref<2x8x32xf32, #tpu.memory_space<vmem>>, vector<1x8x32xf32>,
    %c1_48 = arith.constant 1 : index
    %c0_49 = arith.constant 0 : index
    %c0_50 = arith.constant 0 : index
    %71 = vector.load %arg18[%c1_48, %c0_49, %c0_50] : memref<2x8x32xf32, #tpu.memory_space<vmem>>, vector<1x8x32xf32>
    %72 = vector.shape_cast %71 : vector<1x8x32xf32> to vector<8x32xf32>
    %73 = vector.shape_cast %65 : vector<8x32xf32> to vector<1x8x32xf32>
    tpu.vector_store %arg18[%c1_48, %c0_49, %c0_50], %73 {strides = array<i32>} : memref<2x8x32xf32, #tpu.memory_space<vmem>>, vector<1x8x32xf32>,
    %c1_51 = arith.constant 1 : index
    %c0_52 = arith.constant 0 : index
    %c0_53 = arith.constant 0 : index
    %74 = vector.load %arg0[%c1_51, %c0_52, %c0_53] : memref<7x8x128xf32, #tpu.memory_space<vmem>>, vector<1x8x128xf32>
    %75 = vector.shape_cast %74 : vector<1x8x128xf32> to vector<8x128xf32>
    %c0_54 = arith.constant 0 : index
    %c0_55 = arith.constant 0 : index
    %c0_56 = arith.constant 0 : index
    %76 = vector.load %arg17[%c0_54, %c0_55, %c0_56] : memref<2x8x32xf32, #tpu.memory_space<vmem>>, vector<1x8x32xf32>
    %77 = vector.shape_cast %76 : vector<1x8x32xf32> to vector<8x32xf32>
    %c0_57 = arith.constant 0 : index
    %c0_58 = arith.constant 0 : index
    %78 = vector.load %arg3[%c0_57, %c0_58] : memref<32x128xf32, #tpu.memory_space<vmem>>, vector<32x128xf32>
    %cst_59 = arith.constant dense<0.000000e+00> : vector<8x128xf32>
    %79 = tpu.matmul %77, %78, %cst_59 {dimension_numbers = #tpu.dot_dimension_numbers<[1], [0], [0], [1], [0, 0, 1, 1], [], []>} : vector<8x32xf32>, vector<32x128xf32>, vector<8x128xf32> -> vector<8x128xf32>
    %80 = arith.addf %75, %79 : vector<8x128xf32>
    %c0_60 = arith.constant 0 : index
    %c0_61 = arith.constant 0 : index
    %81 = vector.load %arg4[%c0_60, %c0_61] : memref<1x128xf32, #tpu.memory_space<vmem>>, vector<1x128xf32>
    %82 = vector.broadcast %81 : vector<1x128xf32> to vector<8x128xf32>
    %83 = arith.addf %80, %82 : vector<8x128xf32>
    %c0_62 = arith.constant 0 : index
    %c0_63 = arith.constant 0 : index
    %c0_64 = arith.constant 0 : index
    %84 = vector.load %arg18[%c0_62, %c0_63, %c0_64] : memref<2x8x32xf32, #tpu.memory_space<vmem>>, vector<1x8x32xf32>
    %85 = vector.shape_cast %84 : vector<1x8x32xf32> to vector<8x32xf32>
    %86 = arith.negf %83 : vector<8x128xf32>
    %87 = math.exp %86 : vector<8x128xf32>
    %cst_65 = arith.constant 1.000000e+00 : f32
    %88 = vector.broadcast %cst_65 : f32 to vector<8x128xf32>
    %89 = arith.addf %88, %87 : vector<8x128xf32>
    %90 = arith.divf %88, %89 : vector<8x128xf32>
    %91 = math.tanh %83 : vector<8x128xf32>
    %92 = vector.extract_strided_slice %90 {offsets = [0, 0], sizes = [8, 32], strides = [1, 1]} : vector<8x128xf32> to vector<8x32xf32>
    %93 = vector.extract_strided_slice %90 {offsets = [0, 32], sizes = [8, 32], strides = [1, 1]} : vector<8x128xf32> to vector<8x32xf32>
    %94 = vector.extract_strided_slice %91 {offsets = [0, 64], sizes = [8, 32], strides = [1, 1]} : vector<8x128xf32> to vector<8x32xf32>
    %95 = vector.extract_strided_slice %90 {offsets = [0, 96], sizes = [8, 32], strides = [1, 1]} : vector<8x128xf32> to vector<8x32xf32>
    %96 = arith.mulf %93, %85 : vector<8x32xf32>
    %97 = arith.mulf %92, %94 : vector<8x32xf32>
    %98 = arith.addf %96, %97 : vector<8x32xf32>
    %99 = math.tanh %98 : vector<8x32xf32>
    %100 = arith.mulf %95, %99 : vector<8x32xf32>
    %c0_66 = arith.constant 0 : index
    %c0_67 = arith.constant 0 : index
    %c0_68 = arith.constant 0 : index
    %101 = vector.load %arg17[%c0_66, %c0_67, %c0_68] : memref<2x8x32xf32, #tpu.memory_space<vmem>>, vector<1x8x32xf32>
    %102 = vector.shape_cast %101 : vector<1x8x32xf32> to vector<8x32xf32>
    %103 = vector.shape_cast %100 : vector<8x32xf32> to vector<1x8x32xf32>
    tpu.vector_store %arg17[%c0_66, %c0_67, %c0_68], %103 {strides = array<i32>} : memref<2x8x32xf32, #tpu.memory_space<vmem>>, vector<1x8x32xf32>,
    %c0_69 = arith.constant 0 : index
    %c0_70 = arith.constant 0 : index
    %c0_71 = arith.constant 0 : index
    %104 = vector.load %arg18[%c0_69, %c0_70, %c0_71] : memref<2x8x32xf32, #tpu.memory_space<vmem>>, vector<1x8x32xf32>
    %105 = vector.shape_cast %104 : vector<1x8x32xf32> to vector<8x32xf32>
    %106 = vector.shape_cast %98 : vector<8x32xf32> to vector<1x8x32xf32>
    tpu.vector_store %arg18[%c0_69, %c0_70, %c0_71], %106 {strides = array<i32>} : memref<2x8x32xf32, #tpu.memory_space<vmem>>, vector<1x8x32xf32>,
    %c0_72 = arith.constant 0 : index
    %c0_73 = arith.constant 0 : index
    %107 = vector.load %arg5[%c0_72, %c0_73] : memref<32x128xf32, #tpu.memory_space<vmem>>, vector<32x128xf32>
    %cst_74 = arith.constant dense<0.000000e+00> : vector<8x128xf32>
    %108 = tpu.matmul %100, %107, %cst_74 {dimension_numbers = #tpu.dot_dimension_numbers<[1], [0], [0], [1], [0, 0, 1, 1], [], []>} : vector<8x32xf32>, vector<32x128xf32>, vector<8x128xf32> -> vector<8x128xf32>
    %c1_75 = arith.constant 1 : index
    %c0_76 = arith.constant 0 : index
    %c0_77 = arith.constant 0 : index
    %109 = vector.load %arg17[%c1_75, %c0_76, %c0_77] : memref<2x8x32xf32, #tpu.memory_space<vmem>>, vector<1x8x32xf32>
    %110 = vector.shape_cast %109 : vector<1x8x32xf32> to vector<8x32xf32>
    %c0_78 = arith.constant 0 : index
    %c0_79 = arith.constant 0 : index
    %111 = vector.load %arg6[%c0_78, %c0_79] : memref<32x128xf32, #tpu.memory_space<vmem>>, vector<32x128xf32>
    %cst_80 = arith.constant dense<0.000000e+00> : vector<8x128xf32>
    %112 = tpu.matmul %110, %111, %cst_80 {dimension_numbers = #tpu.dot_dimension_numbers<[1], [0], [0], [1], [0, 0, 1, 1], [], []>} : vector<8x32xf32>, vector<32x128xf32>, vector<8x128xf32> -> vector<8x128xf32>
    %113 = arith.addf %108, %112 : vector<8x128xf32>
    %c0_81 = arith.constant 0 : index
    %c0_82 = arith.constant 0 : index
    %114 = vector.load %arg7[%c0_81, %c0_82] : memref<1x128xf32, #tpu.memory_space<vmem>>, vector<1x128xf32>
    %115 = vector.broadcast %114 : vector<1x128xf32> to vector<8x128xf32>
    %116 = arith.addf %113, %115 : vector<8x128xf32>
    %c1_83 = arith.constant 1 : index
    %c0_84 = arith.constant 0 : index
    %c0_85 = arith.constant 0 : index
    %117 = vector.load %arg18[%c1_83, %c0_84, %c0_85] : memref<2x8x32xf32, #tpu.memory_space<vmem>>, vector<1x8x32xf32>
    %118 = vector.shape_cast %117 : vector<1x8x32xf32> to vector<8x32xf32>
    %119 = arith.negf %116 : vector<8x128xf32>
    %120 = math.exp %119 : vector<8x128xf32>
    %cst_86 = arith.constant 1.000000e+00 : f32
    %121 = vector.broadcast %cst_86 : f32 to vector<8x128xf32>
    %122 = arith.addf %121, %120 : vector<8x128xf32>
    %123 = arith.divf %121, %122 : vector<8x128xf32>
    %124 = math.tanh %116 : vector<8x128xf32>
    %125 = vector.extract_strided_slice %123 {offsets = [0, 0], sizes = [8, 32], strides = [1, 1]} : vector<8x128xf32> to vector<8x32xf32>
    %126 = vector.extract_strided_slice %123 {offsets = [0, 32], sizes = [8, 32], strides = [1, 1]} : vector<8x128xf32> to vector<8x32xf32>
    %127 = vector.extract_strided_slice %124 {offsets = [0, 64], sizes = [8, 32], strides = [1, 1]} : vector<8x128xf32> to vector<8x32xf32>
    %128 = vector.extract_strided_slice %123 {offsets = [0, 96], sizes = [8, 32], strides = [1, 1]} : vector<8x128xf32> to vector<8x32xf32>
    %129 = arith.mulf %126, %118 : vector<8x32xf32>
    %130 = arith.mulf %125, %127 : vector<8x32xf32>
    %131 = arith.addf %129, %130 : vector<8x32xf32>
    %132 = math.tanh %131 : vector<8x32xf32>
    %133 = arith.mulf %128, %132 : vector<8x32xf32>
    %c1_87 = arith.constant 1 : index
    %c0_88 = arith.constant 0 : index
    %c0_89 = arith.constant 0 : index
    %134 = vector.load %arg17[%c1_87, %c0_88, %c0_89] : memref<2x8x32xf32, #tpu.memory_space<vmem>>, vector<1x8x32xf32>
    %135 = vector.shape_cast %134 : vector<1x8x32xf32> to vector<8x32xf32>
    %136 = vector.shape_cast %133 : vector<8x32xf32> to vector<1x8x32xf32>
    tpu.vector_store %arg17[%c1_87, %c0_88, %c0_89], %136 {strides = array<i32>} : memref<2x8x32xf32, #tpu.memory_space<vmem>>, vector<1x8x32xf32>,
    %c1_90 = arith.constant 1 : index
    %c0_91 = arith.constant 0 : index
    %c0_92 = arith.constant 0 : index
    %137 = vector.load %arg18[%c1_90, %c0_91, %c0_92] : memref<2x8x32xf32, #tpu.memory_space<vmem>>, vector<1x8x32xf32>
    %138 = vector.shape_cast %137 : vector<1x8x32xf32> to vector<8x32xf32>
    %139 = vector.shape_cast %131 : vector<8x32xf32> to vector<1x8x32xf32>
    tpu.vector_store %arg18[%c1_90, %c0_91, %c0_92], %139 {strides = array<i32>} : memref<2x8x32xf32, #tpu.memory_space<vmem>>, vector<1x8x32xf32>,
    %c2 = arith.constant 2 : index
    %c0_93 = arith.constant 0 : index
    %c0_94 = arith.constant 0 : index
    %140 = vector.load %arg0[%c2, %c0_93, %c0_94] : memref<7x8x128xf32, #tpu.memory_space<vmem>>, vector<1x8x128xf32>
    %141 = vector.shape_cast %140 : vector<1x8x128xf32> to vector<8x128xf32>
    %c0_95 = arith.constant 0 : index
    %c0_96 = arith.constant 0 : index
    %c0_97 = arith.constant 0 : index
    %142 = vector.load %arg17[%c0_95, %c0_96, %c0_97] : memref<2x8x32xf32, #tpu.memory_space<vmem>>, vector<1x8x32xf32>
    %143 = vector.shape_cast %142 : vector<1x8x32xf32> to vector<8x32xf32>
    %c0_98 = arith.constant 0 : index
    %c0_99 = arith.constant 0 : index
    %144 = vector.load %arg3[%c0_98, %c0_99] : memref<32x128xf32, #tpu.memory_space<vmem>>, vector<32x128xf32>
    %cst_100 = arith.constant dense<0.000000e+00> : vector<8x128xf32>
    %145 = tpu.matmul %143, %144, %cst_100 {dimension_numbers = #tpu.dot_dimension_numbers<[1], [0], [0], [1], [0, 0, 1, 1], [], []>} : vector<8x32xf32>, vector<32x128xf32>, vector<8x128xf32> -> vector<8x128xf32>
    %146 = arith.addf %141, %145 : vector<8x128xf32>
    %c0_101 = arith.constant 0 : index
    %c0_102 = arith.constant 0 : index
    %147 = vector.load %arg4[%c0_101, %c0_102] : memref<1x128xf32, #tpu.memory_space<vmem>>, vector<1x128xf32>
    %148 = vector.broadcast %147 : vector<1x128xf32> to vector<8x128xf32>
    %149 = arith.addf %146, %148 : vector<8x128xf32>
    %c0_103 = arith.constant 0 : index
    %c0_104 = arith.constant 0 : index
    %c0_105 = arith.constant 0 : index
    %150 = vector.load %arg18[%c0_103, %c0_104, %c0_105] : memref<2x8x32xf32, #tpu.memory_space<vmem>>, vector<1x8x32xf32>
    %151 = vector.shape_cast %150 : vector<1x8x32xf32> to vector<8x32xf32>
    %152 = arith.negf %149 : vector<8x128xf32>
    %153 = math.exp %152 : vector<8x128xf32>
    %cst_106 = arith.constant 1.000000e+00 : f32
    %154 = vector.broadcast %cst_106 : f32 to vector<8x128xf32>
    %155 = arith.addf %154, %153 : vector<8x128xf32>
    %156 = arith.divf %154, %155 : vector<8x128xf32>
    %157 = math.tanh %149 : vector<8x128xf32>
    %158 = vector.extract_strided_slice %156 {offsets = [0, 0], sizes = [8, 32], strides = [1, 1]} : vector<8x128xf32> to vector<8x32xf32>
    %159 = vector.extract_strided_slice %156 {offsets = [0, 32], sizes = [8, 32], strides = [1, 1]} : vector<8x128xf32> to vector<8x32xf32>
    %160 = vector.extract_strided_slice %157 {offsets = [0, 64], sizes = [8, 32], strides = [1, 1]} : vector<8x128xf32> to vector<8x32xf32>
    %161 = vector.extract_strided_slice %156 {offsets = [0, 96], sizes = [8, 32], strides = [1, 1]} : vector<8x128xf32> to vector<8x32xf32>
    %162 = arith.mulf %159, %151 : vector<8x32xf32>
    %163 = arith.mulf %158, %160 : vector<8x32xf32>
    %164 = arith.addf %162, %163 : vector<8x32xf32>
    %165 = math.tanh %164 : vector<8x32xf32>
    %166 = arith.mulf %161, %165 : vector<8x32xf32>
    %c0_107 = arith.constant 0 : index
    %c0_108 = arith.constant 0 : index
    %c0_109 = arith.constant 0 : index
    %167 = vector.load %arg17[%c0_107, %c0_108, %c0_109] : memref<2x8x32xf32, #tpu.memory_space<vmem>>, vector<1x8x32xf32>
    %168 = vector.shape_cast %167 : vector<1x8x32xf32> to vector<8x32xf32>
    %169 = vector.shape_cast %166 : vector<8x32xf32> to vector<1x8x32xf32>
    tpu.vector_store %arg17[%c0_107, %c0_108, %c0_109], %169 {strides = array<i32>} : memref<2x8x32xf32, #tpu.memory_space<vmem>>, vector<1x8x32xf32>,
    %c0_110 = arith.constant 0 : index
    %c0_111 = arith.constant 0 : index
    %c0_112 = arith.constant 0 : index
    %170 = vector.load %arg18[%c0_110, %c0_111, %c0_112] : memref<2x8x32xf32, #tpu.memory_space<vmem>>, vector<1x8x32xf32>
    %171 = vector.shape_cast %170 : vector<1x8x32xf32> to vector<8x32xf32>
    %172 = vector.shape_cast %164 : vector<8x32xf32> to vector<1x8x32xf32>
    tpu.vector_store %arg18[%c0_110, %c0_111, %c0_112], %172 {strides = array<i32>} : memref<2x8x32xf32, #tpu.memory_space<vmem>>, vector<1x8x32xf32>,
    %c0_113 = arith.constant 0 : index
    %c0_114 = arith.constant 0 : index
    %173 = vector.load %arg5[%c0_113, %c0_114] : memref<32x128xf32, #tpu.memory_space<vmem>>, vector<32x128xf32>
    %cst_115 = arith.constant dense<0.000000e+00> : vector<8x128xf32>
    %174 = tpu.matmul %166, %173, %cst_115 {dimension_numbers = #tpu.dot_dimension_numbers<[1], [0], [0], [1], [0, 0, 1, 1], [], []>} : vector<8x32xf32>, vector<32x128xf32>, vector<8x128xf32> -> vector<8x128xf32>
    %c1_116 = arith.constant 1 : index
    %c0_117 = arith.constant 0 : index
    %c0_118 = arith.constant 0 : index
    %175 = vector.load %arg17[%c1_116, %c0_117, %c0_118] : memref<2x8x32xf32, #tpu.memory_space<vmem>>, vector<1x8x32xf32>
    %176 = vector.shape_cast %175 : vector<1x8x32xf32> to vector<8x32xf32>
    %c0_119 = arith.constant 0 : index
    %c0_120 = arith.constant 0 : index
    %177 = vector.load %arg6[%c0_119, %c0_120] : memref<32x128xf32, #tpu.memory_space<vmem>>, vector<32x128xf32>
    %cst_121 = arith.constant dense<0.000000e+00> : vector<8x128xf32>
    %178 = tpu.matmul %176, %177, %cst_121 {dimension_numbers = #tpu.dot_dimension_numbers<[1], [0], [0], [1], [0, 0, 1, 1], [], []>} : vector<8x32xf32>, vector<32x128xf32>, vector<8x128xf32> -> vector<8x128xf32>
    %179 = arith.addf %174, %178 : vector<8x128xf32>
    %c0_122 = arith.constant 0 : index
    %c0_123 = arith.constant 0 : index
    %180 = vector.load %arg7[%c0_122, %c0_123] : memref<1x128xf32, #tpu.memory_space<vmem>>, vector<1x128xf32>
    %181 = vector.broadcast %180 : vector<1x128xf32> to vector<8x128xf32>
    %182 = arith.addf %179, %181 : vector<8x128xf32>
    %c1_124 = arith.constant 1 : index
    %c0_125 = arith.constant 0 : index
    %c0_126 = arith.constant 0 : index
    %183 = vector.load %arg18[%c1_124, %c0_125, %c0_126] : memref<2x8x32xf32, #tpu.memory_space<vmem>>, vector<1x8x32xf32>
    %184 = vector.shape_cast %183 : vector<1x8x32xf32> to vector<8x32xf32>
    %185 = arith.negf %182 : vector<8x128xf32>
    %186 = math.exp %185 : vector<8x128xf32>
    %cst_127 = arith.constant 1.000000e+00 : f32
    %187 = vector.broadcast %cst_127 : f32 to vector<8x128xf32>
    %188 = arith.addf %187, %186 : vector<8x128xf32>
    %189 = arith.divf %187, %188 : vector<8x128xf32>
    %190 = math.tanh %182 : vector<8x128xf32>
    %191 = vector.extract_strided_slice %189 {offsets = [0, 0], sizes = [8, 32], strides = [1, 1]} : vector<8x128xf32> to vector<8x32xf32>
    %192 = vector.extract_strided_slice %189 {offsets = [0, 32], sizes = [8, 32], strides = [1, 1]} : vector<8x128xf32> to vector<8x32xf32>
    %193 = vector.extract_strided_slice %190 {offsets = [0, 64], sizes = [8, 32], strides = [1, 1]} : vector<8x128xf32> to vector<8x32xf32>
    %194 = vector.extract_strided_slice %189 {offsets = [0, 96], sizes = [8, 32], strides = [1, 1]} : vector<8x128xf32> to vector<8x32xf32>
    %195 = arith.mulf %192, %184 : vector<8x32xf32>
    %196 = arith.mulf %191, %193 : vector<8x32xf32>
    %197 = arith.addf %195, %196 : vector<8x32xf32>
    %198 = math.tanh %197 : vector<8x32xf32>
    %199 = arith.mulf %194, %198 : vector<8x32xf32>
    %c1_128 = arith.constant 1 : index
    %c0_129 = arith.constant 0 : index
    %c0_130 = arith.constant 0 : index
    %200 = vector.load %arg17[%c1_128, %c0_129, %c0_130] : memref<2x8x32xf32, #tpu.memory_space<vmem>>, vector<1x8x32xf32>
    %201 = vector.shape_cast %200 : vector<1x8x32xf32> to vector<8x32xf32>
    %202 = vector.shape_cast %199 : vector<8x32xf32> to vector<1x8x32xf32>
    tpu.vector_store %arg17[%c1_128, %c0_129, %c0_130], %202 {strides = array<i32>} : memref<2x8x32xf32, #tpu.memory_space<vmem>>, vector<1x8x32xf32>,
    %c1_131 = arith.constant 1 : index
    %c0_132 = arith.constant 0 : index
    %c0_133 = arith.constant 0 : index
    %203 = vector.load %arg18[%c1_131, %c0_132, %c0_133] : memref<2x8x32xf32, #tpu.memory_space<vmem>>, vector<1x8x32xf32>
    %204 = vector.shape_cast %203 : vector<1x8x32xf32> to vector<8x32xf32>
    %205 = vector.shape_cast %197 : vector<8x32xf32> to vector<1x8x32xf32>
    tpu.vector_store %arg18[%c1_131, %c0_132, %c0_133], %205 {strides = array<i32>} : memref<2x8x32xf32, #tpu.memory_space<vmem>>, vector<1x8x32xf32>,
    %c3 = arith.constant 3 : index
    %c0_134 = arith.constant 0 : index
    %c0_135 = arith.constant 0 : index
    %206 = vector.load %arg0[%c3, %c0_134, %c0_135] : memref<7x8x128xf32, #tpu.memory_space<vmem>>, vector<1x8x128xf32>
    %207 = vector.shape_cast %206 : vector<1x8x128xf32> to vector<8x128xf32>
    %c0_136 = arith.constant 0 : index
    %c0_137 = arith.constant 0 : index
    %c0_138 = arith.constant 0 : index
    %208 = vector.load %arg17[%c0_136, %c0_137, %c0_138] : memref<2x8x32xf32, #tpu.memory_space<vmem>>, vector<1x8x32xf32>
    %209 = vector.shape_cast %208 : vector<1x8x32xf32> to vector<8x32xf32>
    %c0_139 = arith.constant 0 : index
    %c0_140 = arith.constant 0 : index
    %210 = vector.load %arg3[%c0_139, %c0_140] : memref<32x128xf32, #tpu.memory_space<vmem>>, vector<32x128xf32>
    %cst_141 = arith.constant dense<0.000000e+00> : vector<8x128xf32>
    %211 = tpu.matmul %209, %210, %cst_141 {dimension_numbers = #tpu.dot_dimension_numbers<[1], [0], [0], [1], [0, 0, 1, 1], [], []>} : vector<8x32xf32>, vector<32x128xf32>, vector<8x128xf32> -> vector<8x128xf32>
    %212 = arith.addf %207, %211 : vector<8x128xf32>
    %c0_142 = arith.constant 0 : index
    %c0_143 = arith.constant 0 : index
    %213 = vector.load %arg4[%c0_142, %c0_143] : memref<1x128xf32, #tpu.memory_space<vmem>>, vector<1x128xf32>
    %214 = vector.broadcast %213 : vector<1x128xf32> to vector<8x128xf32>
    %215 = arith.addf %212, %214 : vector<8x128xf32>
    %c0_144 = arith.constant 0 : index
    %c0_145 = arith.constant 0 : index
    %c0_146 = arith.constant 0 : index
    %216 = vector.load %arg18[%c0_144, %c0_145, %c0_146] : memref<2x8x32xf32, #tpu.memory_space<vmem>>, vector<1x8x32xf32>
    %217 = vector.shape_cast %216 : vector<1x8x32xf32> to vector<8x32xf32>
    %218 = arith.negf %215 : vector<8x128xf32>
    %219 = math.exp %218 : vector<8x128xf32>
    %cst_147 = arith.constant 1.000000e+00 : f32
    %220 = vector.broadcast %cst_147 : f32 to vector<8x128xf32>
    %221 = arith.addf %220, %219 : vector<8x128xf32>
    %222 = arith.divf %220, %221 : vector<8x128xf32>
    %223 = math.tanh %215 : vector<8x128xf32>
    %224 = vector.extract_strided_slice %222 {offsets = [0, 0], sizes = [8, 32], strides = [1, 1]} : vector<8x128xf32> to vector<8x32xf32>
    %225 = vector.extract_strided_slice %222 {offsets = [0, 32], sizes = [8, 32], strides = [1, 1]} : vector<8x128xf32> to vector<8x32xf32>
    %226 = vector.extract_strided_slice %223 {offsets = [0, 64], sizes = [8, 32], strides = [1, 1]} : vector<8x128xf32> to vector<8x32xf32>
    %227 = vector.extract_strided_slice %222 {offsets = [0, 96], sizes = [8, 32], strides = [1, 1]} : vector<8x128xf32> to vector<8x32xf32>
    %228 = arith.mulf %225, %217 : vector<8x32xf32>
    %229 = arith.mulf %224, %226 : vector<8x32xf32>
    %230 = arith.addf %228, %229 : vector<8x32xf32>
    %231 = math.tanh %230 : vector<8x32xf32>
    %232 = arith.mulf %227, %231 : vector<8x32xf32>
    %c0_148 = arith.constant 0 : index
    %c0_149 = arith.constant 0 : index
    %c0_150 = arith.constant 0 : index
    %233 = vector.load %arg17[%c0_148, %c0_149, %c0_150] : memref<2x8x32xf32, #tpu.memory_space<vmem>>, vector<1x8x32xf32>
    %234 = vector.shape_cast %233 : vector<1x8x32xf32> to vector<8x32xf32>
    %235 = vector.shape_cast %232 : vector<8x32xf32> to vector<1x8x32xf32>
    tpu.vector_store %arg17[%c0_148, %c0_149, %c0_150], %235 {strides = array<i32>} : memref<2x8x32xf32, #tpu.memory_space<vmem>>, vector<1x8x32xf32>,
    %c0_151 = arith.constant 0 : index
    %c0_152 = arith.constant 0 : index
    %c0_153 = arith.constant 0 : index
    %236 = vector.load %arg18[%c0_151, %c0_152, %c0_153] : memref<2x8x32xf32, #tpu.memory_space<vmem>>, vector<1x8x32xf32>
    %237 = vector.shape_cast %236 : vector<1x8x32xf32> to vector<8x32xf32>
    %238 = vector.shape_cast %230 : vector<8x32xf32> to vector<1x8x32xf32>
    tpu.vector_store %arg18[%c0_151, %c0_152, %c0_153], %238 {strides = array<i32>} : memref<2x8x32xf32, #tpu.memory_space<vmem>>, vector<1x8x32xf32>,
    %c0_154 = arith.constant 0 : index
    %c0_155 = arith.constant 0 : index
    %239 = vector.load %arg5[%c0_154, %c0_155] : memref<32x128xf32, #tpu.memory_space<vmem>>, vector<32x128xf32>
    %cst_156 = arith.constant dense<0.000000e+00> : vector<8x128xf32>
    %240 = tpu.matmul %232, %239, %cst_156 {dimension_numbers = #tpu.dot_dimension_numbers<[1], [0], [0], [1], [0, 0, 1, 1], [], []>} : vector<8x32xf32>, vector<32x128xf32>, vector<8x128xf32> -> vector<8x128xf32>
    %c1_157 = arith.constant 1 : index
    %c0_158 = arith.constant 0 : index
    %c0_159 = arith.constant 0 : index
    %241 = vector.load %arg17[%c1_157, %c0_158, %c0_159] : memref<2x8x32xf32, #tpu.memory_space<vmem>>, vector<1x8x32xf32>
    %242 = vector.shape_cast %241 : vector<1x8x32xf32> to vector<8x32xf32>
    %c0_160 = arith.constant 0 : index
    %c0_161 = arith.constant 0 : index
    %243 = vector.load %arg6[%c0_160, %c0_161] : memref<32x128xf32, #tpu.memory_space<vmem>>, vector<32x128xf32>
    %cst_162 = arith.constant dense<0.000000e+00> : vector<8x128xf32>
    %244 = tpu.matmul %242, %243, %cst_162 {dimension_numbers = #tpu.dot_dimension_numbers<[1], [0], [0], [1], [0, 0, 1, 1], [], []>} : vector<8x32xf32>, vector<32x128xf32>, vector<8x128xf32> -> vector<8x128xf32>
    %245 = arith.addf %240, %244 : vector<8x128xf32>
    %c0_163 = arith.constant 0 : index
    %c0_164 = arith.constant 0 : index
    %246 = vector.load %arg7[%c0_163, %c0_164] : memref<1x128xf32, #tpu.memory_space<vmem>>, vector<1x128xf32>
    %247 = vector.broadcast %246 : vector<1x128xf32> to vector<8x128xf32>
    %248 = arith.addf %245, %247 : vector<8x128xf32>
    %c1_165 = arith.constant 1 : index
    %c0_166 = arith.constant 0 : index
    %c0_167 = arith.constant 0 : index
    %249 = vector.load %arg18[%c1_165, %c0_166, %c0_167] : memref<2x8x32xf32, #tpu.memory_space<vmem>>, vector<1x8x32xf32>
    %250 = vector.shape_cast %249 : vector<1x8x32xf32> to vector<8x32xf32>
    %251 = arith.negf %248 : vector<8x128xf32>
    %252 = math.exp %251 : vector<8x128xf32>
    %cst_168 = arith.constant 1.000000e+00 : f32
    %253 = vector.broadcast %cst_168 : f32 to vector<8x128xf32>
    %254 = arith.addf %253, %252 : vector<8x128xf32>
    %255 = arith.divf %253, %254 : vector<8x128xf32>
    %256 = math.tanh %248 : vector<8x128xf32>
    %257 = vector.extract_strided_slice %255 {offsets = [0, 0], sizes = [8, 32], strides = [1, 1]} : vector<8x128xf32> to vector<8x32xf32>
    %258 = vector.extract_strided_slice %255 {offsets = [0, 32], sizes = [8, 32], strides = [1, 1]} : vector<8x128xf32> to vector<8x32xf32>
    %259 = vector.extract_strided_slice %256 {offsets = [0, 64], sizes = [8, 32], strides = [1, 1]} : vector<8x128xf32> to vector<8x32xf32>
    %260 = vector.extract_strided_slice %255 {offsets = [0, 96], sizes = [8, 32], strides = [1, 1]} : vector<8x128xf32> to vector<8x32xf32>
    %261 = arith.mulf %258, %250 : vector<8x32xf32>
    %262 = arith.mulf %257, %259 : vector<8x32xf32>
    %263 = arith.addf %261, %262 : vector<8x32xf32>
    %264 = math.tanh %263 : vector<8x32xf32>
    %265 = arith.mulf %260, %264 : vector<8x32xf32>
    %c1_169 = arith.constant 1 : index
    %c0_170 = arith.constant 0 : index
    %c0_171 = arith.constant 0 : index
    %266 = vector.load %arg17[%c1_169, %c0_170, %c0_171] : memref<2x8x32xf32, #tpu.memory_space<vmem>>, vector<1x8x32xf32>
    %267 = vector.shape_cast %266 : vector<1x8x32xf32> to vector<8x32xf32>
    %268 = vector.shape_cast %265 : vector<8x32xf32> to vector<1x8x32xf32>
    tpu.vector_store %arg17[%c1_169, %c0_170, %c0_171], %268 {strides = array<i32>} : memref<2x8x32xf32, #tpu.memory_space<vmem>>, vector<1x8x32xf32>,
    %c1_172 = arith.constant 1 : index
    %c0_173 = arith.constant 0 : index
    %c0_174 = arith.constant 0 : index
    %269 = vector.load %arg18[%c1_172, %c0_173, %c0_174] : memref<2x8x32xf32, #tpu.memory_space<vmem>>, vector<1x8x32xf32>
    %270 = vector.shape_cast %269 : vector<1x8x32xf32> to vector<8x32xf32>
    %271 = vector.shape_cast %263 : vector<8x32xf32> to vector<1x8x32xf32>
    tpu.vector_store %arg18[%c1_172, %c0_173, %c0_174], %271 {strides = array<i32>} : memref<2x8x32xf32, #tpu.memory_space<vmem>>, vector<1x8x32xf32>,
    %c4 = arith.constant 4 : index
    %c0_175 = arith.constant 0 : index
    %c0_176 = arith.constant 0 : index
    %272 = vector.load %arg0[%c4, %c0_175, %c0_176] : memref<7x8x128xf32, #tpu.memory_space<vmem>>, vector<1x8x128xf32>
    %273 = vector.shape_cast %272 : vector<1x8x128xf32> to vector<8x128xf32>
    %c0_177 = arith.constant 0 : index
    %c0_178 = arith.constant 0 : index
    %c0_179 = arith.constant 0 : index
    %274 = vector.load %arg17[%c0_177, %c0_178, %c0_179] : memref<2x8x32xf32, #tpu.memory_space<vmem>>, vector<1x8x32xf32>
    %275 = vector.shape_cast %274 : vector<1x8x32xf32> to vector<8x32xf32>
    %c0_180 = arith.constant 0 : index
    %c0_181 = arith.constant 0 : index
    %276 = vector.load %arg3[%c0_180, %c0_181] : memref<32x128xf32, #tpu.memory_space<vmem>>, vector<32x128xf32>
    %cst_182 = arith.constant dense<0.000000e+00> : vector<8x128xf32>
    %277 = tpu.matmul %275, %276, %cst_182 {dimension_numbers = #tpu.dot_dimension_numbers<[1], [0], [0], [1], [0, 0, 1, 1], [], []>} : vector<8x32xf32>, vector<32x128xf32>, vector<8x128xf32> -> vector<8x128xf32>
    %278 = arith.addf %273, %277 : vector<8x128xf32>
    %c0_183 = arith.constant 0 : index
    %c0_184 = arith.constant 0 : index
    %279 = vector.load %arg4[%c0_183, %c0_184] : memref<1x128xf32, #tpu.memory_space<vmem>>, vector<1x128xf32>
    %280 = vector.broadcast %279 : vector<1x128xf32> to vector<8x128xf32>
    %281 = arith.addf %278, %280 : vector<8x128xf32>
    %c0_185 = arith.constant 0 : index
    %c0_186 = arith.constant 0 : index
    %c0_187 = arith.constant 0 : index
    %282 = vector.load %arg18[%c0_185, %c0_186, %c0_187] : memref<2x8x32xf32, #tpu.memory_space<vmem>>, vector<1x8x32xf32>
    %283 = vector.shape_cast %282 : vector<1x8x32xf32> to vector<8x32xf32>
    %284 = arith.negf %281 : vector<8x128xf32>
    %285 = math.exp %284 : vector<8x128xf32>
    %cst_188 = arith.constant 1.000000e+00 : f32
    %286 = vector.broadcast %cst_188 : f32 to vector<8x128xf32>
    %287 = arith.addf %286, %285 : vector<8x128xf32>
    %288 = arith.divf %286, %287 : vector<8x128xf32>
    %289 = math.tanh %281 : vector<8x128xf32>
    %290 = vector.extract_strided_slice %288 {offsets = [0, 0], sizes = [8, 32], strides = [1, 1]} : vector<8x128xf32> to vector<8x32xf32>
    %291 = vector.extract_strided_slice %288 {offsets = [0, 32], sizes = [8, 32], strides = [1, 1]} : vector<8x128xf32> to vector<8x32xf32>
    %292 = vector.extract_strided_slice %289 {offsets = [0, 64], sizes = [8, 32], strides = [1, 1]} : vector<8x128xf32> to vector<8x32xf32>
    %293 = vector.extract_strided_slice %288 {offsets = [0, 96], sizes = [8, 32], strides = [1, 1]} : vector<8x128xf32> to vector<8x32xf32>
    %294 = arith.mulf %291, %283 : vector<8x32xf32>
    %295 = arith.mulf %290, %292 : vector<8x32xf32>
    %296 = arith.addf %294, %295 : vector<8x32xf32>
    %297 = math.tanh %296 : vector<8x32xf32>
    %298 = arith.mulf %293, %297 : vector<8x32xf32>
    %c0_189 = arith.constant 0 : index
    %c0_190 = arith.constant 0 : index
    %c0_191 = arith.constant 0 : index
    %299 = vector.load %arg17[%c0_189, %c0_190, %c0_191] : memref<2x8x32xf32, #tpu.memory_space<vmem>>, vector<1x8x32xf32>
    %300 = vector.shape_cast %299 : vector<1x8x32xf32> to vector<8x32xf32>
    %301 = vector.shape_cast %298 : vector<8x32xf32> to vector<1x8x32xf32>
    tpu.vector_store %arg17[%c0_189, %c0_190, %c0_191], %301 {strides = array<i32>} : memref<2x8x32xf32, #tpu.memory_space<vmem>>, vector<1x8x32xf32>,
    %c0_192 = arith.constant 0 : index
    %c0_193 = arith.constant 0 : index
    %c0_194 = arith.constant 0 : index
    %302 = vector.load %arg18[%c0_192, %c0_193, %c0_194] : memref<2x8x32xf32, #tpu.memory_space<vmem>>, vector<1x8x32xf32>
    %303 = vector.shape_cast %302 : vector<1x8x32xf32> to vector<8x32xf32>
    %304 = vector.shape_cast %296 : vector<8x32xf32> to vector<1x8x32xf32>
    tpu.vector_store %arg18[%c0_192, %c0_193, %c0_194], %304 {strides = array<i32>} : memref<2x8x32xf32, #tpu.memory_space<vmem>>, vector<1x8x32xf32>,
    %c0_195 = arith.constant 0 : index
    %c0_196 = arith.constant 0 : index
    %305 = vector.load %arg5[%c0_195, %c0_196] : memref<32x128xf32, #tpu.memory_space<vmem>>, vector<32x128xf32>
    %cst_197 = arith.constant dense<0.000000e+00> : vector<8x128xf32>
    %306 = tpu.matmul %298, %305, %cst_197 {dimension_numbers = #tpu.dot_dimension_numbers<[1], [0], [0], [1], [0, 0, 1, 1], [], []>} : vector<8x32xf32>, vector<32x128xf32>, vector<8x128xf32> -> vector<8x128xf32>
    %c1_198 = arith.constant 1 : index
    %c0_199 = arith.constant 0 : index
    %c0_200 = arith.constant 0 : index
    %307 = vector.load %arg17[%c1_198, %c0_199, %c0_200] : memref<2x8x32xf32, #tpu.memory_space<vmem>>, vector<1x8x32xf32>
    %308 = vector.shape_cast %307 : vector<1x8x32xf32> to vector<8x32xf32>
    %c0_201 = arith.constant 0 : index
    %c0_202 = arith.constant 0 : index
    %309 = vector.load %arg6[%c0_201, %c0_202] : memref<32x128xf32, #tpu.memory_space<vmem>>, vector<32x128xf32>
    %cst_203 = arith.constant dense<0.000000e+00> : vector<8x128xf32>
    %310 = tpu.matmul %308, %309, %cst_203 {dimension_numbers = #tpu.dot_dimension_numbers<[1], [0], [0], [1], [0, 0, 1, 1], [], []>} : vector<8x32xf32>, vector<32x128xf32>, vector<8x128xf32> -> vector<8x128xf32>
    %311 = arith.addf %306, %310 : vector<8x128xf32>
    %c0_204 = arith.constant 0 : index
    %c0_205 = arith.constant 0 : index
    %312 = vector.load %arg7[%c0_204, %c0_205] : memref<1x128xf32, #tpu.memory_space<vmem>>, vector<1x128xf32>
    %313 = vector.broadcast %312 : vector<1x128xf32> to vector<8x128xf32>
    %314 = arith.addf %311, %313 : vector<8x128xf32>
    %c1_206 = arith.constant 1 : index
    %c0_207 = arith.constant 0 : index
    %c0_208 = arith.constant 0 : index
    %315 = vector.load %arg18[%c1_206, %c0_207, %c0_208] : memref<2x8x32xf32, #tpu.memory_space<vmem>>, vector<1x8x32xf32>
    %316 = vector.shape_cast %315 : vector<1x8x32xf32> to vector<8x32xf32>
    %317 = arith.negf %314 : vector<8x128xf32>
    %318 = math.exp %317 : vector<8x128xf32>
    %cst_209 = arith.constant 1.000000e+00 : f32
    %319 = vector.broadcast %cst_209 : f32 to vector<8x128xf32>
    %320 = arith.addf %319, %318 : vector<8x128xf32>
    %321 = arith.divf %319, %320 : vector<8x128xf32>
    %322 = math.tanh %314 : vector<8x128xf32>
    %323 = vector.extract_strided_slice %321 {offsets = [0, 0], sizes = [8, 32], strides = [1, 1]} : vector<8x128xf32> to vector<8x32xf32>
    %324 = vector.extract_strided_slice %321 {offsets = [0, 32], sizes = [8, 32], strides = [1, 1]} : vector<8x128xf32> to vector<8x32xf32>
    %325 = vector.extract_strided_slice %322 {offsets = [0, 64], sizes = [8, 32], strides = [1, 1]} : vector<8x128xf32> to vector<8x32xf32>
    %326 = vector.extract_strided_slice %321 {offsets = [0, 96], sizes = [8, 32], strides = [1, 1]} : vector<8x128xf32> to vector<8x32xf32>
    %327 = arith.mulf %324, %316 : vector<8x32xf32>
    %328 = arith.mulf %323, %325 : vector<8x32xf32>
    %329 = arith.addf %327, %328 : vector<8x32xf32>
    %330 = math.tanh %329 : vector<8x32xf32>
    %331 = arith.mulf %326, %330 : vector<8x32xf32>
    %c1_210 = arith.constant 1 : index
    %c0_211 = arith.constant 0 : index
    %c0_212 = arith.constant 0 : index
    %332 = vector.load %arg17[%c1_210, %c0_211, %c0_212] : memref<2x8x32xf32, #tpu.memory_space<vmem>>, vector<1x8x32xf32>
    %333 = vector.shape_cast %332 : vector<1x8x32xf32> to vector<8x32xf32>
    %334 = vector.shape_cast %331 : vector<8x32xf32> to vector<1x8x32xf32>
    tpu.vector_store %arg17[%c1_210, %c0_211, %c0_212], %334 {strides = array<i32>} : memref<2x8x32xf32, #tpu.memory_space<vmem>>, vector<1x8x32xf32>,
    %c1_213 = arith.constant 1 : index
    %c0_214 = arith.constant 0 : index
    %c0_215 = arith.constant 0 : index
    %335 = vector.load %arg18[%c1_213, %c0_214, %c0_215] : memref<2x8x32xf32, #tpu.memory_space<vmem>>, vector<1x8x32xf32>
    %336 = vector.shape_cast %335 : vector<1x8x32xf32> to vector<8x32xf32>
    %337 = vector.shape_cast %329 : vector<8x32xf32> to vector<1x8x32xf32>
    tpu.vector_store %arg18[%c1_213, %c0_214, %c0_215], %337 {strides = array<i32>} : memref<2x8x32xf32, #tpu.memory_space<vmem>>, vector<1x8x32xf32>,
    %c5 = arith.constant 5 : index
    %c0_216 = arith.constant 0 : index
    %c0_217 = arith.constant 0 : index
    %338 = vector.load %arg0[%c5, %c0_216, %c0_217] : memref<7x8x128xf32, #tpu.memory_space<vmem>>, vector<1x8x128xf32>
    %339 = vector.shape_cast %338 : vector<1x8x128xf32> to vector<8x128xf32>
    %c0_218 = arith.constant 0 : index
    %c0_219 = arith.constant 0 : index
    %c0_220 = arith.constant 0 : index
    %340 = vector.load %arg17[%c0_218, %c0_219, %c0_220] : memref<2x8x32xf32, #tpu.memory_space<vmem>>, vector<1x8x32xf32>
    %341 = vector.shape_cast %340 : vector<1x8x32xf32> to vector<8x32xf32>
    %c0_221 = arith.constant 0 : index
    %c0_222 = arith.constant 0 : index
    %342 = vector.load %arg3[%c0_221, %c0_222] : memref<32x128xf32, #tpu.memory_space<vmem>>, vector<32x128xf32>
    %cst_223 = arith.constant dense<0.000000e+00> : vector<8x128xf32>
    %343 = tpu.matmul %341, %342, %cst_223 {dimension_numbers = #tpu.dot_dimension_numbers<[1], [0], [0], [1], [0, 0, 1, 1], [], []>} : vector<8x32xf32>, vector<32x128xf32>, vector<8x128xf32> -> vector<8x128xf32>
    %344 = arith.addf %339, %343 : vector<8x128xf32>
    %c0_224 = arith.constant 0 : index
    %c0_225 = arith.constant 0 : index
    %345 = vector.load %arg4[%c0_224, %c0_225] : memref<1x128xf32, #tpu.memory_space<vmem>>, vector<1x128xf32>
    %346 = vector.broadcast %345 : vector<1x128xf32> to vector<8x128xf32>
    %347 = arith.addf %344, %346 : vector<8x128xf32>
    %c0_226 = arith.constant 0 : index
    %c0_227 = arith.constant 0 : index
    %c0_228 = arith.constant 0 : index
    %348 = vector.load %arg18[%c0_226, %c0_227, %c0_228] : memref<2x8x32xf32, #tpu.memory_space<vmem>>, vector<1x8x32xf32>
    %349 = vector.shape_cast %348 : vector<1x8x32xf32> to vector<8x32xf32>
    %350 = arith.negf %347 : vector<8x128xf32>
    %351 = math.exp %350 : vector<8x128xf32>
    %cst_229 = arith.constant 1.000000e+00 : f32
    %352 = vector.broadcast %cst_229 : f32 to vector<8x128xf32>
    %353 = arith.addf %352, %351 : vector<8x128xf32>
    %354 = arith.divf %352, %353 : vector<8x128xf32>
    %355 = math.tanh %347 : vector<8x128xf32>
    %356 = vector.extract_strided_slice %354 {offsets = [0, 0], sizes = [8, 32], strides = [1, 1]} : vector<8x128xf32> to vector<8x32xf32>
    %357 = vector.extract_strided_slice %354 {offsets = [0, 32], sizes = [8, 32], strides = [1, 1]} : vector<8x128xf32> to vector<8x32xf32>
    %358 = vector.extract_strided_slice %355 {offsets = [0, 64], sizes = [8, 32], strides = [1, 1]} : vector<8x128xf32> to vector<8x32xf32>
    %359 = vector.extract_strided_slice %354 {offsets = [0, 96], sizes = [8, 32], strides = [1, 1]} : vector<8x128xf32> to vector<8x32xf32>
    %360 = arith.mulf %357, %349 : vector<8x32xf32>
    %361 = arith.mulf %356, %358 : vector<8x32xf32>
    %362 = arith.addf %360, %361 : vector<8x32xf32>
    %363 = math.tanh %362 : vector<8x32xf32>
    %364 = arith.mulf %359, %363 : vector<8x32xf32>
    %c0_230 = arith.constant 0 : index
    %c0_231 = arith.constant 0 : index
    %c0_232 = arith.constant 0 : index
    %365 = vector.load %arg17[%c0_230, %c0_231, %c0_232] : memref<2x8x32xf32, #tpu.memory_space<vmem>>, vector<1x8x32xf32>
    %366 = vector.shape_cast %365 : vector<1x8x32xf32> to vector<8x32xf32>
    %367 = vector.shape_cast %364 : vector<8x32xf32> to vector<1x8x32xf32>
    tpu.vector_store %arg17[%c0_230, %c0_231, %c0_232], %367 {strides = array<i32>} : memref<2x8x32xf32, #tpu.memory_space<vmem>>, vector<1x8x32xf32>,
    %c0_233 = arith.constant 0 : index
    %c0_234 = arith.constant 0 : index
    %c0_235 = arith.constant 0 : index
    %368 = vector.load %arg18[%c0_233, %c0_234, %c0_235] : memref<2x8x32xf32, #tpu.memory_space<vmem>>, vector<1x8x32xf32>
    %369 = vector.shape_cast %368 : vector<1x8x32xf32> to vector<8x32xf32>
    %370 = vector.shape_cast %362 : vector<8x32xf32> to vector<1x8x32xf32>
    tpu.vector_store %arg18[%c0_233, %c0_234, %c0_235], %370 {strides = array<i32>} : memref<2x8x32xf32, #tpu.memory_space<vmem>>, vector<1x8x32xf32>,
    %c0_236 = arith.constant 0 : index
    %c0_237 = arith.constant 0 : index
    %371 = vector.load %arg5[%c0_236, %c0_237] : memref<32x128xf32, #tpu.memory_space<vmem>>, vector<32x128xf32>
    %cst_238 = arith.constant dense<0.000000e+00> : vector<8x128xf32>
    %372 = tpu.matmul %364, %371, %cst_238 {dimension_numbers = #tpu.dot_dimension_numbers<[1], [0], [0], [1], [0, 0, 1, 1], [], []>} : vector<8x32xf32>, vector<32x128xf32>, vector<8x128xf32> -> vector<8x128xf32>
    %c1_239 = arith.constant 1 : index
    %c0_240 = arith.constant 0 : index
    %c0_241 = arith.constant 0 : index
    %373 = vector.load %arg17[%c1_239, %c0_240, %c0_241] : memref<2x8x32xf32, #tpu.memory_space<vmem>>, vector<1x8x32xf32>
    %374 = vector.shape_cast %373 : vector<1x8x32xf32> to vector<8x32xf32>
    %c0_242 = arith.constant 0 : index
    %c0_243 = arith.constant 0 : index
    %375 = vector.load %arg6[%c0_242, %c0_243] : memref<32x128xf32, #tpu.memory_space<vmem>>, vector<32x128xf32>
    %cst_244 = arith.constant dense<0.000000e+00> : vector<8x128xf32>
    %376 = tpu.matmul %374, %375, %cst_244 {dimension_numbers = #tpu.dot_dimension_numbers<[1], [0], [0], [1], [0, 0, 1, 1], [], []>} : vector<8x32xf32>, vector<32x128xf32>, vector<8x128xf32> -> vector<8x128xf32>
    %377 = arith.addf %372, %376 : vector<8x128xf32>
    %c0_245 = arith.constant 0 : index
    %c0_246 = arith.constant 0 : index
    %378 = vector.load %arg7[%c0_245, %c0_246] : memref<1x128xf32, #tpu.memory_space<vmem>>, vector<1x128xf32>
    %379 = vector.broadcast %378 : vector<1x128xf32> to vector<8x128xf32>
    %380 = arith.addf %377, %379 : vector<8x128xf32>
    %c1_247 = arith.constant 1 : index
    %c0_248 = arith.constant 0 : index
    %c0_249 = arith.constant 0 : index
    %381 = vector.load %arg18[%c1_247, %c0_248, %c0_249] : memref<2x8x32xf32, #tpu.memory_space<vmem>>, vector<1x8x32xf32>
    %382 = vector.shape_cast %381 : vector<1x8x32xf32> to vector<8x32xf32>
    %383 = arith.negf %380 : vector<8x128xf32>
    %384 = math.exp %383 : vector<8x128xf32>
    %cst_250 = arith.constant 1.000000e+00 : f32
    %385 = vector.broadcast %cst_250 : f32 to vector<8x128xf32>
    %386 = arith.addf %385, %384 : vector<8x128xf32>
    %387 = arith.divf %385, %386 : vector<8x128xf32>
    %388 = math.tanh %380 : vector<8x128xf32>
    %389 = vector.extract_strided_slice %387 {offsets = [0, 0], sizes = [8, 32], strides = [1, 1]} : vector<8x128xf32> to vector<8x32xf32>
    %390 = vector.extract_strided_slice %387 {offsets = [0, 32], sizes = [8, 32], strides = [1, 1]} : vector<8x128xf32> to vector<8x32xf32>
    %391 = vector.extract_strided_slice %388 {offsets = [0, 64], sizes = [8, 32], strides = [1, 1]} : vector<8x128xf32> to vector<8x32xf32>
    %392 = vector.extract_strided_slice %387 {offsets = [0, 96], sizes = [8, 32], strides = [1, 1]} : vector<8x128xf32> to vector<8x32xf32>
    %393 = arith.mulf %390, %382 : vector<8x32xf32>
    %394 = arith.mulf %389, %391 : vector<8x32xf32>
    %395 = arith.addf %393, %394 : vector<8x32xf32>
    %396 = math.tanh %395 : vector<8x32xf32>
    %397 = arith.mulf %392, %396 : vector<8x32xf32>
    %c1_251 = arith.constant 1 : index
    %c0_252 = arith.constant 0 : index
    %c0_253 = arith.constant 0 : index
    %398 = vector.load %arg17[%c1_251, %c0_252, %c0_253] : memref<2x8x32xf32, #tpu.memory_space<vmem>>, vector<1x8x32xf32>
    %399 = vector.shape_cast %398 : vector<1x8x32xf32> to vector<8x32xf32>
    %400 = vector.shape_cast %397 : vector<8x32xf32> to vector<1x8x32xf32>
    tpu.vector_store %arg17[%c1_251, %c0_252, %c0_253], %400 {strides = array<i32>} : memref<2x8x32xf32, #tpu.memory_space<vmem>>, vector<1x8x32xf32>,
    %c1_254 = arith.constant 1 : index
    %c0_255 = arith.constant 0 : index
    %c0_256 = arith.constant 0 : index
    %401 = vector.load %arg18[%c1_254, %c0_255, %c0_256] : memref<2x8x32xf32, #tpu.memory_space<vmem>>, vector<1x8x32xf32>
    %402 = vector.shape_cast %401 : vector<1x8x32xf32> to vector<8x32xf32>
    %403 = vector.shape_cast %395 : vector<8x32xf32> to vector<1x8x32xf32>
    tpu.vector_store %arg18[%c1_254, %c0_255, %c0_256], %403 {strides = array<i32>} : memref<2x8x32xf32, #tpu.memory_space<vmem>>, vector<1x8x32xf32>,
    %c6 = arith.constant 6 : index
    %c0_257 = arith.constant 0 : index
    %c0_258 = arith.constant 0 : index
    %404 = vector.load %arg0[%c6, %c0_257, %c0_258] : memref<7x8x128xf32, #tpu.memory_space<vmem>>, vector<1x8x128xf32>
    %405 = vector.shape_cast %404 : vector<1x8x128xf32> to vector<8x128xf32>
    %c0_259 = arith.constant 0 : index
    %c0_260 = arith.constant 0 : index
    %c0_261 = arith.constant 0 : index
    %406 = vector.load %arg17[%c0_259, %c0_260, %c0_261] : memref<2x8x32xf32, #tpu.memory_space<vmem>>, vector<1x8x32xf32>
    %407 = vector.shape_cast %406 : vector<1x8x32xf32> to vector<8x32xf32>
    %c0_262 = arith.constant 0 : index
    %c0_263 = arith.constant 0 : index
    %408 = vector.load %arg3[%c0_262, %c0_263] : memref<32x128xf32, #tpu.memory_space<vmem>>, vector<32x128xf32>
    %cst_264 = arith.constant dense<0.000000e+00> : vector<8x128xf32>
    %409 = tpu.matmul %407, %408, %cst_264 {dimension_numbers = #tpu.dot_dimension_numbers<[1], [0], [0], [1], [0, 0, 1, 1], [], []>} : vector<8x32xf32>, vector<32x128xf32>, vector<8x128xf32> -> vector<8x128xf32>
    %410 = arith.addf %405, %409 : vector<8x128xf32>
    %c0_265 = arith.constant 0 : index
    %c0_266 = arith.constant 0 : index
    %411 = vector.load %arg4[%c0_265, %c0_266] : memref<1x128xf32, #tpu.memory_space<vmem>>, vector<1x128xf32>
    %412 = vector.broadcast %411 : vector<1x128xf32> to vector<8x128xf32>
    %413 = arith.addf %410, %412 : vector<8x128xf32>
    %c0_267 = arith.constant 0 : index
    %c0_268 = arith.constant 0 : index
    %c0_269 = arith.constant 0 : index
    %414 = vector.load %arg18[%c0_267, %c0_268, %c0_269] : memref<2x8x32xf32, #tpu.memory_space<vmem>>, vector<1x8x32xf32>
    %415 = vector.shape_cast %414 : vector<1x8x32xf32> to vector<8x32xf32>
    %416 = arith.negf %413 : vector<8x128xf32>
    %417 = math.exp %416 : vector<8x128xf32>
    %cst_270 = arith.constant 1.000000e+00 : f32
    %418 = vector.broadcast %cst_270 : f32 to vector<8x128xf32>
    %419 = arith.addf %418, %417 : vector<8x128xf32>
    %420 = arith.divf %418, %419 : vector<8x128xf32>
    %421 = math.tanh %413 : vector<8x128xf32>
    %422 = vector.extract_strided_slice %420 {offsets = [0, 0], sizes = [8, 32], strides = [1, 1]} : vector<8x128xf32> to vector<8x32xf32>
    %423 = vector.extract_strided_slice %420 {offsets = [0, 32], sizes = [8, 32], strides = [1, 1]} : vector<8x128xf32> to vector<8x32xf32>
    %424 = vector.extract_strided_slice %421 {offsets = [0, 64], sizes = [8, 32], strides = [1, 1]} : vector<8x128xf32> to vector<8x32xf32>
    %425 = vector.extract_strided_slice %420 {offsets = [0, 96], sizes = [8, 32], strides = [1, 1]} : vector<8x128xf32> to vector<8x32xf32>
    %426 = arith.mulf %423, %415 : vector<8x32xf32>
    %427 = arith.mulf %422, %424 : vector<8x32xf32>
    %428 = arith.addf %426, %427 : vector<8x32xf32>
    %429 = math.tanh %428 : vector<8x32xf32>
    %430 = arith.mulf %425, %429 : vector<8x32xf32>
    %c0_271 = arith.constant 0 : index
    %c0_272 = arith.constant 0 : index
    %c0_273 = arith.constant 0 : index
    %431 = vector.load %arg17[%c0_271, %c0_272, %c0_273] : memref<2x8x32xf32, #tpu.memory_space<vmem>>, vector<1x8x32xf32>
    %432 = vector.shape_cast %431 : vector<1x8x32xf32> to vector<8x32xf32>
    %433 = vector.shape_cast %430 : vector<8x32xf32> to vector<1x8x32xf32>
    tpu.vector_store %arg17[%c0_271, %c0_272, %c0_273], %433 {strides = array<i32>} : memref<2x8x32xf32, #tpu.memory_space<vmem>>, vector<1x8x32xf32>,
    %c0_274 = arith.constant 0 : index
    %c0_275 = arith.constant 0 : index
    %c0_276 = arith.constant 0 : index
    %434 = vector.load %arg18[%c0_274, %c0_275, %c0_276] : memref<2x8x32xf32, #tpu.memory_space<vmem>>, vector<1x8x32xf32>
    %435 = vector.shape_cast %434 : vector<1x8x32xf32> to vector<8x32xf32>
    %436 = vector.shape_cast %428 : vector<8x32xf32> to vector<1x8x32xf32>
    tpu.vector_store %arg18[%c0_274, %c0_275, %c0_276], %436 {strides = array<i32>} : memref<2x8x32xf32, #tpu.memory_space<vmem>>, vector<1x8x32xf32>,
    %c0_277 = arith.constant 0 : index
    %c0_278 = arith.constant 0 : index
    %437 = vector.load %arg5[%c0_277, %c0_278] : memref<32x128xf32, #tpu.memory_space<vmem>>, vector<32x128xf32>
    %cst_279 = arith.constant dense<0.000000e+00> : vector<8x128xf32>
    %438 = tpu.matmul %430, %437, %cst_279 {dimension_numbers = #tpu.dot_dimension_numbers<[1], [0], [0], [1], [0, 0, 1, 1], [], []>} : vector<8x32xf32>, vector<32x128xf32>, vector<8x128xf32> -> vector<8x128xf32>
    %c1_280 = arith.constant 1 : index
    %c0_281 = arith.constant 0 : index
    %c0_282 = arith.constant 0 : index
    %439 = vector.load %arg17[%c1_280, %c0_281, %c0_282] : memref<2x8x32xf32, #tpu.memory_space<vmem>>, vector<1x8x32xf32>
    %440 = vector.shape_cast %439 : vector<1x8x32xf32> to vector<8x32xf32>
    %c0_283 = arith.constant 0 : index
    %c0_284 = arith.constant 0 : index
    %441 = vector.load %arg6[%c0_283, %c0_284] : memref<32x128xf32, #tpu.memory_space<vmem>>, vector<32x128xf32>
    %cst_285 = arith.constant dense<0.000000e+00> : vector<8x128xf32>
    %442 = tpu.matmul %440, %441, %cst_285 {dimension_numbers = #tpu.dot_dimension_numbers<[1], [0], [0], [1], [0, 0, 1, 1], [], []>} : vector<8x32xf32>, vector<32x128xf32>, vector<8x128xf32> -> vector<8x128xf32>
    %443 = arith.addf %438, %442 : vector<8x128xf32>
    %c0_286 = arith.constant 0 : index
    %c0_287 = arith.constant 0 : index
    %444 = vector.load %arg7[%c0_286, %c0_287] : memref<1x128xf32, #tpu.memory_space<vmem>>, vector<1x128xf32>
    %445 = vector.broadcast %444 : vector<1x128xf32> to vector<8x128xf32>
    %446 = arith.addf %443, %445 : vector<8x128xf32>
    %c1_288 = arith.constant 1 : index
    %c0_289 = arith.constant 0 : index
    %c0_290 = arith.constant 0 : index
    %447 = vector.load %arg18[%c1_288, %c0_289, %c0_290] : memref<2x8x32xf32, #tpu.memory_space<vmem>>, vector<1x8x32xf32>
    %448 = vector.shape_cast %447 : vector<1x8x32xf32> to vector<8x32xf32>
    %449 = arith.negf %446 : vector<8x128xf32>
    %450 = math.exp %449 : vector<8x128xf32>
    %cst_291 = arith.constant 1.000000e+00 : f32
    %451 = vector.broadcast %cst_291 : f32 to vector<8x128xf32>
    %452 = arith.addf %451, %450 : vector<8x128xf32>
    %453 = arith.divf %451, %452 : vector<8x128xf32>
    %454 = math.tanh %446 : vector<8x128xf32>
    %455 = vector.extract_strided_slice %453 {offsets = [0, 0], sizes = [8, 32], strides = [1, 1]} : vector<8x128xf32> to vector<8x32xf32>
    %456 = vector.extract_strided_slice %453 {offsets = [0, 32], sizes = [8, 32], strides = [1, 1]} : vector<8x128xf32> to vector<8x32xf32>
    %457 = vector.extract_strided_slice %454 {offsets = [0, 64], sizes = [8, 32], strides = [1, 1]} : vector<8x128xf32> to vector<8x32xf32>
    %458 = vector.extract_strided_slice %453 {offsets = [0, 96], sizes = [8, 32], strides = [1, 1]} : vector<8x128xf32> to vector<8x32xf32>
    %459 = arith.mulf %456, %448 : vector<8x32xf32>
    %460 = arith.mulf %455, %457 : vector<8x32xf32>
    %461 = arith.addf %459, %460 : vector<8x32xf32>
    %462 = math.tanh %461 : vector<8x32xf32>
    %463 = arith.mulf %458, %462 : vector<8x32xf32>
    %c1_292 = arith.constant 1 : index
    %c0_293 = arith.constant 0 : index
    %c0_294 = arith.constant 0 : index
    %464 = vector.load %arg17[%c1_292, %c0_293, %c0_294] : memref<2x8x32xf32, #tpu.memory_space<vmem>>, vector<1x8x32xf32>
    %465 = vector.shape_cast %464 : vector<1x8x32xf32> to vector<8x32xf32>
    %466 = vector.shape_cast %463 : vector<8x32xf32> to vector<1x8x32xf32>
    tpu.vector_store %arg17[%c1_292, %c0_293, %c0_294], %466 {strides = array<i32>} : memref<2x8x32xf32, #tpu.memory_space<vmem>>, vector<1x8x32xf32>,
    %c1_295 = arith.constant 1 : index
    %c0_296 = arith.constant 0 : index
    %c0_297 = arith.constant 0 : index
    %467 = vector.load %arg18[%c1_295, %c0_296, %c0_297] : memref<2x8x32xf32, #tpu.memory_space<vmem>>, vector<1x8x32xf32>
    %468 = vector.shape_cast %467 : vector<1x8x32xf32> to vector<8x32xf32>
    %469 = vector.shape_cast %461 : vector<8x32xf32> to vector<1x8x32xf32>
    tpu.vector_store %arg18[%c1_295, %c0_296, %c0_297], %469 {strides = array<i32>} : memref<2x8x32xf32, #tpu.memory_space<vmem>>, vector<1x8x32xf32>,
    %c0_298 = arith.constant 0 : index
    %c0_299 = arith.constant 0 : index
    %c0_300 = arith.constant 0 : index
    %470 = vector.load %arg1[%c0_298, %c0_299, %c0_300] : memref<8x8x128xf32, #tpu.memory_space<vmem>>, vector<1x8x128xf32>
    %471 = vector.shape_cast %470 : vector<1x8x128xf32> to vector<8x128xf32>
    %c0_301 = arith.constant 0 : index
    %c0_302 = arith.constant 0 : index
    %472 = vector.load %arg19[%c0_301, %c0_302] : memref<8x128xf32, #tpu.memory_space<vmem>>, vector<8x128xf32>
    tpu.vector_store %arg19[%c0_301, %c0_302], %471 {strides = array<i32>} : memref<8x128xf32, #tpu.memory_space<vmem>>, vector<8x128xf32>,
    %473 = tpu.iota {dimensions = array<i32: 1>} : vector<8x128xi32>
    %c0_303 = arith.constant 0 : index
    %c0_304 = arith.constant 0 : index
    %474 = vector.load %arg19[%c0_303, %c0_304] : memref<8x128xf32, #tpu.memory_space<vmem>>, vector<8x128xf32>
    %c0_305 = arith.constant 0 : index
    %c0_306 = arith.constant 0 : index
    %c0_307 = arith.constant 0 : index
    %475 = vector.load %arg17[%c0_305, %c0_306, %c0_307] : memref<2x8x32xf32, #tpu.memory_space<vmem>>, vector<1x8x32xf32>
    %476 = vector.shape_cast %475 : vector<1x8x32xf32> to vector<8x32xf32>
    %c0_308 = arith.constant 0 : index
    %c0_309 = arith.constant 0 : index
    %477 = vector.load %arg8[%c0_308, %c0_309] : memref<32x128xf32, #tpu.memory_space<vmem>>, vector<32x128xf32>
    %cst_310 = arith.constant dense<0.000000e+00> : vector<8x128xf32>
    %478 = tpu.matmul %476, %477, %cst_310 {dimension_numbers = #tpu.dot_dimension_numbers<[1], [0], [0], [1], [0, 0, 1, 1], [], []>} : vector<8x32xf32>, vector<32x128xf32>, vector<8x128xf32> -> vector<8x128xf32>
    %479 = arith.addf %474, %478 : vector<8x128xf32>
    %c0_311 = arith.constant 0 : index
    %c0_312 = arith.constant 0 : index
    %480 = vector.load %arg9[%c0_311, %c0_312] : memref<1x128xf32, #tpu.memory_space<vmem>>, vector<1x128xf32>
    %481 = vector.broadcast %480 : vector<1x128xf32> to vector<8x128xf32>
    %482 = arith.addf %479, %481 : vector<8x128xf32>
    %c0_313 = arith.constant 0 : index
    %c0_314 = arith.constant 0 : index
    %c0_315 = arith.constant 0 : index
    %483 = vector.load %arg18[%c0_313, %c0_314, %c0_315] : memref<2x8x32xf32, #tpu.memory_space<vmem>>, vector<1x8x32xf32>
    %484 = vector.shape_cast %483 : vector<1x8x32xf32> to vector<8x32xf32>
    %485 = arith.negf %482 : vector<8x128xf32>
    %486 = math.exp %485 : vector<8x128xf32>
    %cst_316 = arith.constant 1.000000e+00 : f32
    %487 = vector.broadcast %cst_316 : f32 to vector<8x128xf32>
    %488 = arith.addf %487, %486 : vector<8x128xf32>
    %489 = arith.divf %487, %488 : vector<8x128xf32>
    %490 = math.tanh %482 : vector<8x128xf32>
    %491 = vector.extract_strided_slice %489 {offsets = [0, 0], sizes = [8, 32], strides = [1, 1]} : vector<8x128xf32> to vector<8x32xf32>
    %492 = vector.extract_strided_slice %489 {offsets = [0, 32], sizes = [8, 32], strides = [1, 1]} : vector<8x128xf32> to vector<8x32xf32>
    %493 = vector.extract_strided_slice %490 {offsets = [0, 64], sizes = [8, 32], strides = [1, 1]} : vector<8x128xf32> to vector<8x32xf32>
    %494 = vector.extract_strided_slice %489 {offsets = [0, 96], sizes = [8, 32], strides = [1, 1]} : vector<8x128xf32> to vector<8x32xf32>
    %495 = arith.mulf %492, %484 : vector<8x32xf32>
    %496 = arith.mulf %491, %493 : vector<8x32xf32>
    %497 = arith.addf %495, %496 : vector<8x32xf32>
    %498 = math.tanh %497 : vector<8x32xf32>
    %499 = arith.mulf %494, %498 : vector<8x32xf32>
    %c0_317 = arith.constant 0 : index
    %c0_318 = arith.constant 0 : index
    %c0_319 = arith.constant 0 : index
    %500 = vector.load %arg17[%c0_317, %c0_318, %c0_319] : memref<2x8x32xf32, #tpu.memory_space<vmem>>, vector<1x8x32xf32>
    %501 = vector.shape_cast %500 : vector<1x8x32xf32> to vector<8x32xf32>
    %502 = vector.shape_cast %499 : vector<8x32xf32> to vector<1x8x32xf32>
    tpu.vector_store %arg17[%c0_317, %c0_318, %c0_319], %502 {strides = array<i32>} : memref<2x8x32xf32, #tpu.memory_space<vmem>>, vector<1x8x32xf32>,
    %c0_320 = arith.constant 0 : index
    %c0_321 = arith.constant 0 : index
    %c0_322 = arith.constant 0 : index
    %503 = vector.load %arg18[%c0_320, %c0_321, %c0_322] : memref<2x8x32xf32, #tpu.memory_space<vmem>>, vector<1x8x32xf32>
    %504 = vector.shape_cast %503 : vector<1x8x32xf32> to vector<8x32xf32>
    %505 = vector.shape_cast %497 : vector<8x32xf32> to vector<1x8x32xf32>
    tpu.vector_store %arg18[%c0_320, %c0_321, %c0_322], %505 {strides = array<i32>} : memref<2x8x32xf32, #tpu.memory_space<vmem>>, vector<1x8x32xf32>,
    %c0_323 = arith.constant 0 : index
    %c0_324 = arith.constant 0 : index
    %506 = vector.load %arg10[%c0_323, %c0_324] : memref<32x128xf32, #tpu.memory_space<vmem>>, vector<32x128xf32>
    %cst_325 = arith.constant dense<0.000000e+00> : vector<8x128xf32>
    %507 = tpu.matmul %499, %506, %cst_325 {dimension_numbers = #tpu.dot_dimension_numbers<[1], [0], [0], [1], [0, 0, 1, 1], [], []>} : vector<8x32xf32>, vector<32x128xf32>, vector<8x128xf32> -> vector<8x128xf32>
    %c1_326 = arith.constant 1 : index
    %c0_327 = arith.constant 0 : index
    %c0_328 = arith.constant 0 : index
    %508 = vector.load %arg17[%c1_326, %c0_327, %c0_328] : memref<2x8x32xf32, #tpu.memory_space<vmem>>, vector<1x8x32xf32>
    %509 = vector.shape_cast %508 : vector<1x8x32xf32> to vector<8x32xf32>
    %c0_329 = arith.constant 0 : index
    %c0_330 = arith.constant 0 : index
    %510 = vector.load %arg11[%c0_329, %c0_330] : memref<32x128xf32, #tpu.memory_space<vmem>>, vector<32x128xf32>
    %cst_331 = arith.constant dense<0.000000e+00> : vector<8x128xf32>
    %511 = tpu.matmul %509, %510, %cst_331 {dimension_numbers = #tpu.dot_dimension_numbers<[1], [0], [0], [1], [0, 0, 1, 1], [], []>} : vector<8x32xf32>, vector<32x128xf32>, vector<8x128xf32> -> vector<8x128xf32>
    %512 = arith.addf %507, %511 : vector<8x128xf32>
    %c0_332 = arith.constant 0 : index
    %c0_333 = arith.constant 0 : index
    %513 = vector.load %arg12[%c0_332, %c0_333] : memref<1x128xf32, #tpu.memory_space<vmem>>, vector<1x128xf32>
    %514 = vector.broadcast %513 : vector<1x128xf32> to vector<8x128xf32>
    %515 = arith.addf %512, %514 : vector<8x128xf32>
    %c1_334 = arith.constant 1 : index
    %c0_335 = arith.constant 0 : index
    %c0_336 = arith.constant 0 : index
    %516 = vector.load %arg18[%c1_334, %c0_335, %c0_336] : memref<2x8x32xf32, #tpu.memory_space<vmem>>, vector<1x8x32xf32>
    %517 = vector.shape_cast %516 : vector<1x8x32xf32> to vector<8x32xf32>
    %518 = arith.negf %515 : vector<8x128xf32>
    %519 = math.exp %518 : vector<8x128xf32>
    %cst_337 = arith.constant 1.000000e+00 : f32
    %520 = vector.broadcast %cst_337 : f32 to vector<8x128xf32>
    %521 = arith.addf %520, %519 : vector<8x128xf32>
    %522 = arith.divf %520, %521 : vector<8x128xf32>
    %523 = math.tanh %515 : vector<8x128xf32>
    %524 = vector.extract_strided_slice %522 {offsets = [0, 0], sizes = [8, 32], strides = [1, 1]} : vector<8x128xf32> to vector<8x32xf32>
    %525 = vector.extract_strided_slice %522 {offsets = [0, 32], sizes = [8, 32], strides = [1, 1]} : vector<8x128xf32> to vector<8x32xf32>
    %526 = vector.extract_strided_slice %523 {offsets = [0, 64], sizes = [8, 32], strides = [1, 1]} : vector<8x128xf32> to vector<8x32xf32>
    %527 = vector.extract_strided_slice %522 {offsets = [0, 96], sizes = [8, 32], strides = [1, 1]} : vector<8x128xf32> to vector<8x32xf32>
    %528 = arith.mulf %525, %517 : vector<8x32xf32>
    %529 = arith.mulf %524, %526 : vector<8x32xf32>
    %530 = arith.addf %528, %529 : vector<8x32xf32>
    %531 = math.tanh %530 : vector<8x32xf32>
    %532 = arith.mulf %527, %531 : vector<8x32xf32>
    %c1_338 = arith.constant 1 : index
    %c0_339 = arith.constant 0 : index
    %c0_340 = arith.constant 0 : index
    %533 = vector.load %arg17[%c1_338, %c0_339, %c0_340] : memref<2x8x32xf32, #tpu.memory_space<vmem>>, vector<1x8x32xf32>
    %534 = vector.shape_cast %533 : vector<1x8x32xf32> to vector<8x32xf32>
    %535 = vector.shape_cast %532 : vector<8x32xf32> to vector<1x8x32xf32>
    tpu.vector_store %arg17[%c1_338, %c0_339, %c0_340], %535 {strides = array<i32>} : memref<2x8x32xf32, #tpu.memory_space<vmem>>, vector<1x8x32xf32>,
    %c1_341 = arith.constant 1 : index
    %c0_342 = arith.constant 0 : index
    %c0_343 = arith.constant 0 : index
    %536 = vector.load %arg18[%c1_341, %c0_342, %c0_343] : memref<2x8x32xf32, #tpu.memory_space<vmem>>, vector<1x8x32xf32>
    %537 = vector.shape_cast %536 : vector<1x8x32xf32> to vector<8x32xf32>
    %538 = vector.shape_cast %530 : vector<8x32xf32> to vector<1x8x32xf32>
    tpu.vector_store %arg18[%c1_341, %c0_342, %c0_343], %538 {strides = array<i32>} : memref<2x8x32xf32, #tpu.memory_space<vmem>>, vector<1x8x32xf32>,
    %c0_344 = arith.constant 0 : index
    %c0_345 = arith.constant 0 : index
    %539 = vector.load %arg14[%c0_344, %c0_345] : memref<32x128xf32, #tpu.memory_space<vmem>>, vector<32x128xf32>
    %cst_346 = arith.constant dense<0.000000e+00> : vector<8x128xf32>
    %540 = tpu.matmul %532, %539, %cst_346 {dimension_numbers = #tpu.dot_dimension_numbers<[1], [0], [0], [1], [0, 0, 1, 1], [], []>} : vector<8x32xf32>, vector<32x128xf32>, vector<8x128xf32> -> vector<8x128xf32>
    %c0_347 = arith.constant 0 : index
    %c0_348 = arith.constant 0 : index
    %541 = vector.load %arg15[%c0_347, %c0_348] : memref<1x128xf32, #tpu.memory_space<vmem>>, vector<1x128xf32>
    %542 = vector.broadcast %541 : vector<1x128xf32> to vector<8x128xf32>
    %543 = arith.addf %540, %542 : vector<8x128xf32>
    %c1_349 = arith.constant 1 : index
    %c0_350 = arith.constant 0 : index
    %c0_351 = arith.constant 0 : index
    %544 = vector.load %arg16[%c1_349, %c0_350, %c0_351] : memref<8x8x128xf32, #tpu.memory_space<vmem>>, vector<1x8x128xf32>
    %545 = vector.shape_cast %544 : vector<1x8x128xf32> to vector<8x128xf32>
    %546 = vector.shape_cast %543 : vector<8x128xf32> to vector<1x8x128xf32>
    tpu.vector_store %arg16[%c1_349, %c0_350, %c0_351], %546 {strides = array<i32>} : memref<8x8x128xf32, #tpu.memory_space<vmem>>, vector<1x8x128xf32>,
    %c0_352 = arith.constant 0 : index
    %547 = memref.load %arg2[%c0_352] : memref<7xi32, #tpu.memory_space<smem>>
    %c1_i32 = arith.constant 1 : i32
    %548 = arith.cmpi eq, %547, %c1_i32 : i32
    %549 = arith.extui %548 : i1 to i32
    %c0_i32 = arith.constant 0 : i32
    %550 = arith.cmpi ne, %549, %c0_i32 : i32
    scf.if %550 {
      %c1_673 = arith.constant 1 : index
      %c0_674 = arith.constant 0 : index
      %c0_675 = arith.constant 0 : index
      %1027 = vector.load %arg1[%c1_673, %c0_674, %c0_675] : memref<8x8x128xf32, #tpu.memory_space<vmem>>, vector<1x8x128xf32>
      %1028 = vector.shape_cast %1027 : vector<1x8x128xf32> to vector<8x128xf32>
      %c0_676 = arith.constant 0 : index
      %c0_677 = arith.constant 0 : index
      %1029 = vector.load %arg19[%c0_676, %c0_677] : memref<8x128xf32, #tpu.memory_space<vmem>>, vector<8x128xf32>
      tpu.vector_store %arg19[%c0_676, %c0_677], %1028 {strides = array<i32>} : memref<8x128xf32, #tpu.memory_space<vmem>>, vector<8x128xf32>,
    } else {
    }
    %c0_i32_353 = arith.constant 0 : i32
    %551 = arith.cmpi eq, %547, %c0_i32_353 : i32
    %552 = arith.extui %551 : i1 to i32
    %c0_i32_354 = arith.constant 0 : i32
    %553 = arith.cmpi ne, %552, %c0_i32_354 : i32
    scf.if %553 {
      %c24_i32 = arith.constant 24 : i32
      %1027 = vector.broadcast %c24_i32 : i32 to vector<8x128xi32>
      %1028 = arith.cmpi slt, %473, %1027 : vector<8x128xi32>
      %cst_673 = arith.constant -1.000000e+30 : f32
      %1029 = vector.broadcast %cst_673 : f32 to vector<8x128xf32>
      %1030 = arith.select %1028, %543, %1029 : vector<8x128xi1>, vector<8x128xf32>
      %cst_674 = arith.constant dense<0xFF800000> : vector<8xf32>
      %1031 = vector.multi_reduction <maximumf>, %1030, %cst_674 [1] : vector<8x128xf32> to vector<8xf32>
      %1032 = vector.shape_cast %1031 : vector<8xf32> to vector<8x1xf32>
      %1033 = vector.broadcast %1032 : vector<8x1xf32> to vector<8x128xf32>
      %1034 = arith.cmpf oeq, %1030, %1033 : vector<8x128xf32>
      %c128_i32 = arith.constant 128 : i32
      %1035 = vector.broadcast %c128_i32 : i32 to vector<8x128xi32>
      %1036 = arith.select %1034, %473, %1035 : vector<8x128xi1>, vector<8x128xi32>
      %cst_675 = arith.constant dense<2147483647> : vector<8xi32>
      %1037 = vector.multi_reduction <minsi>, %1036, %cst_675 [1] : vector<8x128xi32> to vector<8xi32>
      %1038 = vector.shape_cast %1037 : vector<8xi32> to vector<8x1xi32>
      %1039 = vector.broadcast %1038 : vector<8x1xi32> to vector<8x128xi32>
      %1040 = arith.cmpi eq, %473, %1039 : vector<8x128xi32>
      %1041 = arith.extui %1040 : vector<8x128xi1> to vector<8x128xi32>
      %1042 = arith.sitofp %1041 : vector<8x128xi32> to vector<8x128xf32>
      %c0_676 = arith.constant 0 : index
      %c0_677 = arith.constant 0 : index
      %1043 = vector.load %arg13[%c0_676, %c0_677] : memref<128x128xf32, #tpu.memory_space<vmem>>, vector<128x128xf32>
      %cst_678 = arith.constant dense<0.000000e+00> : vector<8x128xf32>
      %1044 = tpu.matmul %1042, %1043, %cst_678 {dimension_numbers = #tpu.dot_dimension_numbers<[1], [0], [0], [1], [0, 0, 1, 1], [], []>} : vector<8x128xf32>, vector<128x128xf32>, vector<8x128xf32> -> vector<8x128xf32>
      %c0_679 = arith.constant 0 : index
      %c0_680 = arith.constant 0 : index
      %1045 = vector.load %arg19[%c0_679, %c0_680] : memref<8x128xf32, #tpu.memory_space<vmem>>, vector<8x128xf32>
      tpu.vector_store %arg19[%c0_679, %c0_680], %1044 {strides = array<i32>} : memref<8x128xf32, #tpu.memory_space<vmem>>, vector<8x128xf32>,
    } else {
    }
    %c0_355 = arith.constant 0 : index
    %c0_356 = arith.constant 0 : index
    %554 = vector.load %arg19[%c0_355, %c0_356] : memref<8x128xf32, #tpu.memory_space<vmem>>, vector<8x128xf32>
    %c0_357 = arith.constant 0 : index
    %c0_358 = arith.constant 0 : index
    %c0_359 = arith.constant 0 : index
    %555 = vector.load %arg17[%c0_357, %c0_358, %c0_359] : memref<2x8x32xf32, #tpu.memory_space<vmem>>, vector<1x8x32xf32>
    %556 = vector.shape_cast %555 : vector<1x8x32xf32> to vector<8x32xf32>
    %c0_360 = arith.constant 0 : index
    %c0_361 = arith.constant 0 : index
    %557 = vector.load %arg8[%c0_360, %c0_361] : memref<32x128xf32, #tpu.memory_space<vmem>>, vector<32x128xf32>
    %cst_362 = arith.constant dense<0.000000e+00> : vector<8x128xf32>
    %558 = tpu.matmul %556, %557, %cst_362 {dimension_numbers = #tpu.dot_dimension_numbers<[1], [0], [0], [1], [0, 0, 1, 1], [], []>} : vector<8x32xf32>, vector<32x128xf32>, vector<8x128xf32> -> vector<8x128xf32>
    %559 = arith.addf %554, %558 : vector<8x128xf32>
    %c0_363 = arith.constant 0 : index
    %c0_364 = arith.constant 0 : index
    %560 = vector.load %arg9[%c0_363, %c0_364] : memref<1x128xf32, #tpu.memory_space<vmem>>, vector<1x128xf32>
    %561 = vector.broadcast %560 : vector<1x128xf32> to vector<8x128xf32>
    %562 = arith.addf %559, %561 : vector<8x128xf32>
    %c0_365 = arith.constant 0 : index
    %c0_366 = arith.constant 0 : index
    %c0_367 = arith.constant 0 : index
    %563 = vector.load %arg18[%c0_365, %c0_366, %c0_367] : memref<2x8x32xf32, #tpu.memory_space<vmem>>, vector<1x8x32xf32>
    %564 = vector.shape_cast %563 : vector<1x8x32xf32> to vector<8x32xf32>
    %565 = arith.negf %562 : vector<8x128xf32>
    %566 = math.exp %565 : vector<8x128xf32>
    %cst_368 = arith.constant 1.000000e+00 : f32
    %567 = vector.broadcast %cst_368 : f32 to vector<8x128xf32>
    %568 = arith.addf %567, %566 : vector<8x128xf32>
    %569 = arith.divf %567, %568 : vector<8x128xf32>
    %570 = math.tanh %562 : vector<8x128xf32>
    %571 = vector.extract_strided_slice %569 {offsets = [0, 0], sizes = [8, 32], strides = [1, 1]} : vector<8x128xf32> to vector<8x32xf32>
    %572 = vector.extract_strided_slice %569 {offsets = [0, 32], sizes = [8, 32], strides = [1, 1]} : vector<8x128xf32> to vector<8x32xf32>
    %573 = vector.extract_strided_slice %570 {offsets = [0, 64], sizes = [8, 32], strides = [1, 1]} : vector<8x128xf32> to vector<8x32xf32>
    %574 = vector.extract_strided_slice %569 {offsets = [0, 96], sizes = [8, 32], strides = [1, 1]} : vector<8x128xf32> to vector<8x32xf32>
    %575 = arith.mulf %572, %564 : vector<8x32xf32>
    %576 = arith.mulf %571, %573 : vector<8x32xf32>
    %577 = arith.addf %575, %576 : vector<8x32xf32>
    %578 = math.tanh %577 : vector<8x32xf32>
    %579 = arith.mulf %574, %578 : vector<8x32xf32>
    %c0_369 = arith.constant 0 : index
    %c0_370 = arith.constant 0 : index
    %c0_371 = arith.constant 0 : index
    %580 = vector.load %arg17[%c0_369, %c0_370, %c0_371] : memref<2x8x32xf32, #tpu.memory_space<vmem>>, vector<1x8x32xf32>
    %581 = vector.shape_cast %580 : vector<1x8x32xf32> to vector<8x32xf32>
    %582 = vector.shape_cast %579 : vector<8x32xf32> to vector<1x8x32xf32>
    tpu.vector_store %arg17[%c0_369, %c0_370, %c0_371], %582 {strides = array<i32>} : memref<2x8x32xf32, #tpu.memory_space<vmem>>, vector<1x8x32xf32>,
    %c0_372 = arith.constant 0 : index
    %c0_373 = arith.constant 0 : index
    %c0_374 = arith.constant 0 : index
    %583 = vector.load %arg18[%c0_372, %c0_373, %c0_374] : memref<2x8x32xf32, #tpu.memory_space<vmem>>, vector<1x8x32xf32>
    %584 = vector.shape_cast %583 : vector<1x8x32xf32> to vector<8x32xf32>
    %585 = vector.shape_cast %577 : vector<8x32xf32> to vector<1x8x32xf32>
    tpu.vector_store %arg18[%c0_372, %c0_373, %c0_374], %585 {strides = array<i32>} : memref<2x8x32xf32, #tpu.memory_space<vmem>>, vector<1x8x32xf32>,
    %c0_375 = arith.constant 0 : index
    %c0_376 = arith.constant 0 : index
    %586 = vector.load %arg10[%c0_375, %c0_376] : memref<32x128xf32, #tpu.memory_space<vmem>>, vector<32x128xf32>
    %cst_377 = arith.constant dense<0.000000e+00> : vector<8x128xf32>
    %587 = tpu.matmul %579, %586, %cst_377 {dimension_numbers = #tpu.dot_dimension_numbers<[1], [0], [0], [1], [0, 0, 1, 1], [], []>} : vector<8x32xf32>, vector<32x128xf32>, vector<8x128xf32> -> vector<8x128xf32>
    %c1_378 = arith.constant 1 : index
    %c0_379 = arith.constant 0 : index
    %c0_380 = arith.constant 0 : index
    %588 = vector.load %arg17[%c1_378, %c0_379, %c0_380] : memref<2x8x32xf32, #tpu.memory_space<vmem>>, vector<1x8x32xf32>
    %589 = vector.shape_cast %588 : vector<1x8x32xf32> to vector<8x32xf32>
    %c0_381 = arith.constant 0 : index
    %c0_382 = arith.constant 0 : index
    %590 = vector.load %arg11[%c0_381, %c0_382] : memref<32x128xf32, #tpu.memory_space<vmem>>, vector<32x128xf32>
    %cst_383 = arith.constant dense<0.000000e+00> : vector<8x128xf32>
    %591 = tpu.matmul %589, %590, %cst_383 {dimension_numbers = #tpu.dot_dimension_numbers<[1], [0], [0], [1], [0, 0, 1, 1], [], []>} : vector<8x32xf32>, vector<32x128xf32>, vector<8x128xf32> -> vector<8x128xf32>
    %592 = arith.addf %587, %591 : vector<8x128xf32>
    %c0_384 = arith.constant 0 : index
    %c0_385 = arith.constant 0 : index
    %593 = vector.load %arg12[%c0_384, %c0_385] : memref<1x128xf32, #tpu.memory_space<vmem>>, vector<1x128xf32>
    %594 = vector.broadcast %593 : vector<1x128xf32> to vector<8x128xf32>
    %595 = arith.addf %592, %594 : vector<8x128xf32>
    %c1_386 = arith.constant 1 : index
    %c0_387 = arith.constant 0 : index
    %c0_388 = arith.constant 0 : index
    %596 = vector.load %arg18[%c1_386, %c0_387, %c0_388] : memref<2x8x32xf32, #tpu.memory_space<vmem>>, vector<1x8x32xf32>
    %597 = vector.shape_cast %596 : vector<1x8x32xf32> to vector<8x32xf32>
    %598 = arith.negf %595 : vector<8x128xf32>
    %599 = math.exp %598 : vector<8x128xf32>
    %cst_389 = arith.constant 1.000000e+00 : f32
    %600 = vector.broadcast %cst_389 : f32 to vector<8x128xf32>
    %601 = arith.addf %600, %599 : vector<8x128xf32>
    %602 = arith.divf %600, %601 : vector<8x128xf32>
    %603 = math.tanh %595 : vector<8x128xf32>
    %604 = vector.extract_strided_slice %602 {offsets = [0, 0], sizes = [8, 32], strides = [1, 1]} : vector<8x128xf32> to vector<8x32xf32>
    %605 = vector.extract_strided_slice %602 {offsets = [0, 32], sizes = [8, 32], strides = [1, 1]} : vector<8x128xf32> to vector<8x32xf32>
    %606 = vector.extract_strided_slice %603 {offsets = [0, 64], sizes = [8, 32], strides = [1, 1]} : vector<8x128xf32> to vector<8x32xf32>
    %607 = vector.extract_strided_slice %602 {offsets = [0, 96], sizes = [8, 32], strides = [1, 1]} : vector<8x128xf32> to vector<8x32xf32>
    %608 = arith.mulf %605, %597 : vector<8x32xf32>
    %609 = arith.mulf %604, %606 : vector<8x32xf32>
    %610 = arith.addf %608, %609 : vector<8x32xf32>
    %611 = math.tanh %610 : vector<8x32xf32>
    %612 = arith.mulf %607, %611 : vector<8x32xf32>
    %c1_390 = arith.constant 1 : index
    %c0_391 = arith.constant 0 : index
    %c0_392 = arith.constant 0 : index
    %613 = vector.load %arg17[%c1_390, %c0_391, %c0_392] : memref<2x8x32xf32, #tpu.memory_space<vmem>>, vector<1x8x32xf32>
    %614 = vector.shape_cast %613 : vector<1x8x32xf32> to vector<8x32xf32>
    %615 = vector.shape_cast %612 : vector<8x32xf32> to vector<1x8x32xf32>
    tpu.vector_store %arg17[%c1_390, %c0_391, %c0_392], %615 {strides = array<i32>} : memref<2x8x32xf32, #tpu.memory_space<vmem>>, vector<1x8x32xf32>,
    %c1_393 = arith.constant 1 : index
    %c0_394 = arith.constant 0 : index
    %c0_395 = arith.constant 0 : index
    %616 = vector.load %arg18[%c1_393, %c0_394, %c0_395] : memref<2x8x32xf32, #tpu.memory_space<vmem>>, vector<1x8x32xf32>
    %617 = vector.shape_cast %616 : vector<1x8x32xf32> to vector<8x32xf32>
    %618 = vector.shape_cast %610 : vector<8x32xf32> to vector<1x8x32xf32>
    tpu.vector_store %arg18[%c1_393, %c0_394, %c0_395], %618 {strides = array<i32>} : memref<2x8x32xf32, #tpu.memory_space<vmem>>, vector<1x8x32xf32>,
    %c0_396 = arith.constant 0 : index
    %c0_397 = arith.constant 0 : index
    %619 = vector.load %arg14[%c0_396, %c0_397] : memref<32x128xf32, #tpu.memory_space<vmem>>, vector<32x128xf32>
    %cst_398 = arith.constant dense<0.000000e+00> : vector<8x128xf32>
    %620 = tpu.matmul %612, %619, %cst_398 {dimension_numbers = #tpu.dot_dimension_numbers<[1], [0], [0], [1], [0, 0, 1, 1], [], []>} : vector<8x32xf32>, vector<32x128xf32>, vector<8x128xf32> -> vector<8x128xf32>
    %c0_399 = arith.constant 0 : index
    %c0_400 = arith.constant 0 : index
    %621 = vector.load %arg15[%c0_399, %c0_400] : memref<1x128xf32, #tpu.memory_space<vmem>>, vector<1x128xf32>
    %622 = vector.broadcast %621 : vector<1x128xf32> to vector<8x128xf32>
    %623 = arith.addf %620, %622 : vector<8x128xf32>
    %c2_401 = arith.constant 2 : index
    %c0_402 = arith.constant 0 : index
    %c0_403 = arith.constant 0 : index
    %624 = vector.load %arg16[%c2_401, %c0_402, %c0_403] : memref<8x8x128xf32, #tpu.memory_space<vmem>>, vector<1x8x128xf32>
    %625 = vector.shape_cast %624 : vector<1x8x128xf32> to vector<8x128xf32>
    %626 = vector.shape_cast %623 : vector<8x128xf32> to vector<1x8x128xf32>
    tpu.vector_store %arg16[%c2_401, %c0_402, %c0_403], %626 {strides = array<i32>} : memref<8x8x128xf32, #tpu.memory_space<vmem>>, vector<1x8x128xf32>,
    %c1_404 = arith.constant 1 : index
    %627 = memref.load %arg2[%c1_404] : memref<7xi32, #tpu.memory_space<smem>>
    %c1_i32_405 = arith.constant 1 : i32
    %628 = arith.cmpi eq, %627, %c1_i32_405 : i32
    %629 = arith.extui %628 : i1 to i32
    %c0_i32_406 = arith.constant 0 : i32
    %630 = arith.cmpi ne, %629, %c0_i32_406 : i32
    scf.if %630 {
      %c2_673 = arith.constant 2 : index
      %c0_674 = arith.constant 0 : index
      %c0_675 = arith.constant 0 : index
      %1027 = vector.load %arg1[%c2_673, %c0_674, %c0_675] : memref<8x8x128xf32, #tpu.memory_space<vmem>>, vector<1x8x128xf32>
      %1028 = vector.shape_cast %1027 : vector<1x8x128xf32> to vector<8x128xf32>
      %c0_676 = arith.constant 0 : index
      %c0_677 = arith.constant 0 : index
      %1029 = vector.load %arg19[%c0_676, %c0_677] : memref<8x128xf32, #tpu.memory_space<vmem>>, vector<8x128xf32>
      tpu.vector_store %arg19[%c0_676, %c0_677], %1028 {strides = array<i32>} : memref<8x128xf32, #tpu.memory_space<vmem>>, vector<8x128xf32>,
    } else {
    }
    %c0_i32_407 = arith.constant 0 : i32
    %631 = arith.cmpi eq, %627, %c0_i32_407 : i32
    %632 = arith.extui %631 : i1 to i32
    %c0_i32_408 = arith.constant 0 : i32
    %633 = arith.cmpi ne, %632, %c0_i32_408 : i32
    scf.if %633 {
      %c24_i32 = arith.constant 24 : i32
      %1027 = vector.broadcast %c24_i32 : i32 to vector<8x128xi32>
      %1028 = arith.cmpi slt, %473, %1027 : vector<8x128xi32>
      %cst_673 = arith.constant -1.000000e+30 : f32
      %1029 = vector.broadcast %cst_673 : f32 to vector<8x128xf32>
      %1030 = arith.select %1028, %623, %1029 : vector<8x128xi1>, vector<8x128xf32>
      %cst_674 = arith.constant dense<0xFF800000> : vector<8xf32>
      %1031 = vector.multi_reduction <maximumf>, %1030, %cst_674 [1] : vector<8x128xf32> to vector<8xf32>
      %1032 = vector.shape_cast %1031 : vector<8xf32> to vector<8x1xf32>
      %1033 = vector.broadcast %1032 : vector<8x1xf32> to vector<8x128xf32>
      %1034 = arith.cmpf oeq, %1030, %1033 : vector<8x128xf32>
      %c128_i32 = arith.constant 128 : i32
      %1035 = vector.broadcast %c128_i32 : i32 to vector<8x128xi32>
      %1036 = arith.select %1034, %473, %1035 : vector<8x128xi1>, vector<8x128xi32>
      %cst_675 = arith.constant dense<2147483647> : vector<8xi32>
      %1037 = vector.multi_reduction <minsi>, %1036, %cst_675 [1] : vector<8x128xi32> to vector<8xi32>
      %1038 = vector.shape_cast %1037 : vector<8xi32> to vector<8x1xi32>
      %1039 = vector.broadcast %1038 : vector<8x1xi32> to vector<8x128xi32>
      %1040 = arith.cmpi eq, %473, %1039 : vector<8x128xi32>
      %1041 = arith.extui %1040 : vector<8x128xi1> to vector<8x128xi32>
      %1042 = arith.sitofp %1041 : vector<8x128xi32> to vector<8x128xf32>
      %c0_676 = arith.constant 0 : index
      %c0_677 = arith.constant 0 : index
      %1043 = vector.load %arg13[%c0_676, %c0_677] : memref<128x128xf32, #tpu.memory_space<vmem>>, vector<128x128xf32>
      %cst_678 = arith.constant dense<0.000000e+00> : vector<8x128xf32>
      %1044 = tpu.matmul %1042, %1043, %cst_678 {dimension_numbers = #tpu.dot_dimension_numbers<[1], [0], [0], [1], [0, 0, 1, 1], [], []>} : vector<8x128xf32>, vector<128x128xf32>, vector<8x128xf32> -> vector<8x128xf32>
      %c0_679 = arith.constant 0 : index
      %c0_680 = arith.constant 0 : index
      %1045 = vector.load %arg19[%c0_679, %c0_680] : memref<8x128xf32, #tpu.memory_space<vmem>>, vector<8x128xf32>
      tpu.vector_store %arg19[%c0_679, %c0_680], %1044 {strides = array<i32>} : memref<8x128xf32, #tpu.memory_space<vmem>>, vector<8x128xf32>,
    } else {
    }
    %c0_409 = arith.constant 0 : index
    %c0_410 = arith.constant 0 : index
    %634 = vector.load %arg19[%c0_409, %c0_410] : memref<8x128xf32, #tpu.memory_space<vmem>>, vector<8x128xf32>
    %c0_411 = arith.constant 0 : index
    %c0_412 = arith.constant 0 : index
    %c0_413 = arith.constant 0 : index
    %635 = vector.load %arg17[%c0_411, %c0_412, %c0_413] : memref<2x8x32xf32, #tpu.memory_space<vmem>>, vector<1x8x32xf32>
    %636 = vector.shape_cast %635 : vector<1x8x32xf32> to vector<8x32xf32>
    %c0_414 = arith.constant 0 : index
    %c0_415 = arith.constant 0 : index
    %637 = vector.load %arg8[%c0_414, %c0_415] : memref<32x128xf32, #tpu.memory_space<vmem>>, vector<32x128xf32>
    %cst_416 = arith.constant dense<0.000000e+00> : vector<8x128xf32>
    %638 = tpu.matmul %636, %637, %cst_416 {dimension_numbers = #tpu.dot_dimension_numbers<[1], [0], [0], [1], [0, 0, 1, 1], [], []>} : vector<8x32xf32>, vector<32x128xf32>, vector<8x128xf32> -> vector<8x128xf32>
    %639 = arith.addf %634, %638 : vector<8x128xf32>
    %c0_417 = arith.constant 0 : index
    %c0_418 = arith.constant 0 : index
    %640 = vector.load %arg9[%c0_417, %c0_418] : memref<1x128xf32, #tpu.memory_space<vmem>>, vector<1x128xf32>
    %641 = vector.broadcast %640 : vector<1x128xf32> to vector<8x128xf32>
    %642 = arith.addf %639, %641 : vector<8x128xf32>
    %c0_419 = arith.constant 0 : index
    %c0_420 = arith.constant 0 : index
    %c0_421 = arith.constant 0 : index
    %643 = vector.load %arg18[%c0_419, %c0_420, %c0_421] : memref<2x8x32xf32, #tpu.memory_space<vmem>>, vector<1x8x32xf32>
    %644 = vector.shape_cast %643 : vector<1x8x32xf32> to vector<8x32xf32>
    %645 = arith.negf %642 : vector<8x128xf32>
    %646 = math.exp %645 : vector<8x128xf32>
    %cst_422 = arith.constant 1.000000e+00 : f32
    %647 = vector.broadcast %cst_422 : f32 to vector<8x128xf32>
    %648 = arith.addf %647, %646 : vector<8x128xf32>
    %649 = arith.divf %647, %648 : vector<8x128xf32>
    %650 = math.tanh %642 : vector<8x128xf32>
    %651 = vector.extract_strided_slice %649 {offsets = [0, 0], sizes = [8, 32], strides = [1, 1]} : vector<8x128xf32> to vector<8x32xf32>
    %652 = vector.extract_strided_slice %649 {offsets = [0, 32], sizes = [8, 32], strides = [1, 1]} : vector<8x128xf32> to vector<8x32xf32>
    %653 = vector.extract_strided_slice %650 {offsets = [0, 64], sizes = [8, 32], strides = [1, 1]} : vector<8x128xf32> to vector<8x32xf32>
    %654 = vector.extract_strided_slice %649 {offsets = [0, 96], sizes = [8, 32], strides = [1, 1]} : vector<8x128xf32> to vector<8x32xf32>
    %655 = arith.mulf %652, %644 : vector<8x32xf32>
    %656 = arith.mulf %651, %653 : vector<8x32xf32>
    %657 = arith.addf %655, %656 : vector<8x32xf32>
    %658 = math.tanh %657 : vector<8x32xf32>
    %659 = arith.mulf %654, %658 : vector<8x32xf32>
    %c0_423 = arith.constant 0 : index
    %c0_424 = arith.constant 0 : index
    %c0_425 = arith.constant 0 : index
    %660 = vector.load %arg17[%c0_423, %c0_424, %c0_425] : memref<2x8x32xf32, #tpu.memory_space<vmem>>, vector<1x8x32xf32>
    %661 = vector.shape_cast %660 : vector<1x8x32xf32> to vector<8x32xf32>
    %662 = vector.shape_cast %659 : vector<8x32xf32> to vector<1x8x32xf32>
    tpu.vector_store %arg17[%c0_423, %c0_424, %c0_425], %662 {strides = array<i32>} : memref<2x8x32xf32, #tpu.memory_space<vmem>>, vector<1x8x32xf32>,
    %c0_426 = arith.constant 0 : index
    %c0_427 = arith.constant 0 : index
    %c0_428 = arith.constant 0 : index
    %663 = vector.load %arg18[%c0_426, %c0_427, %c0_428] : memref<2x8x32xf32, #tpu.memory_space<vmem>>, vector<1x8x32xf32>
    %664 = vector.shape_cast %663 : vector<1x8x32xf32> to vector<8x32xf32>
    %665 = vector.shape_cast %657 : vector<8x32xf32> to vector<1x8x32xf32>
    tpu.vector_store %arg18[%c0_426, %c0_427, %c0_428], %665 {strides = array<i32>} : memref<2x8x32xf32, #tpu.memory_space<vmem>>, vector<1x8x32xf32>,
    %c0_429 = arith.constant 0 : index
    %c0_430 = arith.constant 0 : index
    %666 = vector.load %arg10[%c0_429, %c0_430] : memref<32x128xf32, #tpu.memory_space<vmem>>, vector<32x128xf32>
    %cst_431 = arith.constant dense<0.000000e+00> : vector<8x128xf32>
    %667 = tpu.matmul %659, %666, %cst_431 {dimension_numbers = #tpu.dot_dimension_numbers<[1], [0], [0], [1], [0, 0, 1, 1], [], []>} : vector<8x32xf32>, vector<32x128xf32>, vector<8x128xf32> -> vector<8x128xf32>
    %c1_432 = arith.constant 1 : index
    %c0_433 = arith.constant 0 : index
    %c0_434 = arith.constant 0 : index
    %668 = vector.load %arg17[%c1_432, %c0_433, %c0_434] : memref<2x8x32xf32, #tpu.memory_space<vmem>>, vector<1x8x32xf32>
    %669 = vector.shape_cast %668 : vector<1x8x32xf32> to vector<8x32xf32>
    %c0_435 = arith.constant 0 : index
    %c0_436 = arith.constant 0 : index
    %670 = vector.load %arg11[%c0_435, %c0_436] : memref<32x128xf32, #tpu.memory_space<vmem>>, vector<32x128xf32>
    %cst_437 = arith.constant dense<0.000000e+00> : vector<8x128xf32>
    %671 = tpu.matmul %669, %670, %cst_437 {dimension_numbers = #tpu.dot_dimension_numbers<[1], [0], [0], [1], [0, 0, 1, 1], [], []>} : vector<8x32xf32>, vector<32x128xf32>, vector<8x128xf32> -> vector<8x128xf32>
    %672 = arith.addf %667, %671 : vector<8x128xf32>
    %c0_438 = arith.constant 0 : index
    %c0_439 = arith.constant 0 : index
    %673 = vector.load %arg12[%c0_438, %c0_439] : memref<1x128xf32, #tpu.memory_space<vmem>>, vector<1x128xf32>
    %674 = vector.broadcast %673 : vector<1x128xf32> to vector<8x128xf32>
    %675 = arith.addf %672, %674 : vector<8x128xf32>
    %c1_440 = arith.constant 1 : index
    %c0_441 = arith.constant 0 : index
    %c0_442 = arith.constant 0 : index
    %676 = vector.load %arg18[%c1_440, %c0_441, %c0_442] : memref<2x8x32xf32, #tpu.memory_space<vmem>>, vector<1x8x32xf32>
    %677 = vector.shape_cast %676 : vector<1x8x32xf32> to vector<8x32xf32>
    %678 = arith.negf %675 : vector<8x128xf32>
    %679 = math.exp %678 : vector<8x128xf32>
    %cst_443 = arith.constant 1.000000e+00 : f32
    %680 = vector.broadcast %cst_443 : f32 to vector<8x128xf32>
    %681 = arith.addf %680, %679 : vector<8x128xf32>
    %682 = arith.divf %680, %681 : vector<8x128xf32>
    %683 = math.tanh %675 : vector<8x128xf32>
    %684 = vector.extract_strided_slice %682 {offsets = [0, 0], sizes = [8, 32], strides = [1, 1]} : vector<8x128xf32> to vector<8x32xf32>
    %685 = vector.extract_strided_slice %682 {offsets = [0, 32], sizes = [8, 32], strides = [1, 1]} : vector<8x128xf32> to vector<8x32xf32>
    %686 = vector.extract_strided_slice %683 {offsets = [0, 64], sizes = [8, 32], strides = [1, 1]} : vector<8x128xf32> to vector<8x32xf32>
    %687 = vector.extract_strided_slice %682 {offsets = [0, 96], sizes = [8, 32], strides = [1, 1]} : vector<8x128xf32> to vector<8x32xf32>
    %688 = arith.mulf %685, %677 : vector<8x32xf32>
    %689 = arith.mulf %684, %686 : vector<8x32xf32>
    %690 = arith.addf %688, %689 : vector<8x32xf32>
    %691 = math.tanh %690 : vector<8x32xf32>
    %692 = arith.mulf %687, %691 : vector<8x32xf32>
    %c1_444 = arith.constant 1 : index
    %c0_445 = arith.constant 0 : index
    %c0_446 = arith.constant 0 : index
    %693 = vector.load %arg17[%c1_444, %c0_445, %c0_446] : memref<2x8x32xf32, #tpu.memory_space<vmem>>, vector<1x8x32xf32>
    %694 = vector.shape_cast %693 : vector<1x8x32xf32> to vector<8x32xf32>
    %695 = vector.shape_cast %692 : vector<8x32xf32> to vector<1x8x32xf32>
    tpu.vector_store %arg17[%c1_444, %c0_445, %c0_446], %695 {strides = array<i32>} : memref<2x8x32xf32, #tpu.memory_space<vmem>>, vector<1x8x32xf32>,
    %c1_447 = arith.constant 1 : index
    %c0_448 = arith.constant 0 : index
    %c0_449 = arith.constant 0 : index
    %696 = vector.load %arg18[%c1_447, %c0_448, %c0_449] : memref<2x8x32xf32, #tpu.memory_space<vmem>>, vector<1x8x32xf32>
    %697 = vector.shape_cast %696 : vector<1x8x32xf32> to vector<8x32xf32>
    %698 = vector.shape_cast %690 : vector<8x32xf32> to vector<1x8x32xf32>
    tpu.vector_store %arg18[%c1_447, %c0_448, %c0_449], %698 {strides = array<i32>} : memref<2x8x32xf32, #tpu.memory_space<vmem>>, vector<1x8x32xf32>,
    %c0_450 = arith.constant 0 : index
    %c0_451 = arith.constant 0 : index
    %699 = vector.load %arg14[%c0_450, %c0_451] : memref<32x128xf32, #tpu.memory_space<vmem>>, vector<32x128xf32>
    %cst_452 = arith.constant dense<0.000000e+00> : vector<8x128xf32>
    %700 = tpu.matmul %692, %699, %cst_452 {dimension_numbers = #tpu.dot_dimension_numbers<[1], [0], [0], [1], [0, 0, 1, 1], [], []>} : vector<8x32xf32>, vector<32x128xf32>, vector<8x128xf32> -> vector<8x128xf32>
    %c0_453 = arith.constant 0 : index
    %c0_454 = arith.constant 0 : index
    %701 = vector.load %arg15[%c0_453, %c0_454] : memref<1x128xf32, #tpu.memory_space<vmem>>, vector<1x128xf32>
    %702 = vector.broadcast %701 : vector<1x128xf32> to vector<8x128xf32>
    %703 = arith.addf %700, %702 : vector<8x128xf32>
    %c3_455 = arith.constant 3 : index
    %c0_456 = arith.constant 0 : index
    %c0_457 = arith.constant 0 : index
    %704 = vector.load %arg16[%c3_455, %c0_456, %c0_457] : memref<8x8x128xf32, #tpu.memory_space<vmem>>, vector<1x8x128xf32>
    %705 = vector.shape_cast %704 : vector<1x8x128xf32> to vector<8x128xf32>
    %706 = vector.shape_cast %703 : vector<8x128xf32> to vector<1x8x128xf32>
    tpu.vector_store %arg16[%c3_455, %c0_456, %c0_457], %706 {strides = array<i32>} : memref<8x8x128xf32, #tpu.memory_space<vmem>>, vector<1x8x128xf32>,
    %c2_458 = arith.constant 2 : index
    %707 = memref.load %arg2[%c2_458] : memref<7xi32, #tpu.memory_space<smem>>
    %c1_i32_459 = arith.constant 1 : i32
    %708 = arith.cmpi eq, %707, %c1_i32_459 : i32
    %709 = arith.extui %708 : i1 to i32
    %c0_i32_460 = arith.constant 0 : i32
    %710 = arith.cmpi ne, %709, %c0_i32_460 : i32
    scf.if %710 {
      %c3_673 = arith.constant 3 : index
      %c0_674 = arith.constant 0 : index
      %c0_675 = arith.constant 0 : index
      %1027 = vector.load %arg1[%c3_673, %c0_674, %c0_675] : memref<8x8x128xf32, #tpu.memory_space<vmem>>, vector<1x8x128xf32>
      %1028 = vector.shape_cast %1027 : vector<1x8x128xf32> to vector<8x128xf32>
      %c0_676 = arith.constant 0 : index
      %c0_677 = arith.constant 0 : index
      %1029 = vector.load %arg19[%c0_676, %c0_677] : memref<8x128xf32, #tpu.memory_space<vmem>>, vector<8x128xf32>
      tpu.vector_store %arg19[%c0_676, %c0_677], %1028 {strides = array<i32>} : memref<8x128xf32, #tpu.memory_space<vmem>>, vector<8x128xf32>,
    } else {
    }
    %c0_i32_461 = arith.constant 0 : i32
    %711 = arith.cmpi eq, %707, %c0_i32_461 : i32
    %712 = arith.extui %711 : i1 to i32
    %c0_i32_462 = arith.constant 0 : i32
    %713 = arith.cmpi ne, %712, %c0_i32_462 : i32
    scf.if %713 {
      %c24_i32 = arith.constant 24 : i32
      %1027 = vector.broadcast %c24_i32 : i32 to vector<8x128xi32>
      %1028 = arith.cmpi slt, %473, %1027 : vector<8x128xi32>
      %cst_673 = arith.constant -1.000000e+30 : f32
      %1029 = vector.broadcast %cst_673 : f32 to vector<8x128xf32>
      %1030 = arith.select %1028, %703, %1029 : vector<8x128xi1>, vector<8x128xf32>
      %cst_674 = arith.constant dense<0xFF800000> : vector<8xf32>
      %1031 = vector.multi_reduction <maximumf>, %1030, %cst_674 [1] : vector<8x128xf32> to vector<8xf32>
      %1032 = vector.shape_cast %1031 : vector<8xf32> to vector<8x1xf32>
      %1033 = vector.broadcast %1032 : vector<8x1xf32> to vector<8x128xf32>
      %1034 = arith.cmpf oeq, %1030, %1033 : vector<8x128xf32>
      %c128_i32 = arith.constant 128 : i32
      %1035 = vector.broadcast %c128_i32 : i32 to vector<8x128xi32>
      %1036 = arith.select %1034, %473, %1035 : vector<8x128xi1>, vector<8x128xi32>
      %cst_675 = arith.constant dense<2147483647> : vector<8xi32>
      %1037 = vector.multi_reduction <minsi>, %1036, %cst_675 [1] : vector<8x128xi32> to vector<8xi32>
      %1038 = vector.shape_cast %1037 : vector<8xi32> to vector<8x1xi32>
      %1039 = vector.broadcast %1038 : vector<8x1xi32> to vector<8x128xi32>
      %1040 = arith.cmpi eq, %473, %1039 : vector<8x128xi32>
      %1041 = arith.extui %1040 : vector<8x128xi1> to vector<8x128xi32>
      %1042 = arith.sitofp %1041 : vector<8x128xi32> to vector<8x128xf32>
      %c0_676 = arith.constant 0 : index
      %c0_677 = arith.constant 0 : index
      %1043 = vector.load %arg13[%c0_676, %c0_677] : memref<128x128xf32, #tpu.memory_space<vmem>>, vector<128x128xf32>
      %cst_678 = arith.constant dense<0.000000e+00> : vector<8x128xf32>
      %1044 = tpu.matmul %1042, %1043, %cst_678 {dimension_numbers = #tpu.dot_dimension_numbers<[1], [0], [0], [1], [0, 0, 1, 1], [], []>} : vector<8x128xf32>, vector<128x128xf32>, vector<8x128xf32> -> vector<8x128xf32>
      %c0_679 = arith.constant 0 : index
      %c0_680 = arith.constant 0 : index
      %1045 = vector.load %arg19[%c0_679, %c0_680] : memref<8x128xf32, #tpu.memory_space<vmem>>, vector<8x128xf32>
      tpu.vector_store %arg19[%c0_679, %c0_680], %1044 {strides = array<i32>} : memref<8x128xf32, #tpu.memory_space<vmem>>, vector<8x128xf32>,
    } else {
    }
    %c0_463 = arith.constant 0 : index
    %c0_464 = arith.constant 0 : index
    %714 = vector.load %arg19[%c0_463, %c0_464] : memref<8x128xf32, #tpu.memory_space<vmem>>, vector<8x128xf32>
    %c0_465 = arith.constant 0 : index
    %c0_466 = arith.constant 0 : index
    %c0_467 = arith.constant 0 : index
    %715 = vector.load %arg17[%c0_465, %c0_466, %c0_467] : memref<2x8x32xf32, #tpu.memory_space<vmem>>, vector<1x8x32xf32>
    %716 = vector.shape_cast %715 : vector<1x8x32xf32> to vector<8x32xf32>
    %c0_468 = arith.constant 0 : index
    %c0_469 = arith.constant 0 : index
    %717 = vector.load %arg8[%c0_468, %c0_469] : memref<32x128xf32, #tpu.memory_space<vmem>>, vector<32x128xf32>
    %cst_470 = arith.constant dense<0.000000e+00> : vector<8x128xf32>
    %718 = tpu.matmul %716, %717, %cst_470 {dimension_numbers = #tpu.dot_dimension_numbers<[1], [0], [0], [1], [0, 0, 1, 1], [], []>} : vector<8x32xf32>, vector<32x128xf32>, vector<8x128xf32> -> vector<8x128xf32>
    %719 = arith.addf %714, %718 : vector<8x128xf32>
    %c0_471 = arith.constant 0 : index
    %c0_472 = arith.constant 0 : index
    %720 = vector.load %arg9[%c0_471, %c0_472] : memref<1x128xf32, #tpu.memory_space<vmem>>, vector<1x128xf32>
    %721 = vector.broadcast %720 : vector<1x128xf32> to vector<8x128xf32>
    %722 = arith.addf %719, %721 : vector<8x128xf32>
    %c0_473 = arith.constant 0 : index
    %c0_474 = arith.constant 0 : index
    %c0_475 = arith.constant 0 : index
    %723 = vector.load %arg18[%c0_473, %c0_474, %c0_475] : memref<2x8x32xf32, #tpu.memory_space<vmem>>, vector<1x8x32xf32>
    %724 = vector.shape_cast %723 : vector<1x8x32xf32> to vector<8x32xf32>
    %725 = arith.negf %722 : vector<8x128xf32>
    %726 = math.exp %725 : vector<8x128xf32>
    %cst_476 = arith.constant 1.000000e+00 : f32
    %727 = vector.broadcast %cst_476 : f32 to vector<8x128xf32>
    %728 = arith.addf %727, %726 : vector<8x128xf32>
    %729 = arith.divf %727, %728 : vector<8x128xf32>
    %730 = math.tanh %722 : vector<8x128xf32>
    %731 = vector.extract_strided_slice %729 {offsets = [0, 0], sizes = [8, 32], strides = [1, 1]} : vector<8x128xf32> to vector<8x32xf32>
    %732 = vector.extract_strided_slice %729 {offsets = [0, 32], sizes = [8, 32], strides = [1, 1]} : vector<8x128xf32> to vector<8x32xf32>
    %733 = vector.extract_strided_slice %730 {offsets = [0, 64], sizes = [8, 32], strides = [1, 1]} : vector<8x128xf32> to vector<8x32xf32>
    %734 = vector.extract_strided_slice %729 {offsets = [0, 96], sizes = [8, 32], strides = [1, 1]} : vector<8x128xf32> to vector<8x32xf32>
    %735 = arith.mulf %732, %724 : vector<8x32xf32>
    %736 = arith.mulf %731, %733 : vector<8x32xf32>
    %737 = arith.addf %735, %736 : vector<8x32xf32>
    %738 = math.tanh %737 : vector<8x32xf32>
    %739 = arith.mulf %734, %738 : vector<8x32xf32>
    %c0_477 = arith.constant 0 : index
    %c0_478 = arith.constant 0 : index
    %c0_479 = arith.constant 0 : index
    %740 = vector.load %arg17[%c0_477, %c0_478, %c0_479] : memref<2x8x32xf32, #tpu.memory_space<vmem>>, vector<1x8x32xf32>
    %741 = vector.shape_cast %740 : vector<1x8x32xf32> to vector<8x32xf32>
    %742 = vector.shape_cast %739 : vector<8x32xf32> to vector<1x8x32xf32>
    tpu.vector_store %arg17[%c0_477, %c0_478, %c0_479], %742 {strides = array<i32>} : memref<2x8x32xf32, #tpu.memory_space<vmem>>, vector<1x8x32xf32>,
    %c0_480 = arith.constant 0 : index
    %c0_481 = arith.constant 0 : index
    %c0_482 = arith.constant 0 : index
    %743 = vector.load %arg18[%c0_480, %c0_481, %c0_482] : memref<2x8x32xf32, #tpu.memory_space<vmem>>, vector<1x8x32xf32>
    %744 = vector.shape_cast %743 : vector<1x8x32xf32> to vector<8x32xf32>
    %745 = vector.shape_cast %737 : vector<8x32xf32> to vector<1x8x32xf32>
    tpu.vector_store %arg18[%c0_480, %c0_481, %c0_482], %745 {strides = array<i32>} : memref<2x8x32xf32, #tpu.memory_space<vmem>>, vector<1x8x32xf32>,
    %c0_483 = arith.constant 0 : index
    %c0_484 = arith.constant 0 : index
    %746 = vector.load %arg10[%c0_483, %c0_484] : memref<32x128xf32, #tpu.memory_space<vmem>>, vector<32x128xf32>
    %cst_485 = arith.constant dense<0.000000e+00> : vector<8x128xf32>
    %747 = tpu.matmul %739, %746, %cst_485 {dimension_numbers = #tpu.dot_dimension_numbers<[1], [0], [0], [1], [0, 0, 1, 1], [], []>} : vector<8x32xf32>, vector<32x128xf32>, vector<8x128xf32> -> vector<8x128xf32>
    %c1_486 = arith.constant 1 : index
    %c0_487 = arith.constant 0 : index
    %c0_488 = arith.constant 0 : index
    %748 = vector.load %arg17[%c1_486, %c0_487, %c0_488] : memref<2x8x32xf32, #tpu.memory_space<vmem>>, vector<1x8x32xf32>
    %749 = vector.shape_cast %748 : vector<1x8x32xf32> to vector<8x32xf32>
    %c0_489 = arith.constant 0 : index
    %c0_490 = arith.constant 0 : index
    %750 = vector.load %arg11[%c0_489, %c0_490] : memref<32x128xf32, #tpu.memory_space<vmem>>, vector<32x128xf32>
    %cst_491 = arith.constant dense<0.000000e+00> : vector<8x128xf32>
    %751 = tpu.matmul %749, %750, %cst_491 {dimension_numbers = #tpu.dot_dimension_numbers<[1], [0], [0], [1], [0, 0, 1, 1], [], []>} : vector<8x32xf32>, vector<32x128xf32>, vector<8x128xf32> -> vector<8x128xf32>
    %752 = arith.addf %747, %751 : vector<8x128xf32>
    %c0_492 = arith.constant 0 : index
    %c0_493 = arith.constant 0 : index
    %753 = vector.load %arg12[%c0_492, %c0_493] : memref<1x128xf32, #tpu.memory_space<vmem>>, vector<1x128xf32>
    %754 = vector.broadcast %753 : vector<1x128xf32> to vector<8x128xf32>
    %755 = arith.addf %752, %754 : vector<8x128xf32>
    %c1_494 = arith.constant 1 : index
    %c0_495 = arith.constant 0 : index
    %c0_496 = arith.constant 0 : index
    %756 = vector.load %arg18[%c1_494, %c0_495, %c0_496] : memref<2x8x32xf32, #tpu.memory_space<vmem>>, vector<1x8x32xf32>
    %757 = vector.shape_cast %756 : vector<1x8x32xf32> to vector<8x32xf32>
    %758 = arith.negf %755 : vector<8x128xf32>
    %759 = math.exp %758 : vector<8x128xf32>
    %cst_497 = arith.constant 1.000000e+00 : f32
    %760 = vector.broadcast %cst_497 : f32 to vector<8x128xf32>
    %761 = arith.addf %760, %759 : vector<8x128xf32>
    %762 = arith.divf %760, %761 : vector<8x128xf32>
    %763 = math.tanh %755 : vector<8x128xf32>
    %764 = vector.extract_strided_slice %762 {offsets = [0, 0], sizes = [8, 32], strides = [1, 1]} : vector<8x128xf32> to vector<8x32xf32>
    %765 = vector.extract_strided_slice %762 {offsets = [0, 32], sizes = [8, 32], strides = [1, 1]} : vector<8x128xf32> to vector<8x32xf32>
    %766 = vector.extract_strided_slice %763 {offsets = [0, 64], sizes = [8, 32], strides = [1, 1]} : vector<8x128xf32> to vector<8x32xf32>
    %767 = vector.extract_strided_slice %762 {offsets = [0, 96], sizes = [8, 32], strides = [1, 1]} : vector<8x128xf32> to vector<8x32xf32>
    %768 = arith.mulf %765, %757 : vector<8x32xf32>
    %769 = arith.mulf %764, %766 : vector<8x32xf32>
    %770 = arith.addf %768, %769 : vector<8x32xf32>
    %771 = math.tanh %770 : vector<8x32xf32>
    %772 = arith.mulf %767, %771 : vector<8x32xf32>
    %c1_498 = arith.constant 1 : index
    %c0_499 = arith.constant 0 : index
    %c0_500 = arith.constant 0 : index
    %773 = vector.load %arg17[%c1_498, %c0_499, %c0_500] : memref<2x8x32xf32, #tpu.memory_space<vmem>>, vector<1x8x32xf32>
    %774 = vector.shape_cast %773 : vector<1x8x32xf32> to vector<8x32xf32>
    %775 = vector.shape_cast %772 : vector<8x32xf32> to vector<1x8x32xf32>
    tpu.vector_store %arg17[%c1_498, %c0_499, %c0_500], %775 {strides = array<i32>} : memref<2x8x32xf32, #tpu.memory_space<vmem>>, vector<1x8x32xf32>,
    %c1_501 = arith.constant 1 : index
    %c0_502 = arith.constant 0 : index
    %c0_503 = arith.constant 0 : index
    %776 = vector.load %arg18[%c1_501, %c0_502, %c0_503] : memref<2x8x32xf32, #tpu.memory_space<vmem>>, vector<1x8x32xf32>
    %777 = vector.shape_cast %776 : vector<1x8x32xf32> to vector<8x32xf32>
    %778 = vector.shape_cast %770 : vector<8x32xf32> to vector<1x8x32xf32>
    tpu.vector_store %arg18[%c1_501, %c0_502, %c0_503], %778 {strides = array<i32>} : memref<2x8x32xf32, #tpu.memory_space<vmem>>, vector<1x8x32xf32>,
    %c0_504 = arith.constant 0 : index
    %c0_505 = arith.constant 0 : index
    %779 = vector.load %arg14[%c0_504, %c0_505] : memref<32x128xf32, #tpu.memory_space<vmem>>, vector<32x128xf32>
    %cst_506 = arith.constant dense<0.000000e+00> : vector<8x128xf32>
    %780 = tpu.matmul %772, %779, %cst_506 {dimension_numbers = #tpu.dot_dimension_numbers<[1], [0], [0], [1], [0, 0, 1, 1], [], []>} : vector<8x32xf32>, vector<32x128xf32>, vector<8x128xf32> -> vector<8x128xf32>
    %c0_507 = arith.constant 0 : index
    %c0_508 = arith.constant 0 : index
    %781 = vector.load %arg15[%c0_507, %c0_508] : memref<1x128xf32, #tpu.memory_space<vmem>>, vector<1x128xf32>
    %782 = vector.broadcast %781 : vector<1x128xf32> to vector<8x128xf32>
    %783 = arith.addf %780, %782 : vector<8x128xf32>
    %c4_509 = arith.constant 4 : index
    %c0_510 = arith.constant 0 : index
    %c0_511 = arith.constant 0 : index
    %784 = vector.load %arg16[%c4_509, %c0_510, %c0_511] : memref<8x8x128xf32, #tpu.memory_space<vmem>>, vector<1x8x128xf32>
    %785 = vector.shape_cast %784 : vector<1x8x128xf32> to vector<8x128xf32>
    %786 = vector.shape_cast %783 : vector<8x128xf32> to vector<1x8x128xf32>
    tpu.vector_store %arg16[%c4_509, %c0_510, %c0_511], %786 {strides = array<i32>} : memref<8x8x128xf32, #tpu.memory_space<vmem>>, vector<1x8x128xf32>,
    %c3_512 = arith.constant 3 : index
    %787 = memref.load %arg2[%c3_512] : memref<7xi32, #tpu.memory_space<smem>>
    %c1_i32_513 = arith.constant 1 : i32
    %788 = arith.cmpi eq, %787, %c1_i32_513 : i32
    %789 = arith.extui %788 : i1 to i32
    %c0_i32_514 = arith.constant 0 : i32
    %790 = arith.cmpi ne, %789, %c0_i32_514 : i32
    scf.if %790 {
      %c4_673 = arith.constant 4 : index
      %c0_674 = arith.constant 0 : index
      %c0_675 = arith.constant 0 : index
      %1027 = vector.load %arg1[%c4_673, %c0_674, %c0_675] : memref<8x8x128xf32, #tpu.memory_space<vmem>>, vector<1x8x128xf32>
      %1028 = vector.shape_cast %1027 : vector<1x8x128xf32> to vector<8x128xf32>
      %c0_676 = arith.constant 0 : index
      %c0_677 = arith.constant 0 : index
      %1029 = vector.load %arg19[%c0_676, %c0_677] : memref<8x128xf32, #tpu.memory_space<vmem>>, vector<8x128xf32>
      tpu.vector_store %arg19[%c0_676, %c0_677], %1028 {strides = array<i32>} : memref<8x128xf32, #tpu.memory_space<vmem>>, vector<8x128xf32>,
    } else {
    }
    %c0_i32_515 = arith.constant 0 : i32
    %791 = arith.cmpi eq, %787, %c0_i32_515 : i32
    %792 = arith.extui %791 : i1 to i32
    %c0_i32_516 = arith.constant 0 : i32
    %793 = arith.cmpi ne, %792, %c0_i32_516 : i32
    scf.if %793 {
      %c24_i32 = arith.constant 24 : i32
      %1027 = vector.broadcast %c24_i32 : i32 to vector<8x128xi32>
      %1028 = arith.cmpi slt, %473, %1027 : vector<8x128xi32>
      %cst_673 = arith.constant -1.000000e+30 : f32
      %1029 = vector.broadcast %cst_673 : f32 to vector<8x128xf32>
      %1030 = arith.select %1028, %783, %1029 : vector<8x128xi1>, vector<8x128xf32>
      %cst_674 = arith.constant dense<0xFF800000> : vector<8xf32>
      %1031 = vector.multi_reduction <maximumf>, %1030, %cst_674 [1] : vector<8x128xf32> to vector<8xf32>
      %1032 = vector.shape_cast %1031 : vector<8xf32> to vector<8x1xf32>
      %1033 = vector.broadcast %1032 : vector<8x1xf32> to vector<8x128xf32>
      %1034 = arith.cmpf oeq, %1030, %1033 : vector<8x128xf32>
      %c128_i32 = arith.constant 128 : i32
      %1035 = vector.broadcast %c128_i32 : i32 to vector<8x128xi32>
      %1036 = arith.select %1034, %473, %1035 : vector<8x128xi1>, vector<8x128xi32>
      %cst_675 = arith.constant dense<2147483647> : vector<8xi32>
      %1037 = vector.multi_reduction <minsi>, %1036, %cst_675 [1] : vector<8x128xi32> to vector<8xi32>
      %1038 = vector.shape_cast %1037 : vector<8xi32> to vector<8x1xi32>
      %1039 = vector.broadcast %1038 : vector<8x1xi32> to vector<8x128xi32>
      %1040 = arith.cmpi eq, %473, %1039 : vector<8x128xi32>
      %1041 = arith.extui %1040 : vector<8x128xi1> to vector<8x128xi32>
      %1042 = arith.sitofp %1041 : vector<8x128xi32> to vector<8x128xf32>
      %c0_676 = arith.constant 0 : index
      %c0_677 = arith.constant 0 : index
      %1043 = vector.load %arg13[%c0_676, %c0_677] : memref<128x128xf32, #tpu.memory_space<vmem>>, vector<128x128xf32>
      %cst_678 = arith.constant dense<0.000000e+00> : vector<8x128xf32>
      %1044 = tpu.matmul %1042, %1043, %cst_678 {dimension_numbers = #tpu.dot_dimension_numbers<[1], [0], [0], [1], [0, 0, 1, 1], [], []>} : vector<8x128xf32>, vector<128x128xf32>, vector<8x128xf32> -> vector<8x128xf32>
      %c0_679 = arith.constant 0 : index
      %c0_680 = arith.constant 0 : index
      %1045 = vector.load %arg19[%c0_679, %c0_680] : memref<8x128xf32, #tpu.memory_space<vmem>>, vector<8x128xf32>
      tpu.vector_store %arg19[%c0_679, %c0_680], %1044 {strides = array<i32>} : memref<8x128xf32, #tpu.memory_space<vmem>>, vector<8x128xf32>,
    } else {
    }
    %c0_517 = arith.constant 0 : index
    %c0_518 = arith.constant 0 : index
    %794 = vector.load %arg19[%c0_517, %c0_518] : memref<8x128xf32, #tpu.memory_space<vmem>>, vector<8x128xf32>
    %c0_519 = arith.constant 0 : index
    %c0_520 = arith.constant 0 : index
    %c0_521 = arith.constant 0 : index
    %795 = vector.load %arg17[%c0_519, %c0_520, %c0_521] : memref<2x8x32xf32, #tpu.memory_space<vmem>>, vector<1x8x32xf32>
    %796 = vector.shape_cast %795 : vector<1x8x32xf32> to vector<8x32xf32>
    %c0_522 = arith.constant 0 : index
    %c0_523 = arith.constant 0 : index
    %797 = vector.load %arg8[%c0_522, %c0_523] : memref<32x128xf32, #tpu.memory_space<vmem>>, vector<32x128xf32>
    %cst_524 = arith.constant dense<0.000000e+00> : vector<8x128xf32>
    %798 = tpu.matmul %796, %797, %cst_524 {dimension_numbers = #tpu.dot_dimension_numbers<[1], [0], [0], [1], [0, 0, 1, 1], [], []>} : vector<8x32xf32>, vector<32x128xf32>, vector<8x128xf32> -> vector<8x128xf32>
    %799 = arith.addf %794, %798 : vector<8x128xf32>
    %c0_525 = arith.constant 0 : index
    %c0_526 = arith.constant 0 : index
    %800 = vector.load %arg9[%c0_525, %c0_526] : memref<1x128xf32, #tpu.memory_space<vmem>>, vector<1x128xf32>
    %801 = vector.broadcast %800 : vector<1x128xf32> to vector<8x128xf32>
    %802 = arith.addf %799, %801 : vector<8x128xf32>
    %c0_527 = arith.constant 0 : index
    %c0_528 = arith.constant 0 : index
    %c0_529 = arith.constant 0 : index
    %803 = vector.load %arg18[%c0_527, %c0_528, %c0_529] : memref<2x8x32xf32, #tpu.memory_space<vmem>>, vector<1x8x32xf32>
    %804 = vector.shape_cast %803 : vector<1x8x32xf32> to vector<8x32xf32>
    %805 = arith.negf %802 : vector<8x128xf32>
    %806 = math.exp %805 : vector<8x128xf32>
    %cst_530 = arith.constant 1.000000e+00 : f32
    %807 = vector.broadcast %cst_530 : f32 to vector<8x128xf32>
    %808 = arith.addf %807, %806 : vector<8x128xf32>
    %809 = arith.divf %807, %808 : vector<8x128xf32>
    %810 = math.tanh %802 : vector<8x128xf32>
    %811 = vector.extract_strided_slice %809 {offsets = [0, 0], sizes = [8, 32], strides = [1, 1]} : vector<8x128xf32> to vector<8x32xf32>
    %812 = vector.extract_strided_slice %809 {offsets = [0, 32], sizes = [8, 32], strides = [1, 1]} : vector<8x128xf32> to vector<8x32xf32>
    %813 = vector.extract_strided_slice %810 {offsets = [0, 64], sizes = [8, 32], strides = [1, 1]} : vector<8x128xf32> to vector<8x32xf32>
    %814 = vector.extract_strided_slice %809 {offsets = [0, 96], sizes = [8, 32], strides = [1, 1]} : vector<8x128xf32> to vector<8x32xf32>
    %815 = arith.mulf %812, %804 : vector<8x32xf32>
    %816 = arith.mulf %811, %813 : vector<8x32xf32>
    %817 = arith.addf %815, %816 : vector<8x32xf32>
    %818 = math.tanh %817 : vector<8x32xf32>
    %819 = arith.mulf %814, %818 : vector<8x32xf32>
    %c0_531 = arith.constant 0 : index
    %c0_532 = arith.constant 0 : index
    %c0_533 = arith.constant 0 : index
    %820 = vector.load %arg17[%c0_531, %c0_532, %c0_533] : memref<2x8x32xf32, #tpu.memory_space<vmem>>, vector<1x8x32xf32>
    %821 = vector.shape_cast %820 : vector<1x8x32xf32> to vector<8x32xf32>
    %822 = vector.shape_cast %819 : vector<8x32xf32> to vector<1x8x32xf32>
    tpu.vector_store %arg17[%c0_531, %c0_532, %c0_533], %822 {strides = array<i32>} : memref<2x8x32xf32, #tpu.memory_space<vmem>>, vector<1x8x32xf32>,
    %c0_534 = arith.constant 0 : index
    %c0_535 = arith.constant 0 : index
    %c0_536 = arith.constant 0 : index
    %823 = vector.load %arg18[%c0_534, %c0_535, %c0_536] : memref<2x8x32xf32, #tpu.memory_space<vmem>>, vector<1x8x32xf32>
    %824 = vector.shape_cast %823 : vector<1x8x32xf32> to vector<8x32xf32>
    %825 = vector.shape_cast %817 : vector<8x32xf32> to vector<1x8x32xf32>
    tpu.vector_store %arg18[%c0_534, %c0_535, %c0_536], %825 {strides = array<i32>} : memref<2x8x32xf32, #tpu.memory_space<vmem>>, vector<1x8x32xf32>,
    %c0_537 = arith.constant 0 : index
    %c0_538 = arith.constant 0 : index
    %826 = vector.load %arg10[%c0_537, %c0_538] : memref<32x128xf32, #tpu.memory_space<vmem>>, vector<32x128xf32>
    %cst_539 = arith.constant dense<0.000000e+00> : vector<8x128xf32>
    %827 = tpu.matmul %819, %826, %cst_539 {dimension_numbers = #tpu.dot_dimension_numbers<[1], [0], [0], [1], [0, 0, 1, 1], [], []>} : vector<8x32xf32>, vector<32x128xf32>, vector<8x128xf32> -> vector<8x128xf32>
    %c1_540 = arith.constant 1 : index
    %c0_541 = arith.constant 0 : index
    %c0_542 = arith.constant 0 : index
    %828 = vector.load %arg17[%c1_540, %c0_541, %c0_542] : memref<2x8x32xf32, #tpu.memory_space<vmem>>, vector<1x8x32xf32>
    %829 = vector.shape_cast %828 : vector<1x8x32xf32> to vector<8x32xf32>
    %c0_543 = arith.constant 0 : index
    %c0_544 = arith.constant 0 : index
    %830 = vector.load %arg11[%c0_543, %c0_544] : memref<32x128xf32, #tpu.memory_space<vmem>>, vector<32x128xf32>
    %cst_545 = arith.constant dense<0.000000e+00> : vector<8x128xf32>
    %831 = tpu.matmul %829, %830, %cst_545 {dimension_numbers = #tpu.dot_dimension_numbers<[1], [0], [0], [1], [0, 0, 1, 1], [], []>} : vector<8x32xf32>, vector<32x128xf32>, vector<8x128xf32> -> vector<8x128xf32>
    %832 = arith.addf %827, %831 : vector<8x128xf32>
    %c0_546 = arith.constant 0 : index
    %c0_547 = arith.constant 0 : index
    %833 = vector.load %arg12[%c0_546, %c0_547] : memref<1x128xf32, #tpu.memory_space<vmem>>, vector<1x128xf32>
    %834 = vector.broadcast %833 : vector<1x128xf32> to vector<8x128xf32>
    %835 = arith.addf %832, %834 : vector<8x128xf32>
    %c1_548 = arith.constant 1 : index
    %c0_549 = arith.constant 0 : index
    %c0_550 = arith.constant 0 : index
    %836 = vector.load %arg18[%c1_548, %c0_549, %c0_550] : memref<2x8x32xf32, #tpu.memory_space<vmem>>, vector<1x8x32xf32>
    %837 = vector.shape_cast %836 : vector<1x8x32xf32> to vector<8x32xf32>
    %838 = arith.negf %835 : vector<8x128xf32>
    %839 = math.exp %838 : vector<8x128xf32>
    %cst_551 = arith.constant 1.000000e+00 : f32
    %840 = vector.broadcast %cst_551 : f32 to vector<8x128xf32>
    %841 = arith.addf %840, %839 : vector<8x128xf32>
    %842 = arith.divf %840, %841 : vector<8x128xf32>
    %843 = math.tanh %835 : vector<8x128xf32>
    %844 = vector.extract_strided_slice %842 {offsets = [0, 0], sizes = [8, 32], strides = [1, 1]} : vector<8x128xf32> to vector<8x32xf32>
    %845 = vector.extract_strided_slice %842 {offsets = [0, 32], sizes = [8, 32], strides = [1, 1]} : vector<8x128xf32> to vector<8x32xf32>
    %846 = vector.extract_strided_slice %843 {offsets = [0, 64], sizes = [8, 32], strides = [1, 1]} : vector<8x128xf32> to vector<8x32xf32>
    %847 = vector.extract_strided_slice %842 {offsets = [0, 96], sizes = [8, 32], strides = [1, 1]} : vector<8x128xf32> to vector<8x32xf32>
    %848 = arith.mulf %845, %837 : vector<8x32xf32>
    %849 = arith.mulf %844, %846 : vector<8x32xf32>
    %850 = arith.addf %848, %849 : vector<8x32xf32>
    %851 = math.tanh %850 : vector<8x32xf32>
    %852 = arith.mulf %847, %851 : vector<8x32xf32>
    %c1_552 = arith.constant 1 : index
    %c0_553 = arith.constant 0 : index
    %c0_554 = arith.constant 0 : index
    %853 = vector.load %arg17[%c1_552, %c0_553, %c0_554] : memref<2x8x32xf32, #tpu.memory_space<vmem>>, vector<1x8x32xf32>
    %854 = vector.shape_cast %853 : vector<1x8x32xf32> to vector<8x32xf32>
    %855 = vector.shape_cast %852 : vector<8x32xf32> to vector<1x8x32xf32>
    tpu.vector_store %arg17[%c1_552, %c0_553, %c0_554], %855 {strides = array<i32>} : memref<2x8x32xf32, #tpu.memory_space<vmem>>, vector<1x8x32xf32>,
    %c1_555 = arith.constant 1 : index
    %c0_556 = arith.constant 0 : index
    %c0_557 = arith.constant 0 : index
    %856 = vector.load %arg18[%c1_555, %c0_556, %c0_557] : memref<2x8x32xf32, #tpu.memory_space<vmem>>, vector<1x8x32xf32>
    %857 = vector.shape_cast %856 : vector<1x8x32xf32> to vector<8x32xf32>
    %858 = vector.shape_cast %850 : vector<8x32xf32> to vector<1x8x32xf32>
    tpu.vector_store %arg18[%c1_555, %c0_556, %c0_557], %858 {strides = array<i32>} : memref<2x8x32xf32, #tpu.memory_space<vmem>>, vector<1x8x32xf32>,
    %c0_558 = arith.constant 0 : index
    %c0_559 = arith.constant 0 : index
    %859 = vector.load %arg14[%c0_558, %c0_559] : memref<32x128xf32, #tpu.memory_space<vmem>>, vector<32x128xf32>
    %cst_560 = arith.constant dense<0.000000e+00> : vector<8x128xf32>
    %860 = tpu.matmul %852, %859, %cst_560 {dimension_numbers = #tpu.dot_dimension_numbers<[1], [0], [0], [1], [0, 0, 1, 1], [], []>} : vector<8x32xf32>, vector<32x128xf32>, vector<8x128xf32> -> vector<8x128xf32>
    %c0_561 = arith.constant 0 : index
    %c0_562 = arith.constant 0 : index
    %861 = vector.load %arg15[%c0_561, %c0_562] : memref<1x128xf32, #tpu.memory_space<vmem>>, vector<1x128xf32>
    %862 = vector.broadcast %861 : vector<1x128xf32> to vector<8x128xf32>
    %863 = arith.addf %860, %862 : vector<8x128xf32>
    %c5_563 = arith.constant 5 : index
    %c0_564 = arith.constant 0 : index
    %c0_565 = arith.constant 0 : index
    %864 = vector.load %arg16[%c5_563, %c0_564, %c0_565] : memref<8x8x128xf32, #tpu.memory_space<vmem>>, vector<1x8x128xf32>
    %865 = vector.shape_cast %864 : vector<1x8x128xf32> to vector<8x128xf32>
    %866 = vector.shape_cast %863 : vector<8x128xf32> to vector<1x8x128xf32>
    tpu.vector_store %arg16[%c5_563, %c0_564, %c0_565], %866 {strides = array<i32>} : memref<8x8x128xf32, #tpu.memory_space<vmem>>, vector<1x8x128xf32>,
    %c4_566 = arith.constant 4 : index
    %867 = memref.load %arg2[%c4_566] : memref<7xi32, #tpu.memory_space<smem>>
    %c1_i32_567 = arith.constant 1 : i32
    %868 = arith.cmpi eq, %867, %c1_i32_567 : i32
    %869 = arith.extui %868 : i1 to i32
    %c0_i32_568 = arith.constant 0 : i32
    %870 = arith.cmpi ne, %869, %c0_i32_568 : i32
    scf.if %870 {
      %c5_673 = arith.constant 5 : index
      %c0_674 = arith.constant 0 : index
      %c0_675 = arith.constant 0 : index
      %1027 = vector.load %arg1[%c5_673, %c0_674, %c0_675] : memref<8x8x128xf32, #tpu.memory_space<vmem>>, vector<1x8x128xf32>
      %1028 = vector.shape_cast %1027 : vector<1x8x128xf32> to vector<8x128xf32>
      %c0_676 = arith.constant 0 : index
      %c0_677 = arith.constant 0 : index
      %1029 = vector.load %arg19[%c0_676, %c0_677] : memref<8x128xf32, #tpu.memory_space<vmem>>, vector<8x128xf32>
      tpu.vector_store %arg19[%c0_676, %c0_677], %1028 {strides = array<i32>} : memref<8x128xf32, #tpu.memory_space<vmem>>, vector<8x128xf32>,
    } else {
    }
    %c0_i32_569 = arith.constant 0 : i32
    %871 = arith.cmpi eq, %867, %c0_i32_569 : i32
    %872 = arith.extui %871 : i1 to i32
    %c0_i32_570 = arith.constant 0 : i32
    %873 = arith.cmpi ne, %872, %c0_i32_570 : i32
    scf.if %873 {
      %c24_i32 = arith.constant 24 : i32
      %1027 = vector.broadcast %c24_i32 : i32 to vector<8x128xi32>
      %1028 = arith.cmpi slt, %473, %1027 : vector<8x128xi32>
      %cst_673 = arith.constant -1.000000e+30 : f32
      %1029 = vector.broadcast %cst_673 : f32 to vector<8x128xf32>
      %1030 = arith.select %1028, %863, %1029 : vector<8x128xi1>, vector<8x128xf32>
      %cst_674 = arith.constant dense<0xFF800000> : vector<8xf32>
      %1031 = vector.multi_reduction <maximumf>, %1030, %cst_674 [1] : vector<8x128xf32> to vector<8xf32>
      %1032 = vector.shape_cast %1031 : vector<8xf32> to vector<8x1xf32>
      %1033 = vector.broadcast %1032 : vector<8x1xf32> to vector<8x128xf32>
      %1034 = arith.cmpf oeq, %1030, %1033 : vector<8x128xf32>
      %c128_i32 = arith.constant 128 : i32
      %1035 = vector.broadcast %c128_i32 : i32 to vector<8x128xi32>
      %1036 = arith.select %1034, %473, %1035 : vector<8x128xi1>, vector<8x128xi32>
      %cst_675 = arith.constant dense<2147483647> : vector<8xi32>
      %1037 = vector.multi_reduction <minsi>, %1036, %cst_675 [1] : vector<8x128xi32> to vector<8xi32>
      %1038 = vector.shape_cast %1037 : vector<8xi32> to vector<8x1xi32>
      %1039 = vector.broadcast %1038 : vector<8x1xi32> to vector<8x128xi32>
      %1040 = arith.cmpi eq, %473, %1039 : vector<8x128xi32>
      %1041 = arith.extui %1040 : vector<8x128xi1> to vector<8x128xi32>
      %1042 = arith.sitofp %1041 : vector<8x128xi32> to vector<8x128xf32>
      %c0_676 = arith.constant 0 : index
      %c0_677 = arith.constant 0 : index
      %1043 = vector.load %arg13[%c0_676, %c0_677] : memref<128x128xf32, #tpu.memory_space<vmem>>, vector<128x128xf32>
      %cst_678 = arith.constant dense<0.000000e+00> : vector<8x128xf32>
      %1044 = tpu.matmul %1042, %1043, %cst_678 {dimension_numbers = #tpu.dot_dimension_numbers<[1], [0], [0], [1], [0, 0, 1, 1], [], []>} : vector<8x128xf32>, vector<128x128xf32>, vector<8x128xf32> -> vector<8x128xf32>
      %c0_679 = arith.constant 0 : index
      %c0_680 = arith.constant 0 : index
      %1045 = vector.load %arg19[%c0_679, %c0_680] : memref<8x128xf32, #tpu.memory_space<vmem>>, vector<8x128xf32>
      tpu.vector_store %arg19[%c0_679, %c0_680], %1044 {strides = array<i32>} : memref<8x128xf32, #tpu.memory_space<vmem>>, vector<8x128xf32>,
    } else {
    }
    %c0_571 = arith.constant 0 : index
    %c0_572 = arith.constant 0 : index
    %874 = vector.load %arg19[%c0_571, %c0_572] : memref<8x128xf32, #tpu.memory_space<vmem>>, vector<8x128xf32>
    %c0_573 = arith.constant 0 : index
    %c0_574 = arith.constant 0 : index
    %c0_575 = arith.constant 0 : index
    %875 = vector.load %arg17[%c0_573, %c0_574, %c0_575] : memref<2x8x32xf32, #tpu.memory_space<vmem>>, vector<1x8x32xf32>
    %876 = vector.shape_cast %875 : vector<1x8x32xf32> to vector<8x32xf32>
    %c0_576 = arith.constant 0 : index
    %c0_577 = arith.constant 0 : index
    %877 = vector.load %arg8[%c0_576, %c0_577] : memref<32x128xf32, #tpu.memory_space<vmem>>, vector<32x128xf32>
    %cst_578 = arith.constant dense<0.000000e+00> : vector<8x128xf32>
    %878 = tpu.matmul %876, %877, %cst_578 {dimension_numbers = #tpu.dot_dimension_numbers<[1], [0], [0], [1], [0, 0, 1, 1], [], []>} : vector<8x32xf32>, vector<32x128xf32>, vector<8x128xf32> -> vector<8x128xf32>
    %879 = arith.addf %874, %878 : vector<8x128xf32>
    %c0_579 = arith.constant 0 : index
    %c0_580 = arith.constant 0 : index
    %880 = vector.load %arg9[%c0_579, %c0_580] : memref<1x128xf32, #tpu.memory_space<vmem>>, vector<1x128xf32>
    %881 = vector.broadcast %880 : vector<1x128xf32> to vector<8x128xf32>
    %882 = arith.addf %879, %881 : vector<8x128xf32>
    %c0_581 = arith.constant 0 : index
    %c0_582 = arith.constant 0 : index
    %c0_583 = arith.constant 0 : index
    %883 = vector.load %arg18[%c0_581, %c0_582, %c0_583] : memref<2x8x32xf32, #tpu.memory_space<vmem>>, vector<1x8x32xf32>
    %884 = vector.shape_cast %883 : vector<1x8x32xf32> to vector<8x32xf32>
    %885 = arith.negf %882 : vector<8x128xf32>
    %886 = math.exp %885 : vector<8x128xf32>
    %cst_584 = arith.constant 1.000000e+00 : f32
    %887 = vector.broadcast %cst_584 : f32 to vector<8x128xf32>
    %888 = arith.addf %887, %886 : vector<8x128xf32>
    %889 = arith.divf %887, %888 : vector<8x128xf32>
    %890 = math.tanh %882 : vector<8x128xf32>
    %891 = vector.extract_strided_slice %889 {offsets = [0, 0], sizes = [8, 32], strides = [1, 1]} : vector<8x128xf32> to vector<8x32xf32>
    %892 = vector.extract_strided_slice %889 {offsets = [0, 32], sizes = [8, 32], strides = [1, 1]} : vector<8x128xf32> to vector<8x32xf32>
    %893 = vector.extract_strided_slice %890 {offsets = [0, 64], sizes = [8, 32], strides = [1, 1]} : vector<8x128xf32> to vector<8x32xf32>
    %894 = vector.extract_strided_slice %889 {offsets = [0, 96], sizes = [8, 32], strides = [1, 1]} : vector<8x128xf32> to vector<8x32xf32>
    %895 = arith.mulf %892, %884 : vector<8x32xf32>
    %896 = arith.mulf %891, %893 : vector<8x32xf32>
    %897 = arith.addf %895, %896 : vector<8x32xf32>
    %898 = math.tanh %897 : vector<8x32xf32>
    %899 = arith.mulf %894, %898 : vector<8x32xf32>
    %c0_585 = arith.constant 0 : index
    %c0_586 = arith.constant 0 : index
    %c0_587 = arith.constant 0 : index
    %900 = vector.load %arg17[%c0_585, %c0_586, %c0_587] : memref<2x8x32xf32, #tpu.memory_space<vmem>>, vector<1x8x32xf32>
    %901 = vector.shape_cast %900 : vector<1x8x32xf32> to vector<8x32xf32>
    %902 = vector.shape_cast %899 : vector<8x32xf32> to vector<1x8x32xf32>
    tpu.vector_store %arg17[%c0_585, %c0_586, %c0_587], %902 {strides = array<i32>} : memref<2x8x32xf32, #tpu.memory_space<vmem>>, vector<1x8x32xf32>,
    %c0_588 = arith.constant 0 : index
    %c0_589 = arith.constant 0 : index
    %c0_590 = arith.constant 0 : index
    %903 = vector.load %arg18[%c0_588, %c0_589, %c0_590] : memref<2x8x32xf32, #tpu.memory_space<vmem>>, vector<1x8x32xf32>
    %904 = vector.shape_cast %903 : vector<1x8x32xf32> to vector<8x32xf32>
    %905 = vector.shape_cast %897 : vector<8x32xf32> to vector<1x8x32xf32>
    tpu.vector_store %arg18[%c0_588, %c0_589, %c0_590], %905 {strides = array<i32>} : memref<2x8x32xf32, #tpu.memory_space<vmem>>, vector<1x8x32xf32>,
    %c0_591 = arith.constant 0 : index
    %c0_592 = arith.constant 0 : index
    %906 = vector.load %arg10[%c0_591, %c0_592] : memref<32x128xf32, #tpu.memory_space<vmem>>, vector<32x128xf32>
    %cst_593 = arith.constant dense<0.000000e+00> : vector<8x128xf32>
    %907 = tpu.matmul %899, %906, %cst_593 {dimension_numbers = #tpu.dot_dimension_numbers<[1], [0], [0], [1], [0, 0, 1, 1], [], []>} : vector<8x32xf32>, vector<32x128xf32>, vector<8x128xf32> -> vector<8x128xf32>
    %c1_594 = arith.constant 1 : index
    %c0_595 = arith.constant 0 : index
    %c0_596 = arith.constant 0 : index
    %908 = vector.load %arg17[%c1_594, %c0_595, %c0_596] : memref<2x8x32xf32, #tpu.memory_space<vmem>>, vector<1x8x32xf32>
    %909 = vector.shape_cast %908 : vector<1x8x32xf32> to vector<8x32xf32>
    %c0_597 = arith.constant 0 : index
    %c0_598 = arith.constant 0 : index
    %910 = vector.load %arg11[%c0_597, %c0_598] : memref<32x128xf32, #tpu.memory_space<vmem>>, vector<32x128xf32>
    %cst_599 = arith.constant dense<0.000000e+00> : vector<8x128xf32>
    %911 = tpu.matmul %909, %910, %cst_599 {dimension_numbers = #tpu.dot_dimension_numbers<[1], [0], [0], [1], [0, 0, 1, 1], [], []>} : vector<8x32xf32>, vector<32x128xf32>, vector<8x128xf32> -> vector<8x128xf32>
    %912 = arith.addf %907, %911 : vector<8x128xf32>
    %c0_600 = arith.constant 0 : index
    %c0_601 = arith.constant 0 : index
    %913 = vector.load %arg12[%c0_600, %c0_601] : memref<1x128xf32, #tpu.memory_space<vmem>>, vector<1x128xf32>
    %914 = vector.broadcast %913 : vector<1x128xf32> to vector<8x128xf32>
    %915 = arith.addf %912, %914 : vector<8x128xf32>
    %c1_602 = arith.constant 1 : index
    %c0_603 = arith.constant 0 : index
    %c0_604 = arith.constant 0 : index
    %916 = vector.load %arg18[%c1_602, %c0_603, %c0_604] : memref<2x8x32xf32, #tpu.memory_space<vmem>>, vector<1x8x32xf32>
    %917 = vector.shape_cast %916 : vector<1x8x32xf32> to vector<8x32xf32>
    %918 = arith.negf %915 : vector<8x128xf32>
    %919 = math.exp %918 : vector<8x128xf32>
    %cst_605 = arith.constant 1.000000e+00 : f32
    %920 = vector.broadcast %cst_605 : f32 to vector<8x128xf32>
    %921 = arith.addf %920, %919 : vector<8x128xf32>
    %922 = arith.divf %920, %921 : vector<8x128xf32>
    %923 = math.tanh %915 : vector<8x128xf32>
    %924 = vector.extract_strided_slice %922 {offsets = [0, 0], sizes = [8, 32], strides = [1, 1]} : vector<8x128xf32> to vector<8x32xf32>
    %925 = vector.extract_strided_slice %922 {offsets = [0, 32], sizes = [8, 32], strides = [1, 1]} : vector<8x128xf32> to vector<8x32xf32>
    %926 = vector.extract_strided_slice %923 {offsets = [0, 64], sizes = [8, 32], strides = [1, 1]} : vector<8x128xf32> to vector<8x32xf32>
    %927 = vector.extract_strided_slice %922 {offsets = [0, 96], sizes = [8, 32], strides = [1, 1]} : vector<8x128xf32> to vector<8x32xf32>
    %928 = arith.mulf %925, %917 : vector<8x32xf32>
    %929 = arith.mulf %924, %926 : vector<8x32xf32>
    %930 = arith.addf %928, %929 : vector<8x32xf32>
    %931 = math.tanh %930 : vector<8x32xf32>
    %932 = arith.mulf %927, %931 : vector<8x32xf32>
    %c1_606 = arith.constant 1 : index
    %c0_607 = arith.constant 0 : index
    %c0_608 = arith.constant 0 : index
    %933 = vector.load %arg17[%c1_606, %c0_607, %c0_608] : memref<2x8x32xf32, #tpu.memory_space<vmem>>, vector<1x8x32xf32>
    %934 = vector.shape_cast %933 : vector<1x8x32xf32> to vector<8x32xf32>
    %935 = vector.shape_cast %932 : vector<8x32xf32> to vector<1x8x32xf32>
    tpu.vector_store %arg17[%c1_606, %c0_607, %c0_608], %935 {strides = array<i32>} : memref<2x8x32xf32, #tpu.memory_space<vmem>>, vector<1x8x32xf32>,
    %c1_609 = arith.constant 1 : index
    %c0_610 = arith.constant 0 : index
    %c0_611 = arith.constant 0 : index
    %936 = vector.load %arg18[%c1_609, %c0_610, %c0_611] : memref<2x8x32xf32, #tpu.memory_space<vmem>>, vector<1x8x32xf32>
    %937 = vector.shape_cast %936 : vector<1x8x32xf32> to vector<8x32xf32>
    %938 = vector.shape_cast %930 : vector<8x32xf32> to vector<1x8x32xf32>
    tpu.vector_store %arg18[%c1_609, %c0_610, %c0_611], %938 {strides = array<i32>} : memref<2x8x32xf32, #tpu.memory_space<vmem>>, vector<1x8x32xf32>,
    %c0_612 = arith.constant 0 : index
    %c0_613 = arith.constant 0 : index
    %939 = vector.load %arg14[%c0_612, %c0_613] : memref<32x128xf32, #tpu.memory_space<vmem>>, vector<32x128xf32>
    %cst_614 = arith.constant dense<0.000000e+00> : vector<8x128xf32>
    %940 = tpu.matmul %932, %939, %cst_614 {dimension_numbers = #tpu.dot_dimension_numbers<[1], [0], [0], [1], [0, 0, 1, 1], [], []>} : vector<8x32xf32>, vector<32x128xf32>, vector<8x128xf32> -> vector<8x128xf32>
    %c0_615 = arith.constant 0 : index
    %c0_616 = arith.constant 0 : index
    %941 = vector.load %arg15[%c0_615, %c0_616] : memref<1x128xf32, #tpu.memory_space<vmem>>, vector<1x128xf32>
    %942 = vector.broadcast %941 : vector<1x128xf32> to vector<8x128xf32>
    %943 = arith.addf %940, %942 : vector<8x128xf32>
    %c6_617 = arith.constant 6 : index
    %c0_618 = arith.constant 0 : index
    %c0_619 = arith.constant 0 : index
    %944 = vector.load %arg16[%c6_617, %c0_618, %c0_619] : memref<8x8x128xf32, #tpu.memory_space<vmem>>, vector<1x8x128xf32>
    %945 = vector.shape_cast %944 : vector<1x8x128xf32> to vector<8x128xf32>
    %946 = vector.shape_cast %943 : vector<8x128xf32> to vector<1x8x128xf32>
    tpu.vector_store %arg16[%c6_617, %c0_618, %c0_619], %946 {strides = array<i32>} : memref<8x8x128xf32, #tpu.memory_space<vmem>>, vector<1x8x128xf32>,
    %c5_620 = arith.constant 5 : index
    %947 = memref.load %arg2[%c5_620] : memref<7xi32, #tpu.memory_space<smem>>
    %c1_i32_621 = arith.constant 1 : i32
    %948 = arith.cmpi eq, %947, %c1_i32_621 : i32
    %949 = arith.extui %948 : i1 to i32
    %c0_i32_622 = arith.constant 0 : i32
    %950 = arith.cmpi ne, %949, %c0_i32_622 : i32
    scf.if %950 {
      %c6_673 = arith.constant 6 : index
      %c0_674 = arith.constant 0 : index
      %c0_675 = arith.constant 0 : index
      %1027 = vector.load %arg1[%c6_673, %c0_674, %c0_675] : memref<8x8x128xf32, #tpu.memory_space<vmem>>, vector<1x8x128xf32>
      %1028 = vector.shape_cast %1027 : vector<1x8x128xf32> to vector<8x128xf32>
      %c0_676 = arith.constant 0 : index
      %c0_677 = arith.constant 0 : index
      %1029 = vector.load %arg19[%c0_676, %c0_677] : memref<8x128xf32, #tpu.memory_space<vmem>>, vector<8x128xf32>
      tpu.vector_store %arg19[%c0_676, %c0_677], %1028 {strides = array<i32>} : memref<8x128xf32, #tpu.memory_space<vmem>>, vector<8x128xf32>,
    } else {
    }
    %c0_i32_623 = arith.constant 0 : i32
    %951 = arith.cmpi eq, %947, %c0_i32_623 : i32
    %952 = arith.extui %951 : i1 to i32
    %c0_i32_624 = arith.constant 0 : i32
    %953 = arith.cmpi ne, %952, %c0_i32_624 : i32
    scf.if %953 {
      %c24_i32 = arith.constant 24 : i32
      %1027 = vector.broadcast %c24_i32 : i32 to vector<8x128xi32>
      %1028 = arith.cmpi slt, %473, %1027 : vector<8x128xi32>
      %cst_673 = arith.constant -1.000000e+30 : f32
      %1029 = vector.broadcast %cst_673 : f32 to vector<8x128xf32>
      %1030 = arith.select %1028, %943, %1029 : vector<8x128xi1>, vector<8x128xf32>
      %cst_674 = arith.constant dense<0xFF800000> : vector<8xf32>
      %1031 = vector.multi_reduction <maximumf>, %1030, %cst_674 [1] : vector<8x128xf32> to vector<8xf32>
      %1032 = vector.shape_cast %1031 : vector<8xf32> to vector<8x1xf32>
      %1033 = vector.broadcast %1032 : vector<8x1xf32> to vector<8x128xf32>
      %1034 = arith.cmpf oeq, %1030, %1033 : vector<8x128xf32>
      %c128_i32 = arith.constant 128 : i32
      %1035 = vector.broadcast %c128_i32 : i32 to vector<8x128xi32>
      %1036 = arith.select %1034, %473, %1035 : vector<8x128xi1>, vector<8x128xi32>
      %cst_675 = arith.constant dense<2147483647> : vector<8xi32>
      %1037 = vector.multi_reduction <minsi>, %1036, %cst_675 [1] : vector<8x128xi32> to vector<8xi32>
      %1038 = vector.shape_cast %1037 : vector<8xi32> to vector<8x1xi32>
      %1039 = vector.broadcast %1038 : vector<8x1xi32> to vector<8x128xi32>
      %1040 = arith.cmpi eq, %473, %1039 : vector<8x128xi32>
      %1041 = arith.extui %1040 : vector<8x128xi1> to vector<8x128xi32>
      %1042 = arith.sitofp %1041 : vector<8x128xi32> to vector<8x128xf32>
      %c0_676 = arith.constant 0 : index
      %c0_677 = arith.constant 0 : index
      %1043 = vector.load %arg13[%c0_676, %c0_677] : memref<128x128xf32, #tpu.memory_space<vmem>>, vector<128x128xf32>
      %cst_678 = arith.constant dense<0.000000e+00> : vector<8x128xf32>
      %1044 = tpu.matmul %1042, %1043, %cst_678 {dimension_numbers = #tpu.dot_dimension_numbers<[1], [0], [0], [1], [0, 0, 1, 1], [], []>} : vector<8x128xf32>, vector<128x128xf32>, vector<8x128xf32> -> vector<8x128xf32>
      %c0_679 = arith.constant 0 : index
      %c0_680 = arith.constant 0 : index
      %1045 = vector.load %arg19[%c0_679, %c0_680] : memref<8x128xf32, #tpu.memory_space<vmem>>, vector<8x128xf32>
      tpu.vector_store %arg19[%c0_679, %c0_680], %1044 {strides = array<i32>} : memref<8x128xf32, #tpu.memory_space<vmem>>, vector<8x128xf32>,
    } else {
    }
    %c0_625 = arith.constant 0 : index
    %c0_626 = arith.constant 0 : index
    %954 = vector.load %arg19[%c0_625, %c0_626] : memref<8x128xf32, #tpu.memory_space<vmem>>, vector<8x128xf32>
    %c0_627 = arith.constant 0 : index
    %c0_628 = arith.constant 0 : index
    %c0_629 = arith.constant 0 : index
    %955 = vector.load %arg17[%c0_627, %c0_628, %c0_629] : memref<2x8x32xf32, #tpu.memory_space<vmem>>, vector<1x8x32xf32>
    %956 = vector.shape_cast %955 : vector<1x8x32xf32> to vector<8x32xf32>
    %c0_630 = arith.constant 0 : index
    %c0_631 = arith.constant 0 : index
    %957 = vector.load %arg8[%c0_630, %c0_631] : memref<32x128xf32, #tpu.memory_space<vmem>>, vector<32x128xf32>
    %cst_632 = arith.constant dense<0.000000e+00> : vector<8x128xf32>
    %958 = tpu.matmul %956, %957, %cst_632 {dimension_numbers = #tpu.dot_dimension_numbers<[1], [0], [0], [1], [0, 0, 1, 1], [], []>} : vector<8x32xf32>, vector<32x128xf32>, vector<8x128xf32> -> vector<8x128xf32>
    %959 = arith.addf %954, %958 : vector<8x128xf32>
    %c0_633 = arith.constant 0 : index
    %c0_634 = arith.constant 0 : index
    %960 = vector.load %arg9[%c0_633, %c0_634] : memref<1x128xf32, #tpu.memory_space<vmem>>, vector<1x128xf32>
    %961 = vector.broadcast %960 : vector<1x128xf32> to vector<8x128xf32>
    %962 = arith.addf %959, %961 : vector<8x128xf32>
    %c0_635 = arith.constant 0 : index
    %c0_636 = arith.constant 0 : index
    %c0_637 = arith.constant 0 : index
    %963 = vector.load %arg18[%c0_635, %c0_636, %c0_637] : memref<2x8x32xf32, #tpu.memory_space<vmem>>, vector<1x8x32xf32>
    %964 = vector.shape_cast %963 : vector<1x8x32xf32> to vector<8x32xf32>
    %965 = arith.negf %962 : vector<8x128xf32>
    %966 = math.exp %965 : vector<8x128xf32>
    %cst_638 = arith.constant 1.000000e+00 : f32
    %967 = vector.broadcast %cst_638 : f32 to vector<8x128xf32>
    %968 = arith.addf %967, %966 : vector<8x128xf32>
    %969 = arith.divf %967, %968 : vector<8x128xf32>
    %970 = math.tanh %962 : vector<8x128xf32>
    %971 = vector.extract_strided_slice %969 {offsets = [0, 0], sizes = [8, 32], strides = [1, 1]} : vector<8x128xf32> to vector<8x32xf32>
    %972 = vector.extract_strided_slice %969 {offsets = [0, 32], sizes = [8, 32], strides = [1, 1]} : vector<8x128xf32> to vector<8x32xf32>
    %973 = vector.extract_strided_slice %970 {offsets = [0, 64], sizes = [8, 32], strides = [1, 1]} : vector<8x128xf32> to vector<8x32xf32>
    %974 = vector.extract_strided_slice %969 {offsets = [0, 96], sizes = [8, 32], strides = [1, 1]} : vector<8x128xf32> to vector<8x32xf32>
    %975 = arith.mulf %972, %964 : vector<8x32xf32>
    %976 = arith.mulf %971, %973 : vector<8x32xf32>
    %977 = arith.addf %975, %976 : vector<8x32xf32>
    %978 = math.tanh %977 : vector<8x32xf32>
    %979 = arith.mulf %974, %978 : vector<8x32xf32>
    %c0_639 = arith.constant 0 : index
    %c0_640 = arith.constant 0 : index
    %c0_641 = arith.constant 0 : index
    %980 = vector.load %arg17[%c0_639, %c0_640, %c0_641] : memref<2x8x32xf32, #tpu.memory_space<vmem>>, vector<1x8x32xf32>
    %981 = vector.shape_cast %980 : vector<1x8x32xf32> to vector<8x32xf32>
    %982 = vector.shape_cast %979 : vector<8x32xf32> to vector<1x8x32xf32>
    tpu.vector_store %arg17[%c0_639, %c0_640, %c0_641], %982 {strides = array<i32>} : memref<2x8x32xf32, #tpu.memory_space<vmem>>, vector<1x8x32xf32>,
    %c0_642 = arith.constant 0 : index
    %c0_643 = arith.constant 0 : index
    %c0_644 = arith.constant 0 : index
    %983 = vector.load %arg18[%c0_642, %c0_643, %c0_644] : memref<2x8x32xf32, #tpu.memory_space<vmem>>, vector<1x8x32xf32>
    %984 = vector.shape_cast %983 : vector<1x8x32xf32> to vector<8x32xf32>
    %985 = vector.shape_cast %977 : vector<8x32xf32> to vector<1x8x32xf32>
    tpu.vector_store %arg18[%c0_642, %c0_643, %c0_644], %985 {strides = array<i32>} : memref<2x8x32xf32, #tpu.memory_space<vmem>>, vector<1x8x32xf32>,
    %c0_645 = arith.constant 0 : index
    %c0_646 = arith.constant 0 : index
    %986 = vector.load %arg10[%c0_645, %c0_646] : memref<32x128xf32, #tpu.memory_space<vmem>>, vector<32x128xf32>
    %cst_647 = arith.constant dense<0.000000e+00> : vector<8x128xf32>
    %987 = tpu.matmul %979, %986, %cst_647 {dimension_numbers = #tpu.dot_dimension_numbers<[1], [0], [0], [1], [0, 0, 1, 1], [], []>} : vector<8x32xf32>, vector<32x128xf32>, vector<8x128xf32> -> vector<8x128xf32>
    %c1_648 = arith.constant 1 : index
    %c0_649 = arith.constant 0 : index
    %c0_650 = arith.constant 0 : index
    %988 = vector.load %arg17[%c1_648, %c0_649, %c0_650] : memref<2x8x32xf32, #tpu.memory_space<vmem>>, vector<1x8x32xf32>
    %989 = vector.shape_cast %988 : vector<1x8x32xf32> to vector<8x32xf32>
    %c0_651 = arith.constant 0 : index
    %c0_652 = arith.constant 0 : index
    %990 = vector.load %arg11[%c0_651, %c0_652] : memref<32x128xf32, #tpu.memory_space<vmem>>, vector<32x128xf32>
    %cst_653 = arith.constant dense<0.000000e+00> : vector<8x128xf32>
    %991 = tpu.matmul %989, %990, %cst_653 {dimension_numbers = #tpu.dot_dimension_numbers<[1], [0], [0], [1], [0, 0, 1, 1], [], []>} : vector<8x32xf32>, vector<32x128xf32>, vector<8x128xf32> -> vector<8x128xf32>
    %992 = arith.addf %987, %991 : vector<8x128xf32>
    %c0_654 = arith.constant 0 : index
    %c0_655 = arith.constant 0 : index
    %993 = vector.load %arg12[%c0_654, %c0_655] : memref<1x128xf32, #tpu.memory_space<vmem>>, vector<1x128xf32>
    %994 = vector.broadcast %993 : vector<1x128xf32> to vector<8x128xf32>
    %995 = arith.addf %992, %994 : vector<8x128xf32>
    %c1_656 = arith.constant 1 : index
    %c0_657 = arith.constant 0 : index
    %c0_658 = arith.constant 0 : index
    %996 = vector.load %arg18[%c1_656, %c0_657, %c0_658] : memref<2x8x32xf32, #tpu.memory_space<vmem>>, vector<1x8x32xf32>
    %997 = vector.shape_cast %996 : vector<1x8x32xf32> to vector<8x32xf32>
    %998 = arith.negf %995 : vector<8x128xf32>
    %999 = math.exp %998 : vector<8x128xf32>
    %cst_659 = arith.constant 1.000000e+00 : f32
    %1000 = vector.broadcast %cst_659 : f32 to vector<8x128xf32>
    %1001 = arith.addf %1000, %999 : vector<8x128xf32>
    %1002 = arith.divf %1000, %1001 : vector<8x128xf32>
    %1003 = math.tanh %995 : vector<8x128xf32>
    %1004 = vector.extract_strided_slice %1002 {offsets = [0, 0], sizes = [8, 32], strides = [1, 1]} : vector<8x128xf32> to vector<8x32xf32>
    %1005 = vector.extract_strided_slice %1002 {offsets = [0, 32], sizes = [8, 32], strides = [1, 1]} : vector<8x128xf32> to vector<8x32xf32>
    %1006 = vector.extract_strided_slice %1003 {offsets = [0, 64], sizes = [8, 32], strides = [1, 1]} : vector<8x128xf32> to vector<8x32xf32>
    %1007 = vector.extract_strided_slice %1002 {offsets = [0, 96], sizes = [8, 32], strides = [1, 1]} : vector<8x128xf32> to vector<8x32xf32>
    %1008 = arith.mulf %1005, %997 : vector<8x32xf32>
    %1009 = arith.mulf %1004, %1006 : vector<8x32xf32>
    %1010 = arith.addf %1008, %1009 : vector<8x32xf32>
    %1011 = math.tanh %1010 : vector<8x32xf32>
    %1012 = arith.mulf %1007, %1011 : vector<8x32xf32>
    %c1_660 = arith.constant 1 : index
    %c0_661 = arith.constant 0 : index
    %c0_662 = arith.constant 0 : index
    %1013 = vector.load %arg17[%c1_660, %c0_661, %c0_662] : memref<2x8x32xf32, #tpu.memory_space<vmem>>, vector<1x8x32xf32>
    %1014 = vector.shape_cast %1013 : vector<1x8x32xf32> to vector<8x32xf32>
    %1015 = vector.shape_cast %1012 : vector<8x32xf32> to vector<1x8x32xf32>
    tpu.vector_store %arg17[%c1_660, %c0_661, %c0_662], %1015 {strides = array<i32>} : memref<2x8x32xf32, #tpu.memory_space<vmem>>, vector<1x8x32xf32>,
    %c1_663 = arith.constant 1 : index
    %c0_664 = arith.constant 0 : index
    %c0_665 = arith.constant 0 : index
    %1016 = vector.load %arg18[%c1_663, %c0_664, %c0_665] : memref<2x8x32xf32, #tpu.memory_space<vmem>>, vector<1x8x32xf32>
    %1017 = vector.shape_cast %1016 : vector<1x8x32xf32> to vector<8x32xf32>
    %1018 = vector.shape_cast %1010 : vector<8x32xf32> to vector<1x8x32xf32>
    tpu.vector_store %arg18[%c1_663, %c0_664, %c0_665], %1018 {strides = array<i32>} : memref<2x8x32xf32, #tpu.memory_space<vmem>>, vector<1x8x32xf32>,
    %c0_666 = arith.constant 0 : index
    %c0_667 = arith.constant 0 : index
    %1019 = vector.load %arg14[%c0_666, %c0_667] : memref<32x128xf32, #tpu.memory_space<vmem>>, vector<32x128xf32>
    %cst_668 = arith.constant dense<0.000000e+00> : vector<8x128xf32>
    %1020 = tpu.matmul %1012, %1019, %cst_668 {dimension_numbers = #tpu.dot_dimension_numbers<[1], [0], [0], [1], [0, 0, 1, 1], [], []>} : vector<8x32xf32>, vector<32x128xf32>, vector<8x128xf32> -> vector<8x128xf32>
    %c0_669 = arith.constant 0 : index
    %c0_670 = arith.constant 0 : index
    %1021 = vector.load %arg15[%c0_669, %c0_670] : memref<1x128xf32, #tpu.memory_space<vmem>>, vector<1x128xf32>
    %1022 = vector.broadcast %1021 : vector<1x128xf32> to vector<8x128xf32>
    %1023 = arith.addf %1020, %1022 : vector<8x128xf32>
    %c7 = arith.constant 7 : index
    %c0_671 = arith.constant 0 : index
    %c0_672 = arith.constant 0 : index
    %1024 = vector.load %arg16[%c7, %c0_671, %c0_672] : memref<8x8x128xf32, #tpu.memory_space<vmem>>, vector<1x8x128xf32>
    %1025 = vector.shape_cast %1024 : vector<1x8x128xf32> to vector<8x128xf32>
    %1026 = vector.shape_cast %1023 : vector<8x128xf32> to vector<1x8x128xf32>
    tpu.vector_store %arg16[%c7, %c0_671, %c0_672], %1026 {strides = array<i32>} : memref<8x8x128xf32, #tpu.memory_space<vmem>>, vector<1x8x128xf32>,
    return
  }
}

</mosaic_0001>

<llo_original>
// kernel: seq2seq_forward.1
$region0: #{seq2seq_forward.1}
  #allocation0 [shape = 'u32[]', space=smem, size = 0x4, offset = 0x4, fixed_abs, tag = 'smem constant byte address 0x4 - core index']
  #allocation1 [shape = 'u32[72,128]{1,0:T(1,128)}', space=vmem, size = 0x9000, scoped, tag = 'internal scratch']
  #allocation2 [shape = 'f32[2,8,32]{2,1,0:T(8,128)}', space=vmem, size = 0x2000, scoped, tag = 'scratch operand']
  #allocation3 [shape = 'f32[2,8,32]{2,1,0:T(8,128)}', space=vmem, size = 0x2000, scoped, tag = 'scratch operand']
  #allocation4 [shape = 'f32[8,128]{1,0:T(8,128)}', space=vmem, size = 0x1000, scoped, tag = 'scratch operand']
  %s0 = inlined_call_operand.vmem [shape: f32[7,8,128], index: 0, kind: input, shape index: {}]
  %s1 = inlined_call_operand.vmem [shape: f32[8,8,128], index: 1, kind: input, shape index: {}]
  %s2 = inlined_call_operand.vmem [shape: s32[7], index: 2, kind: input, shape index: {}]
  %s3 = inlined_call_operand.vmem [shape: f32[32,128], index: 3, kind: input, shape index: {}]
  %s4 = inlined_call_operand.vmem [shape: f32[1,128], index: 4, kind: input, shape index: {}]
  %s5 = inlined_call_operand.vmem [shape: f32[32,128], index: 5, kind: input, shape index: {}]
  %s6 = inlined_call_operand.vmem [shape: f32[32,128], index: 6, kind: input, shape index: {}]
  %s7 = inlined_call_operand.vmem [shape: f32[1,128], index: 7, kind: input, shape index: {}]
  %s8 = inlined_call_operand.vmem [shape: f32[32,128], index: 8, kind: input, shape index: {}]
  %s9 = inlined_call_operand.vmem [shape: f32[1,128], index: 9, kind: input, shape index: {}]
  %s10 = inlined_call_operand.vmem [shape: f32[32,128], index: 10, kind: input, shape index: {}]
  %s11 = inlined_call_operand.vmem [shape: f32[32,128], index: 11, kind: input, shape index: {}]
  %s12 = inlined_call_operand.vmem [shape: f32[1,128], index: 12, kind: input, shape index: {}]
  %s13 = inlined_call_operand.vmem [shape: f32[128,128], index: 13, kind: input, shape index: {}]
  %s14 = inlined_call_operand.vmem [shape: f32[32,128], index: 14, kind: input, shape index: {}]
  %s15 = inlined_call_operand.vmem [shape: f32[1,128], index: 15, kind: input, shape index: {}]
  %s16 = inlined_call_operand.vmem [shape: f32[8,8,128], index: 16, kind: output, shape index: {}]
  %s17 = sld [smem:[#allocation0]]
  $region126: #{seq2seq_forward.1} parent=0
    _
  %s19 = ssub.s32 1, %s17
  %s20 = scalar_select 0, %s19, %s17
  $region1: #{seq2seq_forward.1} parent=0
    #allocation5 [shape = 'u8[512]{0}', space=smem, size = 0x200, scoped, tag = 'input window, operand 2, single buffered']
    #allocation6 [shape = 's32[1]{0}', space=sflag, size = 0x4, scoped, tag = 'scoped memory for seq2seq_forward.1']
    %21 = vsyncpa [#allocation6], 0
    // Predicated region
    $region2: #{seq2seq_forward.1} parent=1 // pred_check
      _
    $region3: #{seq2seq_forward.1} parent=1 // pred_check_branch
      %23 = sbr.rel (0) target = $region5
    $region4: #{seq2seq_forward.1} parent=1 // pred_region
      _
    $region5: #{seq2seq_forward.1} parent=1 // pred_fallthru
      _
    // Predicated region
    $region6: #{seq2seq_forward.1} parent=1 // pred_check
      _
    $region7: #{seq2seq_forward.1} parent=1 // pred_check_branch
      %25 = sbr.rel (0) target = $region9
    $region8: #{seq2seq_forward.1} parent=1 // pred_region
      _
    $region9: #{seq2seq_forward.1} parent=1 // pred_fallthru
      _
    // Predicated region
    $region10: #{seq2seq_forward.1} parent=1 // pred_check
      _
    $region11: #{seq2seq_forward.1} parent=1 // pred_check_branch
      %27 = sbr.rel (0) target = $region13
    $region12: #{seq2seq_forward.1} parent=1 // pred_region
      %29 = vsyncadd [#allocation6], 0
      %s31 = sshll.u32 %s2, 4
      %s32 = int_to_ptr.vmem [resolvable:$true] %s31
      %34 = dma.vmem_to_smem %s32, 16, [#allocation5], [#allocation6]
    $region13: #{seq2seq_forward.1} parent=1 // pred_fallthru
      _
    // Predicated region
    $region14: #{seq2seq_forward.1} parent=1 // pred_check
      _
    $region15: #{seq2seq_forward.1} parent=1 // pred_check_branch
      %36 = sbr.rel (0) target = $region17
    $region16: #{seq2seq_forward.1} parent=1 // pred_region
      _
    $region17: #{seq2seq_forward.1} parent=1 // pred_fallthru
      _
    // Predicated region
    $region18: #{seq2seq_forward.1} parent=1 // pred_check
      _
    $region19: #{seq2seq_forward.1} parent=1 // pred_check_branch
      %38 = sbr.rel (0) target = $region21
    $region20: #{seq2seq_forward.1} parent=1 // pred_region
      _
    $region21: #{seq2seq_forward.1} parent=1 // pred_fallthru
      _
    // Predicated region
    $region22: #{seq2seq_forward.1} parent=1 // pred_check
      _
    $region23: #{seq2seq_forward.1} parent=1 // pred_check_branch
      %40 = sbr.rel (0) target = $region25
    $region24: #{seq2seq_forward.1} parent=1 // pred_region
      _
    $region25: #{seq2seq_forward.1} parent=1 // pred_fallthru
      _
    // Predicated region
    $region26: #{seq2seq_forward.1} parent=1 // pred_check
      _
    $region27: #{seq2seq_forward.1} parent=1 // pred_check_branch
      %42 = sbr.rel (0) target = $region29
    $region28: #{seq2seq_forward.1} parent=1 // pred_region
      _
    $region29: #{seq2seq_forward.1} parent=1 // pred_fallthru
      _
    // Predicated region
    $region30: #{seq2seq_forward.1} parent=1 // pred_check
      _
    $region31: #{seq2seq_forward.1} parent=1 // pred_check_branch
      %44 = sbr.rel (0) target = $region33
    $region32: #{seq2seq_forward.1} parent=1 // pred_region
      _
    $region33: #{seq2seq_forward.1} parent=1 // pred_fallthru
      _
    // Predicated region
    $region34: #{seq2seq_forward.1} parent=1 // pred_check
      _
    $region35: #{seq2seq_forward.1} parent=1 // pred_check_branch
      %46 = sbr.rel (0) target = $region37
    $region36: #{seq2seq_forward.1} parent=1 // pred_region
      _
    $region37: #{seq2seq_forward.1} parent=1 // pred_fallthru
      _
    // Predicated region
    $region38: #{seq2seq_forward.1} parent=1 // pred_check
      _
    $region39: #{seq2seq_forward.1} parent=1 // pred_check_branch
      %48 = sbr.rel (0) target = $region41
    $region40: #{seq2seq_forward.1} parent=1 // pred_region
      _
    $region41: #{seq2seq_forward.1} parent=1 // pred_fallthru
      _
    // Predicated region
    $region42: #{seq2seq_forward.1} parent=1 // pred_check
      _
    $region43: #{seq2seq_forward.1} parent=1 // pred_check_branch
      %50 = sbr.rel (0) target = $region45
    $region44: #{seq2seq_forward.1} parent=1 // pred_region
      _
    $region45: #{seq2seq_forward.1} parent=1 // pred_fallthru
      _
    // Predicated region
    $region46: #{seq2seq_forward.1} parent=1 // pred_check
      _
    $region47: #{seq2seq_forward.1} parent=1 // pred_check_branch
      %52 = sbr.rel (0) target = $region49
    $region48: #{seq2seq_forward.1} parent=1 // pred_region
      _
    $region49: #{seq2seq_forward.1} parent=1 // pred_fallthru
      _
    // Predicated region
    $region50: #{seq2seq_forward.1} parent=1 // pred_check
      _
    $region51: #{seq2seq_forward.1} parent=1 // pred_check_branch
      %54 = sbr.rel (0) target = $region53
    $region52: #{seq2seq_forward.1} parent=1 // pred_region
      _
    $region53: #{seq2seq_forward.1} parent=1 // pred_fallthru
      _
    // Predicated region
    $region54: #{seq2seq_forward.1} parent=1 // pred_check
      _
    $region55: #{seq2seq_forward.1} parent=1 // pred_check_branch
      %56 = sbr.rel (0) target = $region57
    $region56: #{seq2seq_forward.1} parent=1 // pred_region
      _
    $region57: #{seq2seq_forward.1} parent=1 // pred_fallthru
      _
    // Predicated region
    $region58: #{seq2seq_forward.1} parent=1 // pred_check
      _
    $region59: #{seq2seq_forward.1} parent=1 // pred_check_branch
      %58 = sbr.rel (0) target = $region61
    $region60: #{seq2seq_forward.1} parent=1 // pred_region
      _
    $region61: #{seq2seq_forward.1} parent=1 // pred_fallthru
      _
    // Predicated region
    $region62: #{seq2seq_forward.1} parent=1 // pred_check
      _
    $region63: #{seq2seq_forward.1} parent=1 // pred_check_branch
      %60 = sbr.rel (0) target = $region65
    $region64: #{seq2seq_forward.1} parent=1 // pred_region
      _
    $region65: #{seq2seq_forward.1} parent=1 // pred_fallthru
      _
    // Predicated region
    $region66: #{seq2seq_forward.1} parent=1 // pred_check
      _
    $region67: #{seq2seq_forward.1} parent=1 // pred_check_branch
      %62 = sbr.rel (0) target = $region69
    $region68: #{seq2seq_forward.1} parent=1 // pred_region
      %64 = dma.done [#allocation6], 16
    $region69: #{seq2seq_forward.1} parent=1 // pred_fallthru
      _
    %65 = sfence
    %vm66 = vcmask 261120
    %67 = vst.msk [vmem:[#allocation2] sm:$0xff] %vm66, 0.0
    %68 = vst.msk [vmem:[#allocation2 + $0x8] sm:$0xff] %vm66, 0.0
    %69 = vst.msk [vmem:[#allocation3] sm:$0xff] %vm66, 0.0
    %70 = vst.msk [vmem:[#allocation3 + $0x8] sm:$0xff] %vm66, 0.0
    %71 = vst [vmem:[%s16] sm:$0xff] 0.0
    %v72 = vld [vmem:[%s0] sm:$0xff]
    %v73 = vld [vmem:[#allocation2] sm:$0xff]
    %v74 = vld [vmem:[%s3] sm:$0xff]
    %v75 = vld [vmem:[%s3 + $0x8] sm:$0xff]
    %v76 = vld [vmem:[%s3 + $0x10] sm:$0xff]
    %v77 = vld [vmem:[%s3 + $0x18] sm:$0xff]
    %v79 = vsel %vm66, %v73, 0
    %81 = vmatpush.msra.mxu0 0.0
    %82 = vmatpush.msra.mxu0 0.0
    %83 = vmatpush.msra.mxu0 0.0
    %84 = vmatpush.msra.mxu0 0.0
    %85 = vmatpush.msra.mxu0 0.0
    %86 = vmatpush.msra.mxu0 0.0
    %87 = vmatpush.msra.mxu0 0.0
    %88 = vmatpush.msra.mxu0 0.0
    %89 = vmatpush.msra.mxu0 0.0
    %90 = vmatpush.msra.mxu0 0.0
    %91 = vmatpush.msra.mxu0 0.0
    %92 = vmatpush.msra.mxu0 0.0
    %93 = vmatpush.msra.mxu0 %v77
    %94 = vmatpush.msra.mxu0 %v76
    %95 = vmatpush.msra.mxu0 %v75
    %96 = vmatpush.msra.mxu0 %v74
    %97 = vmatmul.f32.gmra.mxu0 %v79
    %v98 = vpop.f32.mrf.mxu0
    %v99 = vadd.f32 0.0, %v98
    %100 = vdwg.mxu0
    %v101 = vadd.f32 %v72, %v99
    %v102 = vld [vmem:[%s4] sm:$0x1]
    %v104 = vperm.slane %v102, 0
    %v106 = vadd.f32 %v101, %v104
    %v107 = vld [vmem:[#allocation3] sm:$0xff]
    %v108 = vxor.u32 %v106, 2147483648
    %v109 = vmul.f32 %v108, 1.442695
    %v110 = vpow.pop %v109
    %v111 = vadd.f32 %v110, 1.0
    %v112 = vrcp.pop %v111
    %v113 = vmul.f32 %v111, %v112
    %v114 = vsub.f32 1.0, %v113
    %v115 = vmul.f32 %v112, %v114
    %v116 = vadd.f32 %v112, %v115
    %vm117 = vweird.f32 %v111
    %vm118 = vweird.f32 %v112
    %vm119 = vmor %vm117, %vm118
    %v120 = vsel %vm119, %v112, %v116
    %v121 = vand.u32 2147483647, %v111
    %vm122 = vcmp.eq.f32.partialorder %v121, 8.507059e+37
    %v123 = vand.u32 %v111, 2147483648
    %v124 = vor.u32 1.1754944e-38, %v123
    %v125 = vsel %vm122, %v124, %v120
    %v126 = vmul.f32 1.0, %v125
    %v127 = vtanh.pop %v106
    %129 = vrot.lane.b32.xlu0 %v107, 32
    %v130 = vpop.permute.xlu0 %129
    %v132 = vmul.f32 %v126, %v130
    %134 = vrot.lane.b32.xlu0 %v127, 64
    %v135 = vpop.permute.xlu0 %134
    %v137 = vmul.f32 %v126, %v135
    %139 = vrot.lane.b32.xlu0 %v137, 32
    %v140 = vpop.permute.xlu0 %139
    %v142 = vadd.f32 %v132, %v140
    %v143 = vtanh.pop %v142
    %145 = vrot.lane.b32.xlu0 %v143, 64
    %v146 = vpop.permute.xlu0 %145
    %v148 = vmul.f32 %v126, %v146
    %150 = vrot.lane.b32.xlu0 %v148, 32
    %v151 = vpop.permute.xlu0 %150
    %153 = vst.msk [vmem:[#allocation2] sm:$0xff] %vm66, %v151
    %155 = vrot.lane.b32.xlu0 %v142, 96
    %v156 = vpop.permute.xlu0 %155
    %158 = vst.msk [vmem:[#allocation3] sm:$0xff] %vm66, %v156
    %v159 = vld [vmem:[%s5] sm:$0xff]
    %v160 = vld [vmem:[%s5 + $0x8] sm:$0xff]
    %v161 = vld [vmem:[%s5 + $0x10] sm:$0xff]
    %v162 = vld [vmem:[%s5 + $0x18] sm:$0xff]
    %s163 = scalar_lea.vmem [#allocation2], 8
    %v164 = vld [vmem:[%s163] sm:$0xff]
    %v165 = vld [vmem:[%s6] sm:$0xff]
    %v166 = vld [vmem:[%s6 + $0x8] sm:$0xff]
    %v167 = vld [vmem:[%s6 + $0x10] sm:$0xff]
    %v168 = vld [vmem:[%s6 + $0x18] sm:$0xff]
    %v170 = vsel %vm66, %v164, 0
    %172 = vmatpush.msra.mxu0 0.0
    %173 = vmatpush.msra.mxu0 0.0
    %174 = vmatpush.msra.mxu0 0.0
    %175 = vmatpush.msra.mxu0 0.0
    %176 = vmatpush.msra.mxu0 0.0
    %177 = vmatpush.msra.mxu0 0.0
    %178 = vmatpush.msra.mxu0 0.0
    %179 = vmatpush.msra.mxu0 0.0
    %180 = vmatpush.msra.mxu0 0.0
    %181 = vmatpush.msra.mxu0 0.0
    %182 = vmatpush.msra.mxu0 0.0
    %183 = vmatpush.msra.mxu0 0.0
    %184 = vmatpush.msra.mxu0 %v168
    %185 = vmatpush.msra.mxu0 %v167
    %186 = vmatpush.msra.mxu0 %v166
    %187 = vmatpush.msra.mxu0 %v165
    %188 = vmatmul.f32.gmra.mxu0 %v170
    %v189 = vpop.f32.mrf.mxu0
    %v190 = vadd.f32 0.0, %v189
    %191 = vdwg.mxu0
    %v192 = vsel %vm66, %v151, 0
    %194 = vmatpush.msra.mxu0 0.0
    %195 = vmatpush.msra.mxu0 0.0
    %196 = vmatpush.msra.mxu0 0.0
    %197 = vmatpush.msra.mxu0 0.0
    %198 = vmatpush.msra.mxu0 0.0
    %199 = vmatpush.msra.mxu0 0.0
    %200 = vmatpush.msra.mxu0 0.0
    %201 = vmatpush.msra.mxu0 0.0
    %202 = vmatpush.msra.mxu0 0.0
    %203 = vmatpush.msra.mxu0 0.0
    %204 = vmatpush.msra.mxu0 0.0
    %205 = vmatpush.msra.mxu0 0.0
    %206 = vmatpush.msra.mxu0 %v162
    %207 = vmatpush.msra.mxu0 %v161
    %208 = vmatpush.msra.mxu0 %v160
    %209 = vmatpush.msra.mxu0 %v159
    %210 = vmatmul.f32.gmra.mxu0 %v192
    %v211 = vpop.f32.mrf.mxu0
    %v212 = vadd.f32 %v190, %v211
    %213 = vdwg.mxu0
    %v214 = vld [vmem:[%s7] sm:$0x1]
    %v216 = vperm.slane %v214, 0
    %v218 = vadd.f32 %v212, %v216
    %s219 = scalar_lea.vmem [#allocation3], 8
    %v220 = vld [vmem:[%s219] sm:$0xff]
    %v221 = vxor.u32 %v218, 2147483648
    %v222 = vmul.f32 %v221, 1.442695
    %v223 = vpow.pop %v222
    %v224 = vadd.f32 %v223, 1.0
    %v225 = vrcp.pop %v224
    %v226 = vmul.f32 %v224, %v225
    %v227 = vsub.f32 1.0, %v226
    %v228 = vmul.f32 %v225, %v227
    %v229 = vadd.f32 %v225, %v228
    %vm230 = vweird.f32 %v224
    %vm231 = vweird.f32 %v225
    %vm232 = vmor %vm230, %vm231
    %v233 = vsel %vm232, %v225, %v229
    %v234 = vand.u32 2147483647, %v224
    %vm235 = vcmp.eq.f32.partialorder %v234, 8.507059e+37
    %v236 = vand.u32 %v224, 2147483648
    %v237 = vor.u32 1.1754944e-38, %v236
    %v238 = vsel %vm235, %v237, %v233
    %v239 = vmul.f32 1.0, %v238
    %v240 = vtanh.pop %v218
    %242 = vrot.lane.b32.xlu0 %v220, 32
    %v243 = vpop.permute.xlu0 %242
    %v245 = vmul.f32 %v239, %v243
    %247 = vrot.lane.b32.xlu0 %v240, 64
    %v248 = vpop.permute.xlu0 %247
    %v250 = vmul.f32 %v239, %v248
    %252 = vrot.lane.b32.xlu0 %v250, 32
    %v253 = vpop.permute.xlu0 %252
    %v255 = vadd.f32 %v245, %v253
    %v256 = vtanh.pop %v255
    %258 = vrot.lane.b32.xlu0 %v256, 64
    %v259 = vpop.permute.xlu0 %258
    %v261 = vmul.f32 %v239, %v259
    %263 = vrot.lane.b32.xlu0 %v261, 32
    %v264 = vpop.permute.xlu0 %263
    %266 = vst.msk [vmem:[%s163] sm:$0xff] %vm66, %v264
    %268 = vrot.lane.b32.xlu0 %v255, 96
    %v269 = vpop.permute.xlu0 %268
    %271 = vst.msk [vmem:[%s219] sm:$0xff] %vm66, %v269
    %s272 = scalar_lea.vmem %s0, 8
    %v273 = vld [vmem:[%s272] sm:$0xff]
    %v274 = vld [vmem:[#allocation2] sm:$0xff]
    %v275 = vld [vmem:[%s3] sm:$0xff]
    %v276 = vld [vmem:[%s3 + $0x8] sm:$0xff]
    %v277 = vld [vmem:[%s3 + $0x10] sm:$0xff]
    %v278 = vld [vmem:[%s3 + $0x18] sm:$0xff]
    %v280 = vsel %vm66, %v274, 0
    %282 = vmatpush.msra.mxu0 0.0
    %283 = vmatpush.msra.mxu0 0.0
    %284 = vmatpush.msra.mxu0 0.0
    %285 = vmatpush.msra.mxu0 0.0
    %286 = vmatpush.msra.mxu0 0.0
    %287 = vmatpush.msra.mxu0 0.0
    %288 = vmatpush.msra.mxu0 0.0
    %289 = vmatpush.msra.mxu0 0.0
    %290 = vmatpush.msra.mxu0 0.0
    %291 = vmatpush.msra.mxu0 0.0
    %292 = vmatpush.msra.mxu0 0.0
    %293 = vmatpush.msra.mxu0 0.0
    %294 = vmatpush.msra.mxu0 %v278
    %295 = vmatpush.msra.mxu0 %v277
    %296 = vmatpush.msra.mxu0 %v276
    %297 = vmatpush.msra.mxu0 %v275
    %298 = vmatmul.f32.gmra.mxu0 %v280
    %v299 = vpop.f32.mrf.mxu0
    %v300 = vadd.f32 0.0, %v299
    %301 = vdwg.mxu0
    %v302 = vadd.f32 %v273, %v300
    %v303 = vld [vmem:[%s4] sm:$0x1]
    %v305 = vperm.slane %v303, 0
    %v307 = vadd.f32 %v302, %v305
    %v308 = vld [vmem:[#allocation3] sm:$0xff]
    %v309 = vxor.u32 %v307, 2147483648
    %v310 = vmul.f32 %v309, 1.442695
    %v311 = vpow.pop %v310
    %v312 = vadd.f32 %v311, 1.0
    %v313 = vrcp.pop %v312
    %v314 = vmul.f32 %v312, %v313
    %v315 = vsub.f32 1.0, %v314
    %v316 = vmul.f32 %v313, %v315
    %v317 = vadd.f32 %v313, %v316
    %vm318 = vweird.f32 %v312
    %vm319 = vweird.f32 %v313
    %vm320 = vmor %vm318, %vm319
    %v321 = vsel %vm320, %v313, %v317
    %v322 = vand.u32 2147483647, %v312
    %vm323 = vcmp.eq.f32.partialorder %v322, 8.507059e+37
    %v324 = vand.u32 %v312, 2147483648
    %v325 = vor.u32 1.1754944e-38, %v324
    %v326 = vsel %vm323, %v325, %v321
    %v327 = vmul.f32 1.0, %v326
    %v328 = vtanh.pop %v307
    %330 = vrot.lane.b32.xlu0 %v308, 32
    %v331 = vpop.permute.xlu0 %330
    %v333 = vmul.f32 %v327, %v331
    %335 = vrot.lane.b32.xlu0 %v328, 64
    %v336 = vpop.permute.xlu0 %335
    %v338 = vmul.f32 %v327, %v336
    %340 = vrot.lane.b32.xlu0 %v338, 32
    %v341 = vpop.permute.xlu0 %340
    %v343 = vadd.f32 %v333, %v341
    %v344 = vtanh.pop %v343
    %346 = vrot.lane.b32.xlu0 %v344, 64
    %v347 = vpop.permute.xlu0 %346
    %v349 = vmul.f32 %v327, %v347
    %351 = vrot.lane.b32.xlu0 %v349, 32
    %v352 = vpop.permute.xlu0 %351
    %354 = vst.msk [vmem:[#allocation2] sm:$0xff] %vm66, %v352
    %356 = vrot.lane.b32.xlu0 %v343, 96
    %v357 = vpop.permute.xlu0 %356
    %359 = vst.msk [vmem:[#allocation3] sm:$0xff] %vm66, %v357
    %v360 = vld [vmem:[%s5] sm:$0xff]
    %v361 = vld [vmem:[%s5 + $0x8] sm:$0xff]
    %v362 = vld [vmem:[%s5 + $0x10] sm:$0xff]
    %v363 = vld [vmem:[%s5 + $0x18] sm:$0xff]
    %v364 = vld [vmem:[%s163] sm:$0xff]
    %v365 = vld [vmem:[%s6] sm:$0xff]
    %v366 = vld [vmem:[%s6 + $0x8] sm:$0xff]
    %v367 = vld [vmem:[%s6 + $0x10] sm:$0xff]
    %v368 = vld [vmem:[%s6 + $0x18] sm:$0xff]
    %v370 = vsel %vm66, %v364, 0
    %372 = vmatpush.msra.mxu0 0.0
    %373 = vmatpush.msra.mxu0 0.0
    %374 = vmatpush.msra.mxu0 0.0
    %375 = vmatpush.msra.mxu0 0.0
    %376 = vmatpush.msra.mxu0 0.0
    %377 = vmatpush.msra.mxu0 0.0
    %378 = vmatpush.msra.mxu0 0.0
    %379 = vmatpush.msra.mxu0 0.0
    %380 = vmatpush.msra.mxu0 0.0
    %381 = vmatpush.msra.mxu0 0.0
    %382 = vmatpush.msra.mxu0 0.0
    %383 = vmatpush.msra.mxu0 0.0
    %384 = vmatpush.msra.mxu0 %v368
    %385 = vmatpush.msra.mxu0 %v367
    %386 = vmatpush.msra.mxu0 %v366
    %387 = vmatpush.msra.mxu0 %v365
    %388 = vmatmul.f32.gmra.mxu0 %v370
    %v389 = vpop.f32.mrf.mxu0
    %v390 = vadd.f32 0.0, %v389
    %391 = vdwg.mxu0
    %v392 = vsel %vm66, %v352, 0
    %394 = vmatpush.msra.mxu0 0.0
    %395 = vmatpush.msra.mxu0 0.0
    %396 = vmatpush.msra.mxu0 0.0
    %397 = vmatpush.msra.mxu0 0.0
    %398 = vmatpush.msra.mxu0 0.0
    %399 = vmatpush.msra.mxu0 0.0
    %400 = vmatpush.msra.mxu0 0.0
    %401 = vmatpush.msra.mxu0 0.0
    %402 = vmatpush.msra.mxu0 0.0
    %403 = vmatpush.msra.mxu0 0.0
    %404 = vmatpush.msra.mxu0 0.0
    %405 = vmatpush.msra.mxu0 0.0
    %406 = vmatpush.msra.mxu0 %v363
    %407 = vmatpush.msra.mxu0 %v362
    %408 = vmatpush.msra.mxu0 %v361
    %409 = vmatpush.msra.mxu0 %v360
    %410 = vmatmul.f32.gmra.mxu0 %v392
    %v411 = vpop.f32.mrf.mxu0
    %v412 = vadd.f32 %v390, %v411
    %413 = vdwg.mxu0
    %v414 = vld [vmem:[%s7] sm:$0x1]
    %v416 = vperm.slane %v414, 0
    %v418 = vadd.f32 %v412, %v416
    %v419 = vld [vmem:[%s219] sm:$0xff]
    %v420 = vxor.u32 %v418, 2147483648
    %v421 = vmul.f32 %v420, 1.442695
    %v422 = vpow.pop %v421
    %v423 = vadd.f32 %v422, 1.0
    %v424 = vrcp.pop %v423
    %v425 = vmul.f32 %v423, %v424
    %v426 = vsub.f32 1.0, %v425
    %v427 = vmul.f32 %v424, %v426
    %v428 = vadd.f32 %v424, %v427
    %vm429 = vweird.f32 %v423
    %vm430 = vweird.f32 %v424
    %vm431 = vmor %vm429, %vm430
    %v432 = vsel %vm431, %v424, %v428
    %v433 = vand.u32 2147483647, %v423
    %vm434 = vcmp.eq.f32.partialorder %v433, 8.507059e+37
    %v435 = vand.u32 %v423, 2147483648
    %v436 = vor.u32 1.1754944e-38, %v435
    %v437 = vsel %vm434, %v436, %v432
    %v438 = vmul.f32 1.0, %v437
    %v439 = vtanh.pop %v418
    %441 = vrot.lane.b32.xlu0 %v419, 32
    %v442 = vpop.permute.xlu0 %441
    %v444 = vmul.f32 %v438, %v442
    %446 = vrot.lane.b32.xlu0 %v439, 64
    %v447 = vpop.permute.xlu0 %446
    %v449 = vmul.f32 %v438, %v447
    %451 = vrot.lane.b32.xlu0 %v449, 32
    %v452 = vpop.permute.xlu0 %451
    %v454 = vadd.f32 %v444, %v452
    %v455 = vtanh.pop %v454
    %457 = vrot.lane.b32.xlu0 %v455, 64
    %v458 = vpop.permute.xlu0 %457
    %v460 = vmul.f32 %v438, %v458
    %462 = vrot.lane.b32.xlu0 %v460, 32
    %v463 = vpop.permute.xlu0 %462
    %465 = vst.msk [vmem:[%s163] sm:$0xff] %vm66, %v463
    %467 = vrot.lane.b32.xlu0 %v454, 96
    %v468 = vpop.permute.xlu0 %467
    %470 = vst.msk [vmem:[%s219] sm:$0xff] %vm66, %v468
    %s471 = scalar_lea.vmem %s0, 16
    %v472 = vld [vmem:[%s471] sm:$0xff]
    %v473 = vld [vmem:[#allocation2] sm:$0xff]
    %v474 = vld [vmem:[%s3] sm:$0xff]
    %v475 = vld [vmem:[%s3 + $0x8] sm:$0xff]
    %v476 = vld [vmem:[%s3 + $0x10] sm:$0xff]
    %v477 = vld [vmem:[%s3 + $0x18] sm:$0xff]
    %v479 = vsel %vm66, %v473, 0
    %481 = vmatpush.msra.mxu0 0.0
    %482 = vmatpush.msra.mxu0 0.0
    %483 = vmatpush.msra.mxu0 0.0
    %484 = vmatpush.msra.mxu0 0.0
    %485 = vmatpush.msra.mxu0 0.0
    %486 = vmatpush.msra.mxu0 0.0
    %487 = vmatpush.msra.mxu0 0.0
    %488 = vmatpush.msra.mxu0 0.0
    %489 = vmatpush.msra.mxu0 0.0
    %490 = vmatpush.msra.mxu0 0.0
    %491 = vmatpush.msra.mxu0 0.0
    %492 = vmatpush.msra.mxu0 0.0
    %493 = vmatpush.msra.mxu0 %v477
    %494 = vmatpush.msra.mxu0 %v476
    %495 = vmatpush.msra.mxu0 %v475
    %496 = vmatpush.msra.mxu0 %v474
    %497 = vmatmul.f32.gmra.mxu0 %v479
    %v498 = vpop.f32.mrf.mxu0
    %v499 = vadd.f32 0.0, %v498
    %500 = vdwg.mxu0
    %v501 = vadd.f32 %v472, %v499
    %v502 = vld [vmem:[%s4] sm:$0x1]
    %v504 = vperm.slane %v502, 0
    %v506 = vadd.f32 %v501, %v504
    %v507 = vld [vmem:[#allocation3] sm:$0xff]
    %v508 = vxor.u32 %v506, 2147483648
    %v509 = vmul.f32 %v508, 1.442695
    %v510 = vpow.pop %v509
    %v511 = vadd.f32 %v510, 1.0
    %v512 = vrcp.pop %v511
    %v513 = vmul.f32 %v511, %v512
    %v514 = vsub.f32 1.0, %v513
    %v515 = vmul.f32 %v512, %v514
    %v516 = vadd.f32 %v512, %v515
    %vm517 = vweird.f32 %v511
    %vm518 = vweird.f32 %v512
    %vm519 = vmor %vm517, %vm518
    %v520 = vsel %vm519, %v512, %v516
    %v521 = vand.u32 2147483647, %v511
    %vm522 = vcmp.eq.f32.partialorder %v521, 8.507059e+37
    %v523 = vand.u32 %v511, 2147483648
    %v524 = vor.u32 1.1754944e-38, %v523
    %v525 = vsel %vm522, %v524, %v520
    %v526 = vmul.f32 1.0, %v525
    %v527 = vtanh.pop %v506
    %529 = vrot.lane.b32.xlu0 %v507, 32
    %v530 = vpop.permute.xlu0 %529
    %v532 = vmul.f32 %v526, %v530
    %534 = vrot.lane.b32.xlu0 %v527, 64
    %v535 = vpop.permute.xlu0 %534
    %v537 = vmul.f32 %v526, %v535
    %539 = vrot.lane.b32.xlu0 %v537, 32
    %v540 = vpop.permute.xlu0 %539
    %v542 = vadd.f32 %v532, %v540
    %v543 = vtanh.pop %v542
    %545 = vrot.lane.b32.xlu0 %v543, 64
    %v546 = vpop.permute.xlu0 %545
    %v548 = vmul.f32 %v526, %v546
    %550 = vrot.lane.b32.xlu0 %v548, 32
    %v551 = vpop.permute.xlu0 %550
    %553 = vst.msk [vmem:[#allocation2] sm:$0xff] %vm66, %v551
    %555 = vrot.lane.b32.xlu0 %v542, 96
    %v556 = vpop.permute.xlu0 %555
    %558 = vst.msk [vmem:[#allocation3] sm:$0xff] %vm66, %v556
    %v559 = vld [vmem:[%s5] sm:$0xff]
    %v560 = vld [vmem:[%s5 + $0x8] sm:$0xff]
    %v561 = vld [vmem:[%s5 + $0x10] sm:$0xff]
    %v562 = vld [vmem:[%s5 + $0x18] sm:$0xff]
    %v563 = vld [vmem:[%s163] sm:$0xff]
    %v564 = vld [vmem:[%s6] sm:$0xff]
    %v565 = vld [vmem:[%s6 + $0x8] sm:$0xff]
    %v566 = vld [vmem:[%s6 + $0x10] sm:$0xff]
    %v567 = vld [vmem:[%s6 + $0x18] sm:$0xff]
    %v569 = vsel %vm66, %v563, 0
    %571 = vmatpush.msra.mxu0 0.0
    %572 = vmatpush.msra.mxu0 0.0
    %573 = vmatpush.msra.mxu0 0.0
    %574 = vmatpush.msra.mxu0 0.0
    %575 = vmatpush.msra.mxu0 0.0
    %576 = vmatpush.msra.mxu0 0.0
    %577 = vmatpush.msra.mxu0 0.0
    %578 = vmatpush.msra.mxu0 0.0
    %579 = vmatpush.msra.mxu0 0.0
    %580 = vmatpush.msra.mxu0 0.0
    %581 = vmatpush.msra.mxu0 0.0
    %582 = vmatpush.msra.mxu0 0.0
    %583 = vmatpush.msra.mxu0 %v567
    %584 = vmatpush.msra.mxu0 %v566
    %585 = vmatpush.msra.mxu0 %v565
    %586 = vmatpush.msra.mxu0 %v564
    %587 = vmatmul.f32.gmra.mxu0 %v569
    %v588 = vpop.f32.mrf.mxu0
    %v589 = vadd.f32 0.0, %v588
    %590 = vdwg.mxu0
    %v591 = vsel %vm66, %v551, 0
    %593 = vmatpush.msra.mxu0 0.0
    %594 = vmatpush.msra.mxu0 0.0
    %595 = vmatpush.msra.mxu0 0.0
    %596 = vmatpush.msra.mxu0 0.0
    %597 = vmatpush.msra.mxu0 0.0
    %598 = vmatpush.msra.mxu0 0.0
    %599 = vmatpush.msra.mxu0 0.0
    %600 = vmatpush.msra.mxu0 0.0
    %601 = vmatpush.msra.mxu0 0.0
    %602 = vmatpush.msra.mxu0 0.0
    %603 = vmatpush.msra.mxu0 0.0
    %604 = vmatpush.msra.mxu0 0.0
    %605 = vmatpush.msra.mxu0 %v562
    %606 = vmatpush.msra.mxu0 %v561
    %607 = vmatpush.msra.mxu0 %v560
    %608 = vmatpush.msra.mxu0 %v559
    %609 = vmatmul.f32.gmra.mxu0 %v591
    %v610 = vpop.f32.mrf.mxu0
    %v611 = vadd.f32 %v589, %v610
    %612 = vdwg.mxu0
    %v613 = vld [vmem:[%s7] sm:$0x1]
    %v615 = vperm.slane %v613, 0
    %v617 = vadd.f32 %v611, %v615
    %v618 = vld [vmem:[%s219] sm:$0xff]
    %v619 = vxor.u32 %v617, 2147483648
    %v620 = vmul.f32 %v619, 1.442695
    %v621 = vpow.pop %v620
    %v622 = vadd.f32 %v621, 1.0
    %v623 = vrcp.pop %v622
    %v624 = vmul.f32 %v622, %v623
    %v625 = vsub.f32 1.0, %v624
    %v626 = vmul.f32 %v623, %v625
    %v627 = vadd.f32 %v623, %v626
    %vm628 = vweird.f32 %v622
    %vm629 = vweird.f32 %v623
    %vm630 = vmor %vm628, %vm629
    %v631 = vsel %vm630, %v623, %v627
    %v632 = vand.u32 2147483647, %v622
    %vm633 = vcmp.eq.f32.partialorder %v632, 8.507059e+37
    %v634 = vand.u32 %v622, 2147483648
    %v635 = vor.u32 1.1754944e-38, %v634
    %v636 = vsel %vm633, %v635, %v631
    %v637 = vmul.f32 1.0, %v636
    %v638 = vtanh.pop %v617
    %640 = vrot.lane.b32.xlu0 %v618, 32
    %v641 = vpop.permute.xlu0 %640
    %v643 = vmul.f32 %v637, %v641
    %645 = vrot.lane.b32.xlu0 %v638, 64
    %v646 = vpop.permute.xlu0 %645
    %v648 = vmul.f32 %v637, %v646
    %650 = vrot.lane.b32.xlu0 %v648, 32
    %v651 = vpop.permute.xlu0 %650
    %v653 = vadd.f32 %v643, %v651
    %v654 = vtanh.pop %v653
    %656 = vrot.lane.b32.xlu0 %v654, 64
    %v657 = vpop.permute.xlu0 %656
    %v659 = vmul.f32 %v637, %v657
    %661 = vrot.lane.b32.xlu0 %v659, 32
    %v662 = vpop.permute.xlu0 %661
    %664 = vst.msk [vmem:[%s163] sm:$0xff] %vm66, %v662
    %666 = vrot.lane.b32.xlu0 %v653, 96
    %v667 = vpop.permute.xlu0 %666
    %669 = vst.msk [vmem:[%s219] sm:$0xff] %vm66, %v667
    %s670 = scalar_lea.vmem %s0, 24
    %v671 = vld [vmem:[%s670] sm:$0xff]
    %v672 = vld [vmem:[#allocation2] sm:$0xff]
    %v673 = vld [vmem:[%s3] sm:$0xff]
    %v674 = vld [vmem:[%s3 + $0x8] sm:$0xff]
    %v675 = vld [vmem:[%s3 + $0x10] sm:$0xff]
    %v676 = vld [vmem:[%s3 + $0x18] sm:$0xff]
    %v678 = vsel %vm66, %v672, 0
    %680 = vmatpush.msra.mxu0 0.0
    %681 = vmatpush.msra.mxu0 0.0
    %682 = vmatpush.msra.mxu0 0.0
    %683 = vmatpush.msra.mxu0 0.0
    %684 = vmatpush.msra.mxu0 0.0
    %685 = vmatpush.msra.mxu0 0.0
    %686 = vmatpush.msra.mxu0 0.0
    %687 = vmatpush.msra.mxu0 0.0
    %688 = vmatpush.msra.mxu0 0.0
    %689 = vmatpush.msra.mxu0 0.0
    %690 = vmatpush.msra.mxu0 0.0
    %691 = vmatpush.msra.mxu0 0.0
    %692 = vmatpush.msra.mxu0 %v676
    %693 = vmatpush.msra.mxu0 %v675
    %694 = vmatpush.msra.mxu0 %v674
    %695 = vmatpush.msra.mxu0 %v673
    %696 = vmatmul.f32.gmra.mxu0 %v678
    %v697 = vpop.f32.mrf.mxu0
    %v698 = vadd.f32 0.0, %v697
    %699 = vdwg.mxu0
    %v700 = vadd.f32 %v671, %v698
    %v701 = vld [vmem:[%s4] sm:$0x1]
    %v703 = vperm.slane %v701, 0
    %v705 = vadd.f32 %v700, %v703
    %v706 = vld [vmem:[#allocation3] sm:$0xff]
    %v707 = vxor.u32 %v705, 2147483648
    %v708 = vmul.f32 %v707, 1.442695
    %v709 = vpow.pop %v708
    %v710 = vadd.f32 %v709, 1.0
    %v711 = vrcp.pop %v710
    %v712 = vmul.f32 %v710, %v711
    %v713 = vsub.f32 1.0, %v712
    %v714 = vmul.f32 %v711, %v713
    %v715 = vadd.f32 %v711, %v714
    %vm716 = vweird.f32 %v710
    %vm717 = vweird.f32 %v711
    %vm718 = vmor %vm716, %vm717
    %v719 = vsel %vm718, %v711, %v715
    %v720 = vand.u32 2147483647, %v710
    %vm721 = vcmp.eq.f32.partialorder %v720, 8.507059e+37
    %v722 = vand.u32 %v710, 2147483648
    %v723 = vor.u32 1.1754944e-38, %v722
    %v724 = vsel %vm721, %v723, %v719
    %v725 = vmul.f32 1.0, %v724
    %v726 = vtanh.pop %v705
    %728 = vrot.lane.b32.xlu0 %v706, 32
    %v729 = vpop.permute.xlu0 %728
    %v731 = vmul.f32 %v725, %v729
    %733 = vrot.lane.b32.xlu0 %v726, 64
    %v734 = vpop.permute.xlu0 %733
    %v736 = vmul.f32 %v725, %v734
    %738 = vrot.lane.b32.xlu0 %v736, 32
    %v739 = vpop.permute.xlu0 %738
    %v741 = vadd.f32 %v731, %v739
    %v742 = vtanh.pop %v741
    %744 = vrot.lane.b32.xlu0 %v742, 64
    %v745 = vpop.permute.xlu0 %744
    %v747 = vmul.f32 %v725, %v745
    %749 = vrot.lane.b32.xlu0 %v747, 32
    %v750 = vpop.permute.xlu0 %749
    %752 = vst.msk [vmem:[#allocation2] sm:$0xff] %vm66, %v750
    %754 = vrot.lane.b32.xlu0 %v741, 96
    %v755 = vpop.permute.xlu0 %754
    %757 = vst.msk [vmem:[#allocation3] sm:$0xff] %vm66, %v755
    %v758 = vld [vmem:[%s5] sm:$0xff]
    %v759 = vld [vmem:[%s5 + $0x8] sm:$0xff]
    %v760 = vld [vmem:[%s5 + $0x10] sm:$0xff]
    %v761 = vld [vmem:[%s5 + $0x18] sm:$0xff]
    %v762 = vld [vmem:[%s163] sm:$0xff]
    %v763 = vld [vmem:[%s6] sm:$0xff]
    %v764 = vld [vmem:[%s6 + $0x8] sm:$0xff]
    %v765 = vld [vmem:[%s6 + $0x10] sm:$0xff]
    %v766 = vld [vmem:[%s6 + $0x18] sm:$0xff]
    %v768 = vsel %vm66, %v762, 0
    %770 = vmatpush.msra.mxu0 0.0
    %771 = vmatpush.msra.mxu0 0.0
    %772 = vmatpush.msra.mxu0 0.0
    %773 = vmatpush.msra.mxu0 0.0
    %774 = vmatpush.msra.mxu0 0.0
    %775 = vmatpush.msra.mxu0 0.0
    %776 = vmatpush.msra.mxu0 0.0
    %777 = vmatpush.msra.mxu0 0.0
    %778 = vmatpush.msra.mxu0 0.0
    %779 = vmatpush.msra.mxu0 0.0
    %780 = vmatpush.msra.mxu0 0.0
    %781 = vmatpush.msra.mxu0 0.0
    %782 = vmatpush.msra.mxu0 %v766
    %783 = vmatpush.msra.mxu0 %v765
    %784 = vmatpush.msra.mxu0 %v764
    %785 = vmatpush.msra.mxu0 %v763
    %786 = vmatmul.f32.gmra.mxu0 %v768
    %v787 = vpop.f32.mrf.mxu0
    %v788 = vadd.f32 0.0, %v787
    %789 = vdwg.mxu0
    %v790 = vsel %vm66, %v750, 0
    %792 = vmatpush.msra.mxu0 0.0
    %793 = vmatpush.msra.mxu0 0.0
    %794 = vmatpush.msra.mxu0 0.0
    %795 = vmatpush.msra.mxu0 0.0
    %796 = vmatpush.msra.mxu0 0.0
    %797 = vmatpush.msra.mxu0 0.0
    %798 = vmatpush.msra.mxu0 0.0
    %799 = vmatpush.msra.mxu0 0.0
    %800 = vmatpush.msra.mxu0 0.0
    %801 = vmatpush.msra.mxu0 0.0
    %802 = vmatpush.msra.mxu0 0.0
    %803 = vmatpush.msra.mxu0 0.0
    %804 = vmatpush.msra.mxu0 %v761
    %805 = vmatpush.msra.mxu0 %v760
    %806 = vmatpush.msra.mxu0 %v759
    %807 = vmatpush.msra.mxu0 %v758
    %808 = vmatmul.f32.gmra.mxu0 %v790
    %v809 = vpop.f32.mrf.mxu0
    %v810 = vadd.f32 %v788, %v809
    %811 = vdwg.mxu0
    %v812 = vld [vmem:[%s7] sm:$0x1]
    %v814 = vperm.slane %v812, 0
    %v816 = vadd.f32 %v810, %v814
    %v817 = vld [vmem:[%s219] sm:$0xff]
    %v818 = vxor.u32 %v816, 2147483648
    %v819 = vmul.f32 %v818, 1.442695
    %v820 = vpow.pop %v819
    %v821 = vadd.f32 %v820, 1.0
    %v822 = vrcp.pop %v821
    %v823 = vmul.f32 %v821, %v822
    %v824 = vsub.f32 1.0, %v823
    %v825 = vmul.f32 %v822, %v824
    %v826 = vadd.f32 %v822, %v825
    %vm827 = vweird.f32 %v821
    %vm828 = vweird.f32 %v822
    %vm829 = vmor %vm827, %vm828
    %v830 = vsel %vm829, %v822, %v826
    %v831 = vand.u32 2147483647, %v821
    %vm832 = vcmp.eq.f32.partialorder %v831, 8.507059e+37
    %v833 = vand.u32 %v821, 2147483648
    %v834 = vor.u32 1.1754944e-38, %v833
    %v835 = vsel %vm832, %v834, %v830
    %v836 = vmul.f32 1.0, %v835
    %v837 = vtanh.pop %v816
    %839 = vrot.lane.b32.xlu0 %v817, 32
    %v840 = vpop.permute.xlu0 %839
    %v842 = vmul.f32 %v836, %v840
    %844 = vrot.lane.b32.xlu0 %v837, 64
    %v845 = vpop.permute.xlu0 %844
    %v847 = vmul.f32 %v836, %v845
    %849 = vrot.lane.b32.xlu0 %v847, 32
    %v850 = vpop.permute.xlu0 %849
    %v852 = vadd.f32 %v842, %v850
    %v853 = vtanh.pop %v852
    %855 = vrot.lane.b32.xlu0 %v853, 64
    %v856 = vpop.permute.xlu0 %855
    %v858 = vmul.f32 %v836, %v856
    %860 = vrot.lane.b32.xlu0 %v858, 32
    %v861 = vpop.permute.xlu0 %860
    %863 = vst.msk [vmem:[%s163] sm:$0xff] %vm66, %v861
    %865 = vrot.lane.b32.xlu0 %v852, 96
    %v866 = vpop.permute.xlu0 %865
    %868 = vst.msk [vmem:[%s219] sm:$0xff] %vm66, %v866
    %s869 = scalar_lea.vmem %s0, 32
    %v870 = vld [vmem:[%s869] sm:$0xff]
    %v871 = vld [vmem:[#allocation2] sm:$0xff]
    %v872 = vld [vmem:[%s3] sm:$0xff]
    %v873 = vld [vmem:[%s3 + $0x8] sm:$0xff]
    %v874 = vld [vmem:[%s3 + $0x10] sm:$0xff]
    %v875 = vld [vmem:[%s3 + $0x18] sm:$0xff]
    %v877 = vsel %vm66, %v871, 0
    %879 = vmatpush.msra.mxu0 0.0
    %880 = vmatpush.msra.mxu0 0.0
    %881 = vmatpush.msra.mxu0 0.0
    %882 = vmatpush.msra.mxu0 0.0
    %883 = vmatpush.msra.mxu0 0.0
    %884 = vmatpush.msra.mxu0 0.0
    %885 = vmatpush.msra.mxu0 0.0
    %886 = vmatpush.msra.mxu0 0.0
    %887 = vmatpush.msra.mxu0 0.0
    %888 = vmatpush.msra.mxu0 0.0
    %889 = vmatpush.msra.mxu0 0.0
    %890 = vmatpush.msra.mxu0 0.0
    %891 = vmatpush.msra.mxu0 %v875
    %892 = vmatpush.msra.mxu0 %v874
    %893 = vmatpush.msra.mxu0 %v873
    %894 = vmatpush.msra.mxu0 %v872
    %895 = vmatmul.f32.gmra.mxu0 %v877
    %v896 = vpop.f32.mrf.mxu0
    %v897 = vadd.f32 0.0, %v896
    %898 = vdwg.mxu0
    %v899 = vadd.f32 %v870, %v897
    %v900 = vld [vmem:[%s4] sm:$0x1]
    %v902 = vperm.slane %v900, 0
    %v904 = vadd.f32 %v899, %v902
    %v905 = vld [vmem:[#allocation3] sm:$0xff]
    %v906 = vxor.u32 %v904, 2147483648
    %v907 = vmul.f32 %v906, 1.442695
    %v908 = vpow.pop %v907
    %v909 = vadd.f32 %v908, 1.0
    %v910 = vrcp.pop %v909
    %v911 = vmul.f32 %v909, %v910
    %v912 = vsub.f32 1.0, %v911
    %v913 = vmul.f32 %v910, %v912
    %v914 = vadd.f32 %v910, %v913
    %vm915 = vweird.f32 %v909
    %vm916 = vweird.f32 %v910
    %vm917 = vmor %vm915, %vm916
    %v918 = vsel %vm917, %v910, %v914
    %v919 = vand.u32 2147483647, %v909
    %vm920 = vcmp.eq.f32.partialorder %v919, 8.507059e+37
    %v921 = vand.u32 %v909, 2147483648
    %v922 = vor.u32 1.1754944e-38, %v921
    %v923 = vsel %vm920, %v922, %v918
    %v924 = vmul.f32 1.0, %v923
    %v925 = vtanh.pop %v904
    %927 = vrot.lane.b32.xlu0 %v905, 32
    %v928 = vpop.permute.xlu0 %927
    %v930 = vmul.f32 %v924, %v928
    %932 = vrot.lane.b32.xlu0 %v925, 64
    %v933 = vpop.permute.xlu0 %932
    %v935 = vmul.f32 %v924, %v933
    %937 = vrot.lane.b32.xlu0 %v935, 32
    %v938 = vpop.permute.xlu0 %937
    %v940 = vadd.f32 %v930, %v938
    %v941 = vtanh.pop %v940
    %943 = vrot.lane.b32.xlu0 %v941, 64
    %v944 = vpop.permute.xlu0 %943
    %v946 = vmul.f32 %v924, %v944
    %948 = vrot.lane.b32.xlu0 %v946, 32
    %v949 = vpop.permute.xlu0 %948
    %951 = vst.msk [vmem:[#allocation2] sm:$0xff] %vm66, %v949
    %953 = vrot.lane.b32.xlu0 %v940, 96
    %v954 = vpop.permute.xlu0 %953
    %956 = vst.msk [vmem:[#allocation3] sm:$0xff] %vm66, %v954
    %v957 = vld [vmem:[%s5] sm:$0xff]
    %v958 = vld [vmem:[%s5 + $0x8] sm:$0xff]
    %v959 = vld [vmem:[%s5 + $0x10] sm:$0xff]
    %v960 = vld [vmem:[%s5 + $0x18] sm:$0xff]
    %v961 = vld [vmem:[%s163] sm:$0xff]
    %v962 = vld [vmem:[%s6] sm:$0xff]
    %v963 = vld [vmem:[%s6 + $0x8] sm:$0xff]
    %v964 = vld [vmem:[%s6 + $0x10] sm:$0xff]
    %v965 = vld [vmem:[%s6 + $0x18] sm:$0xff]
    %v967 = vsel %vm66, %v961, 0
    %969 = vmatpush.msra.mxu0 0.0
    %970 = vmatpush.msra.mxu0 0.0
    %971 = vmatpush.msra.mxu0 0.0
    %972 = vmatpush.msra.mxu0 0.0
    %973 = vmatpush.msra.mxu0 0.0
    %974 = vmatpush.msra.mxu0 0.0
    %975 = vmatpush.msra.mxu0 0.0
    %976 = vmatpush.msra.mxu0 0.0
    %977 = vmatpush.msra.mxu0 0.0
    %978 = vmatpush.msra.mxu0 0.0
    %979 = vmatpush.msra.mxu0 0.0
    %980 = vmatpush.msra.mxu0 0.0
    %981 = vmatpush.msra.mxu0 %v965
    %982 = vmatpush.msra.mxu0 %v964
    %983 = vmatpush.msra.mxu0 %v963
    %984 = vmatpush.msra.mxu0 %v962
    %985 = vmatmul.f32.gmra.mxu0 %v967
    %v986 = vpop.f32.mrf.mxu0
    %v987 = vadd.f32 0.0, %v986
    %988 = vdwg.mxu0
    %v989 = vsel %vm66, %v949, 0
    %991 = vmatpush.msra.mxu0 0.0
    %992 = vmatpush.msra.mxu0 0.0
    %993 = vmatpush.msra.mxu0 0.0
    %994 = vmatpush.msra.mxu0 0.0
    %995 = vmatpush.msra.mxu0 0.0
    %996 = vmatpush.msra.mxu0 0.0
    %997 = vmatpush.msra.mxu0 0.0
    %998 = vmatpush.msra.mxu0 0.0
    %999 = vmatpush.msra.mxu0 0.0
    %1000 = vmatpush.msra.mxu0 0.0
    %1001 = vmatpush.msra.mxu0 0.0
    %1002 = vmatpush.msra.mxu0 0.0
    %1003 = vmatpush.msra.mxu0 %v960
    %1004 = vmatpush.msra.mxu0 %v959
    %1005 = vmatpush.msra.mxu0 %v958
    %1006 = vmatpush.msra.mxu0 %v957
    %1007 = vmatmul.f32.gmra.mxu0 %v989
    %v1008 = vpop.f32.mrf.mxu0
    %v1009 = vadd.f32 %v987, %v1008
    %1010 = vdwg.mxu0
    %v1011 = vld [vmem:[%s7] sm:$0x1]
    %v1013 = vperm.slane %v1011, 0
    %v1015 = vadd.f32 %v1009, %v1013
    %v1016 = vld [vmem:[%s219] sm:$0xff]
    %v1017 = vxor.u32 %v1015, 2147483648
    %v1018 = vmul.f32 %v1017, 1.442695
    %v1019 = vpow.pop %v1018
    %v1020 = vadd.f32 %v1019, 1.0
    %v1021 = vrcp.pop %v1020
    %v1022 = vmul.f32 %v1020, %v1021
    %v1023 = vsub.f32 1.0, %v1022
    %v1024 = vmul.f32 %v1021, %v1023
    %v1025 = vadd.f32 %v1021, %v1024
    %vm1026 = vweird.f32 %v1020
    %vm1027 = vweird.f32 %v1021
    %vm1028 = vmor %vm1026, %vm1027
    %v1029 = vsel %vm1028, %v1021, %v1025
    %v1030 = vand.u32 2147483647, %v1020
    %vm1031 = vcmp.eq.f32.partialorder %v1030, 8.507059e+37
    %v1032 = vand.u32 %v1020, 2147483648
    %v1033 = vor.u32 1.1754944e-38, %v1032
    %v1034 = vsel %vm1031, %v1033, %v1029
    %v1035 = vmul.f32 1.0, %v1034
    %v1036 = vtanh.pop %v1015
    %1038 = vrot.lane.b32.xlu0 %v1016, 32
    %v1039 = vpop.permute.xlu0 %1038
    %v1041 = vmul.f32 %v1035, %v1039
    %1043 = vrot.lane.b32.xlu0 %v1036, 64
    %v1044 = vpop.permute.xlu0 %1043
    %v1046 = vmul.f32 %v1035, %v1044
    %1048 = vrot.lane.b32.xlu0 %v1046, 32
    %v1049 = vpop.permute.xlu0 %1048
    %v1051 = vadd.f32 %v1041, %v1049
    %v1052 = vtanh.pop %v1051
    %1054 = vrot.lane.b32.xlu0 %v1052, 64
    %v1055 = vpop.permute.xlu0 %1054
    %v1057 = vmul.f32 %v1035, %v1055
    %1059 = vrot.lane.b32.xlu0 %v1057, 32
    %v1060 = vpop.permute.xlu0 %1059
    %1062 = vst.msk [vmem:[%s163] sm:$0xff] %vm66, %v1060
    %1064 = vrot.lane.b32.xlu0 %v1051, 96
    %v1065 = vpop.permute.xlu0 %1064
    %1067 = vst.msk [vmem:[%s219] sm:$0xff] %vm66, %v1065
    %s1068 = scalar_lea.vmem %s0, 40
    %v1069 = vld [vmem:[%s1068] sm:$0xff]
    %v1070 = vld [vmem:[#allocation2] sm:$0xff]
    %v1071 = vld [vmem:[%s3] sm:$0xff]
    %v1072 = vld [vmem:[%s3 + $0x8] sm:$0xff]
    %v1073 = vld [vmem:[%s3 + $0x10] sm:$0xff]
    %v1074 = vld [vmem:[%s3 + $0x18] sm:$0xff]
    %v1076 = vsel %vm66, %v1070, 0
    %1078 = vmatpush.msra.mxu0 0.0
    %1079 = vmatpush.msra.mxu0 0.0
    %1080 = vmatpush.msra.mxu0 0.0
    %1081 = vmatpush.msra.mxu0 0.0
    %1082 = vmatpush.msra.mxu0 0.0
    %1083 = vmatpush.msra.mxu0 0.0
    %1084 = vmatpush.msra.mxu0 0.0
    %1085 = vmatpush.msra.mxu0 0.0
    %1086 = vmatpush.msra.mxu0 0.0
    %1087 = vmatpush.msra.mxu0 0.0
    %1088 = vmatpush.msra.mxu0 0.0
    %1089 = vmatpush.msra.mxu0 0.0
    %1090 = vmatpush.msra.mxu0 %v1074
    %1091 = vmatpush.msra.mxu0 %v1073
    %1092 = vmatpush.msra.mxu0 %v1072
    %1093 = vmatpush.msra.mxu0 %v1071
    %1094 = vmatmul.f32.gmra.mxu0 %v1076
    %v1095 = vpop.f32.mrf.mxu0
    %v1096 = vadd.f32 0.0, %v1095
    %1097 = vdwg.mxu0
    %v1098 = vadd.f32 %v1069, %v1096
    %v1099 = vld [vmem:[%s4] sm:$0x1]
    %v1101 = vperm.slane %v1099, 0
    %v1103 = vadd.f32 %v1098, %v1101
    %v1104 = vld [vmem:[#allocation3] sm:$0xff]
    %v1105 = vxor.u32 %v1103, 2147483648
    %v1106 = vmul.f32 %v1105, 1.442695
    %v1107 = vpow.pop %v1106
    %v1108 = vadd.f32 %v1107, 1.0
    %v1109 = vrcp.pop %v1108
    %v1110 = vmul.f32 %v1108, %v1109
    %v1111 = vsub.f32 1.0, %v1110
    %v1112 = vmul.f32 %v1109, %v1111
    %v1113 = vadd.f32 %v1109, %v1112
    %vm1114 = vweird.f32 %v1108
    %vm1115 = vweird.f32 %v1109
    %vm1116 = vmor %vm1114, %vm1115
    %v1117 = vsel %vm1116, %v1109, %v1113
    %v1118 = vand.u32 2147483647, %v1108
    %vm1119 = vcmp.eq.f32.partialorder %v1118, 8.507059e+37
    %v1120 = vand.u32 %v1108, 2147483648
    %v1121 = vor.u32 1.1754944e-38, %v1120
    %v1122 = vsel %vm1119, %v1121, %v1117
    %v1123 = vmul.f32 1.0, %v1122
    %v1124 = vtanh.pop %v1103
    %1126 = vrot.lane.b32.xlu0 %v1104, 32
    %v1127 = vpop.permute.xlu0 %1126
    %v1129 = vmul.f32 %v1123, %v1127
    %1131 = vrot.lane.b32.xlu0 %v1124, 64
    %v1132 = vpop.permute.xlu0 %1131
    %v1134 = vmul.f32 %v1123, %v1132
    %1136 = vrot.lane.b32.xlu0 %v1134, 32
    %v1137 = vpop.permute.xlu0 %1136
    %v1139 = vadd.f32 %v1129, %v1137
    %v1140 = vtanh.pop %v1139
    %1142 = vrot.lane.b32.xlu0 %v1140, 64
    %v1143 = vpop.permute.xlu0 %1142
    %v1145 = vmul.f32 %v1123, %v1143
    %1147 = vrot.lane.b32.xlu0 %v1145, 32
    %v1148 = vpop.permute.xlu0 %1147
    %1150 = vst.msk [vmem:[#allocation2] sm:$0xff] %vm66, %v1148
    %1152 = vrot.lane.b32.xlu0 %v1139, 96
    %v1153 = vpop.permute.xlu0 %1152
    %1155 = vst.msk [vmem:[#allocation3] sm:$0xff] %vm66, %v1153
    %v1156 = vld [vmem:[%s5] sm:$0xff]
    %v1157 = vld [vmem:[%s5 + $0x8] sm:$0xff]
    %v1158 = vld [vmem:[%s5 + $0x10] sm:$0xff]
    %v1159 = vld [vmem:[%s5 + $0x18] sm:$0xff]
    %v1160 = vld [vmem:[%s163] sm:$0xff]
    %v1161 = vld [vmem:[%s6] sm:$0xff]
    %v1162 = vld [vmem:[%s6 + $0x8] sm:$0xff]
    %v1163 = vld [vmem:[%s6 + $0x10] sm:$0xff]
    %v1164 = vld [vmem:[%s6 + $0x18] sm:$0xff]
    %v1166 = vsel %vm66, %v1160, 0
    %1168 = vmatpush.msra.mxu0 0.0
    %1169 = vmatpush.msra.mxu0 0.0
    %1170 = vmatpush.msra.mxu0 0.0
    %1171 = vmatpush.msra.mxu0 0.0
    %1172 = vmatpush.msra.mxu0 0.0
    %1173 = vmatpush.msra.mxu0 0.0
    %1174 = vmatpush.msra.mxu0 0.0
    %1175 = vmatpush.msra.mxu0 0.0
    %1176 = vmatpush.msra.mxu0 0.0
    %1177 = vmatpush.msra.mxu0 0.0
    %1178 = vmatpush.msra.mxu0 0.0
    %1179 = vmatpush.msra.mxu0 0.0
    %1180 = vmatpush.msra.mxu0 %v1164
    %1181 = vmatpush.msra.mxu0 %v1163
    %1182 = vmatpush.msra.mxu0 %v1162
    %1183 = vmatpush.msra.mxu0 %v1161
    %1184 = vmatmul.f32.gmra.mxu0 %v1166
    %v1185 = vpop.f32.mrf.mxu0
    %v1186 = vadd.f32 0.0, %v1185
    %1187 = vdwg.mxu0
    %v1188 = vsel %vm66, %v1148, 0
    %1190 = vmatpush.msra.mxu0 0.0
    %1191 = vmatpush.msra.mxu0 0.0
    %1192 = vmatpush.msra.mxu0 0.0
    %1193 = vmatpush.msra.mxu0 0.0
    %1194 = vmatpush.msra.mxu0 0.0
    %1195 = vmatpush.msra.mxu0 0.0
    %1196 = vmatpush.msra.mxu0 0.0
    %1197 = vmatpush.msra.mxu0 0.0
    %1198 = vmatpush.msra.mxu0 0.0
    %1199 = vmatpush.msra.mxu0 0.0
    %1200 = vmatpush.msra.mxu0 0.0
    %1201 = vmatpush.msra.mxu0 0.0
    %1202 = vmatpush.msra.mxu0 %v1159
    %1203 = vmatpush.msra.mxu0 %v1158
    %1204 = vmatpush.msra.mxu0 %v1157
    %1205 = vmatpush.msra.mxu0 %v1156
    %1206 = vmatmul.f32.gmra.mxu0 %v1188
    %v1207 = vpop.f32.mrf.mxu0
    %v1208 = vadd.f32 %v1186, %v1207
    %1209 = vdwg.mxu0
    %v1210 = vld [vmem:[%s7] sm:$0x1]
    %v1212 = vperm.slane %v1210, 0
    %v1214 = vadd.f32 %v1208, %v1212
    %v1215 = vld [vmem:[%s219] sm:$0xff]
    %v1216 = vxor.u32 %v1214, 2147483648
    %v1217 = vmul.f32 %v1216, 1.442695
    %v1218 = vpow.pop %v1217
    %v1219 = vadd.f32 %v1218, 1.0
    %v1220 = vrcp.pop %v1219
    %v1221 = vmul.f32 %v1219, %v1220
    %v1222 = vsub.f32 1.0, %v1221
    %v1223 = vmul.f32 %v1220, %v1222
    %v1224 = vadd.f32 %v1220, %v1223
    %vm1225 = vweird.f32 %v1219
    %vm1226 = vweird.f32 %v1220
    %vm1227 = vmor %vm1225, %vm1226
    %v1228 = vsel %vm1227, %v1220, %v1224
    %v1229 = vand.u32 2147483647, %v1219
    %vm1230 = vcmp.eq.f32.partialorder %v1229, 8.507059e+37
    %v1231 = vand.u32 %v1219, 2147483648
    %v1232 = vor.u32 1.1754944e-38, %v1231
    %v1233 = vsel %vm1230, %v1232, %v1228
    %v1234 = vmul.f32 1.0, %v1233
    %v1235 = vtanh.pop %v1214
    %1237 = vrot.lane.b32.xlu0 %v1215, 32
    %v1238 = vpop.permute.xlu0 %1237
    %v1240 = vmul.f32 %v1234, %v1238
    %1242 = vrot.lane.b32.xlu0 %v1235, 64
    %v1243 = vpop.permute.xlu0 %1242
    %v1245 = vmul.f32 %v1234, %v1243
    %1247 = vrot.lane.b32.xlu0 %v1245, 32
    %v1248 = vpop.permute.xlu0 %1247
    %v1250 = vadd.f32 %v1240, %v1248
    %v1251 = vtanh.pop %v1250
    %1253 = vrot.lane.b32.xlu0 %v1251, 64
    %v1254 = vpop.permute.xlu0 %1253
    %v1256 = vmul.f32 %v1234, %v1254
    %1258 = vrot.lane.b32.xlu0 %v1256, 32
    %v1259 = vpop.permute.xlu0 %1258
    %1261 = vst.msk [vmem:[%s163] sm:$0xff] %vm66, %v1259
    %1263 = vrot.lane.b32.xlu0 %v1250, 96
    %v1264 = vpop.permute.xlu0 %1263
    %1266 = vst.msk [vmem:[%s219] sm:$0xff] %vm66, %v1264
    %s1267 = scalar_lea.vmem %s0, 48
    %v1268 = vld [vmem:[%s1267] sm:$0xff]
    %v1269 = vld [vmem:[#allocation2] sm:$0xff]
    %v1270 = vld [vmem:[%s3] sm:$0xff]
    %v1271 = vld [vmem:[%s3 + $0x8] sm:$0xff]
    %v1272 = vld [vmem:[%s3 + $0x10] sm:$0xff]
    %v1273 = vld [vmem:[%s3 + $0x18] sm:$0xff]
    %v1275 = vsel %vm66, %v1269, 0
    %1277 = vmatpush.msra.mxu0 0.0
    %1278 = vmatpush.msra.mxu0 0.0
    %1279 = vmatpush.msra.mxu0 0.0
    %1280 = vmatpush.msra.mxu0 0.0
    %1281 = vmatpush.msra.mxu0 0.0
    %1282 = vmatpush.msra.mxu0 0.0
    %1283 = vmatpush.msra.mxu0 0.0
    %1284 = vmatpush.msra.mxu0 0.0
    %1285 = vmatpush.msra.mxu0 0.0
    %1286 = vmatpush.msra.mxu0 0.0
    %1287 = vmatpush.msra.mxu0 0.0
    %1288 = vmatpush.msra.mxu0 0.0
    %1289 = vmatpush.msra.mxu0 %v1273
    %1290 = vmatpush.msra.mxu0 %v1272
    %1291 = vmatpush.msra.mxu0 %v1271
    %1292 = vmatpush.msra.mxu0 %v1270
    %1293 = vmatmul.f32.gmra.mxu0 %v1275
    %v1294 = vpop.f32.mrf.mxu0
    %v1295 = vadd.f32 0.0, %v1294
    %1296 = vdwg.mxu0
    %v1297 = vadd.f32 %v1268, %v1295
    %v1298 = vld [vmem:[%s4] sm:$0x1]
    %v1300 = vperm.slane %v1298, 0
    %v1302 = vadd.f32 %v1297, %v1300
    %v1303 = vld [vmem:[#allocation3] sm:$0xff]
    %v1304 = vxor.u32 %v1302, 2147483648
    %v1305 = vmul.f32 %v1304, 1.442695
    %v1306 = vpow.pop %v1305
    %v1307 = vadd.f32 %v1306, 1.0
    %v1308 = vrcp.pop %v1307
    %v1309 = vmul.f32 %v1307, %v1308
    %v1310 = vsub.f32 1.0, %v1309
    %v1311 = vmul.f32 %v1308, %v1310
    %v1312 = vadd.f32 %v1308, %v1311
    %vm1313 = vweird.f32 %v1307
    %vm1314 = vweird.f32 %v1308
    %vm1315 = vmor %vm1313, %vm1314
    %v1316 = vsel %vm1315, %v1308, %v1312
    %v1317 = vand.u32 2147483647, %v1307
    %vm1318 = vcmp.eq.f32.partialorder %v1317, 8.507059e+37
    %v1319 = vand.u32 %v1307, 2147483648
    %v1320 = vor.u32 1.1754944e-38, %v1319
    %v1321 = vsel %vm1318, %v1320, %v1316
    %v1322 = vmul.f32 1.0, %v1321
    %v1323 = vtanh.pop %v1302
    %1325 = vrot.lane.b32.xlu0 %v1303, 32
    %v1326 = vpop.permute.xlu0 %1325
    %v1328 = vmul.f32 %v1322, %v1326
    %1330 = vrot.lane.b32.xlu0 %v1323, 64
    %v1331 = vpop.permute.xlu0 %1330
    %v1333 = vmul.f32 %v1322, %v1331
    %1335 = vrot.lane.b32.xlu0 %v1333, 32
    %v1336 = vpop.permute.xlu0 %1335
    %v1338 = vadd.f32 %v1328, %v1336
    %v1339 = vtanh.pop %v1338
    %1341 = vrot.lane.b32.xlu0 %v1339, 64
    %v1342 = vpop.permute.xlu0 %1341
    %v1344 = vmul.f32 %v1322, %v1342
    %1346 = vrot.lane.b32.xlu0 %v1344, 32
    %v1347 = vpop.permute.xlu0 %1346
    %1349 = vst.msk [vmem:[#allocation2] sm:$0xff] %vm66, %v1347
    %1351 = vrot.lane.b32.xlu0 %v1338, 96
    %v1352 = vpop.permute.xlu0 %1351
    %1354 = vst.msk [vmem:[#allocation3] sm:$0xff] %vm66, %v1352
    %v1355 = vld [vmem:[%s5] sm:$0xff]
    %v1356 = vld [vmem:[%s5 + $0x8] sm:$0xff]
    %v1357 = vld [vmem:[%s5 + $0x10] sm:$0xff]
    %v1358 = vld [vmem:[%s5 + $0x18] sm:$0xff]
    %v1359 = vld [vmem:[%s163] sm:$0xff]
    %v1360 = vld [vmem:[%s6] sm:$0xff]
    %v1361 = vld [vmem:[%s6 + $0x8] sm:$0xff]
    %v1362 = vld [vmem:[%s6 + $0x10] sm:$0xff]
    %v1363 = vld [vmem:[%s6 + $0x18] sm:$0xff]
    %v1365 = vsel %vm66, %v1359, 0
    %1367 = vmatpush.msra.mxu0 0.0
    %1368 = vmatpush.msra.mxu0 0.0
    %1369 = vmatpush.msra.mxu0 0.0
    %1370 = vmatpush.msra.mxu0 0.0
    %1371 = vmatpush.msra.mxu0 0.0
    %1372 = vmatpush.msra.mxu0 0.0
    %1373 = vmatpush.msra.mxu0 0.0
    %1374 = vmatpush.msra.mxu0 0.0
    %1375 = vmatpush.msra.mxu0 0.0
    %1376 = vmatpush.msra.mxu0 0.0
    %1377 = vmatpush.msra.mxu0 0.0
    %1378 = vmatpush.msra.mxu0 0.0
    %1379 = vmatpush.msra.mxu0 %v1363
    %1380 = vmatpush.msra.mxu0 %v1362
    %1381 = vmatpush.msra.mxu0 %v1361
    %1382 = vmatpush.msra.mxu0 %v1360
    %1383 = vmatmul.f32.gmra.mxu0 %v1365
    %v1384 = vpop.f32.mrf.mxu0
    %v1385 = vadd.f32 0.0, %v1384
    %1386 = vdwg.mxu0
    %v1387 = vsel %vm66, %v1347, 0
    %1389 = vmatpush.msra.mxu0 0.0
    %1390 = vmatpush.msra.mxu0 0.0
    %1391 = vmatpush.msra.mxu0 0.0
    %1392 = vmatpush.msra.mxu0 0.0
    %1393 = vmatpush.msra.mxu0 0.0
    %1394 = vmatpush.msra.mxu0 0.0
    %1395 = vmatpush.msra.mxu0 0.0
    %1396 = vmatpush.msra.mxu0 0.0
    %1397 = vmatpush.msra.mxu0 0.0
    %1398 = vmatpush.msra.mxu0 0.0
    %1399 = vmatpush.msra.mxu0 0.0
    %1400 = vmatpush.msra.mxu0 0.0
    %1401 = vmatpush.msra.mxu0 %v1358
    %1402 = vmatpush.msra.mxu0 %v1357
    %1403 = vmatpush.msra.mxu0 %v1356
    %1404 = vmatpush.msra.mxu0 %v1355
    %1405 = vmatmul.f32.gmra.mxu0 %v1387
    %v1406 = vpop.f32.mrf.mxu0
    %v1407 = vadd.f32 %v1385, %v1406
    %1408 = vdwg.mxu0
    %v1409 = vld [vmem:[%s7] sm:$0x1]
    %v1411 = vperm.slane %v1409, 0
    %v1413 = vadd.f32 %v1407, %v1411
    %v1414 = vld [vmem:[%s219] sm:$0xff]
    %v1415 = vxor.u32 %v1413, 2147483648
    %v1416 = vmul.f32 %v1415, 1.442695
    %v1417 = vpow.pop %v1416
    %v1418 = vadd.f32 %v1417, 1.0
    %v1419 = vrcp.pop %v1418
    %v1420 = vmul.f32 %v1418, %v1419
    %v1421 = vsub.f32 1.0, %v1420
    %v1422 = vmul.f32 %v1419, %v1421
    %v1423 = vadd.f32 %v1419, %v1422
    %vm1424 = vweird.f32 %v1418
    %vm1425 = vweird.f32 %v1419
    %vm1426 = vmor %vm1424, %vm1425
    %v1427 = vsel %vm1426, %v1419, %v1423
    %v1428 = vand.u32 2147483647, %v1418
    %vm1429 = vcmp.eq.f32.partialorder %v1428, 8.507059e+37
    %v1430 = vand.u32 %v1418, 2147483648
    %v1431 = vor.u32 1.1754944e-38, %v1430
    %v1432 = vsel %vm1429, %v1431, %v1427
    %v1433 = vmul.f32 1.0, %v1432
    %v1434 = vtanh.pop %v1413
    %1436 = vrot.lane.b32.xlu0 %v1414, 32
    %v1437 = vpop.permute.xlu0 %1436
    %v1439 = vmul.f32 %v1433, %v1437
    %1441 = vrot.lane.b32.xlu0 %v1434, 64
    %v1442 = vpop.permute.xlu0 %1441
    %v1444 = vmul.f32 %v1433, %v1442
    %1446 = vrot.lane.b32.xlu0 %v1444, 32
    %v1447 = vpop.permute.xlu0 %1446
    %v1449 = vadd.f32 %v1439, %v1447
    %v1450 = vtanh.pop %v1449
    %1452 = vrot.lane.b32.xlu0 %v1450, 64
    %v1453 = vpop.permute.xlu0 %1452
    %v1455 = vmul.f32 %v1433, %v1453
    %1457 = vrot.lane.b32.xlu0 %v1455, 32
    %v1458 = vpop.permute.xlu0 %1457
    %1460 = vst.msk [vmem:[%s163] sm:$0xff] %vm66, %v1458
    %1462 = vrot.lane.b32.xlu0 %v1449, 96
    %v1463 = vpop.permute.xlu0 %1462
    %1465 = vst.msk [vmem:[%s219] sm:$0xff] %vm66, %v1463
    %v1466 = vld [vmem:[%s1] sm:$0xff]
    %1467 = vst [vmem:[#allocation4] sm:$0xff] %v1466
    %v1468 = vlaneseq
    %v1469 = vand.u32 %v1468, 127
    %v1470 = vld [vmem:[#allocation4] sm:$0xff]
    %v1471 = vld [vmem:[#allocation2] sm:$0xff]
    %v1472 = vld [vmem:[%s8] sm:$0xff]
    %v1473 = vld [vmem:[%s8 + $0x8] sm:$0xff]
    %v1474 = vld [vmem:[%s8 + $0x10] sm:$0xff]
    %v1475 = vld [vmem:[%s8 + $0x18] sm:$0xff]
    %v1477 = vsel %vm66, %v1471, 0
    %1479 = vmatpush.msra.mxu0 0.0
    %1480 = vmatpush.msra.mxu0 0.0
    %1481 = vmatpush.msra.mxu0 0.0
    %1482 = vmatpush.msra.mxu0 0.0
    %1483 = vmatpush.msra.mxu0 0.0
    %1484 = vmatpush.msra.mxu0 0.0
    %1485 = vmatpush.msra.mxu0 0.0
    %1486 = vmatpush.msra.mxu0 0.0
    %1487 = vmatpush.msra.mxu0 0.0
    %1488 = vmatpush.msra.mxu0 0.0
    %1489 = vmatpush.msra.mxu0 0.0
    %1490 = vmatpush.msra.mxu0 0.0
    %1491 = vmatpush.msra.mxu0 %v1475
    %1492 = vmatpush.msra.mxu0 %v1474
    %1493 = vmatpush.msra.mxu0 %v1473
    %1494 = vmatpush.msra.mxu0 %v1472
    %1495 = vmatmul.f32.gmra.mxu0 %v1477
    %v1496 = vpop.f32.mrf.mxu0
    %v1497 = vadd.f32 0.0, %v1496
    %1498 = vdwg.mxu0
    %v1499 = vadd.f32 %v1470, %v1497
    %v1500 = vld [vmem:[%s9] sm:$0x1]
    %v1502 = vperm.slane %v1500, 0
    %v1504 = vadd.f32 %v1499, %v1502
    %v1505 = vld [vmem:[#allocation3] sm:$0xff]
    %v1506 = vxor.u32 %v1504, 2147483648
    %v1507 = vmul.f32 %v1506, 1.442695
    %v1508 = vpow.pop %v1507
    %v1509 = vadd.f32 %v1508, 1.0
    %v1510 = vrcp.pop %v1509
    %v1511 = vmul.f32 %v1509, %v1510
    %v1512 = vsub.f32 1.0, %v1511
    %v1513 = vmul.f32 %v1510, %v1512
    %v1514 = vadd.f32 %v1510, %v1513
    %vm1515 = vweird.f32 %v1509
    %vm1516 = vweird.f32 %v1510
    %vm1517 = vmor %vm1515, %vm1516
    %v1518 = vsel %vm1517, %v1510, %v1514
    %v1519 = vand.u32 2147483647, %v1509
    %vm1520 = vcmp.eq.f32.partialorder %v1519, 8.507059e+37
    %v1521 = vand.u32 %v1509, 2147483648
    %v1522 = vor.u32 1.1754944e-38, %v1521
    %v1523 = vsel %vm1520, %v1522, %v1518
    %v1524 = vmul.f32 1.0, %v1523
    %v1525 = vtanh.pop %v1504
    %1527 = vrot.lane.b32.xlu0 %v1505, 32
    %v1528 = vpop.permute.xlu0 %1527
    %v1530 = vmul.f32 %v1524, %v1528
    %1532 = vrot.lane.b32.xlu0 %v1525, 64
    %v1533 = vpop.permute.xlu0 %1532
    %v1535 = vmul.f32 %v1524, %v1533
    %1537 = vrot.lane.b32.xlu0 %v1535, 32
    %v1538 = vpop.permute.xlu0 %1537
    %v1540 = vadd.f32 %v1530, %v1538
    %v1541 = vtanh.pop %v1540
    %1543 = vrot.lane.b32.xlu0 %v1541, 64
    %v1544 = vpop.permute.xlu0 %1543
    %v1546 = vmul.f32 %v1524, %v1544
    %1548 = vrot.lane.b32.xlu0 %v1546, 32
    %v1549 = vpop.permute.xlu0 %1548
    %1551 = vst.msk [vmem:[#allocation2] sm:$0xff] %vm66, %v1549
    %1553 = vrot.lane.b32.xlu0 %v1540, 96
    %v1554 = vpop.permute.xlu0 %1553
    %1556 = vst.msk [vmem:[#allocation3] sm:$0xff] %vm66, %v1554
    %v1557 = vld [vmem:[%s10] sm:$0xff]
    %v1558 = vld [vmem:[%s10 + $0x8] sm:$0xff]
    %v1559 = vld [vmem:[%s10 + $0x10] sm:$0xff]
    %v1560 = vld [vmem:[%s10 + $0x18] sm:$0xff]
    %v1561 = vld [vmem:[%s163] sm:$0xff]
    %v1562 = vld [vmem:[%s11] sm:$0xff]
    %v1563 = vld [vmem:[%s11 + $0x8] sm:$0xff]
    %v1564 = vld [vmem:[%s11 + $0x10] sm:$0xff]
    %v1565 = vld [vmem:[%s11 + $0x18] sm:$0xff]
    %v1567 = vsel %vm66, %v1561, 0
    %1569 = vmatpush.msra.mxu0 0.0
    %1570 = vmatpush.msra.mxu0 0.0
    %1571 = vmatpush.msra.mxu0 0.0
    %1572 = vmatpush.msra.mxu0 0.0
    %1573 = vmatpush.msra.mxu0 0.0
    %1574 = vmatpush.msra.mxu0 0.0
    %1575 = vmatpush.msra.mxu0 0.0
    %1576 = vmatpush.msra.mxu0 0.0
    %1577 = vmatpush.msra.mxu0 0.0
    %1578 = vmatpush.msra.mxu0 0.0
    %1579 = vmatpush.msra.mxu0 0.0
    %1580 = vmatpush.msra.mxu0 0.0
    %1581 = vmatpush.msra.mxu0 %v1565
    %1582 = vmatpush.msra.mxu0 %v1564
    %1583 = vmatpush.msra.mxu0 %v1563
    %1584 = vmatpush.msra.mxu0 %v1562
    %1585 = vmatmul.f32.gmra.mxu0 %v1567
    %v1586 = vpop.f32.mrf.mxu0
    %v1587 = vadd.f32 0.0, %v1586
    %1588 = vdwg.mxu0
    %v1589 = vsel %vm66, %v1549, 0
    %1591 = vmatpush.msra.mxu0 0.0
    %1592 = vmatpush.msra.mxu0 0.0
    %1593 = vmatpush.msra.mxu0 0.0
    %1594 = vmatpush.msra.mxu0 0.0
    %1595 = vmatpush.msra.mxu0 0.0
    %1596 = vmatpush.msra.mxu0 0.0
    %1597 = vmatpush.msra.mxu0 0.0
    %1598 = vmatpush.msra.mxu0 0.0
    %1599 = vmatpush.msra.mxu0 0.0
    %1600 = vmatpush.msra.mxu0 0.0
    %1601 = vmatpush.msra.mxu0 0.0
    %1602 = vmatpush.msra.mxu0 0.0
    %1603 = vmatpush.msra.mxu0 %v1560
    %1604 = vmatpush.msra.mxu0 %v1559
    %1605 = vmatpush.msra.mxu0 %v1558
    %1606 = vmatpush.msra.mxu0 %v1557
    %1607 = vmatmul.f32.gmra.mxu0 %v1589
    %v1608 = vpop.f32.mrf.mxu0
    %v1609 = vadd.f32 %v1587, %v1608
    %1610 = vdwg.mxu0
    %v1611 = vld [vmem:[%s12] sm:$0x1]
    %v1613 = vperm.slane %v1611, 0
    %v1615 = vadd.f32 %v1609, %v1613
    %v1616 = vld [vmem:[%s219] sm:$0xff]
    %v1617 = vxor.u32 %v1615, 2147483648
    %v1618 = vmul.f32 %v1617, 1.442695
    %v1619 = vpow.pop %v1618
    %v1620 = vadd.f32 %v1619, 1.0
    %v1621 = vrcp.pop %v1620
    %v1622 = vmul.f32 %v1620, %v1621
    %v1623 = vsub.f32 1.0, %v1622
    %v1624 = vmul.f32 %v1621, %v1623
    %v1625 = vadd.f32 %v1621, %v1624
    %vm1626 = vweird.f32 %v1620
    %vm1627 = vweird.f32 %v1621
    %vm1628 = vmor %vm1626, %vm1627
    %v1629 = vsel %vm1628, %v1621, %v1625
    %v1630 = vand.u32 2147483647, %v1620
    %vm1631 = vcmp.eq.f32.partialorder %v1630, 8.507059e+37
    %v1632 = vand.u32 %v1620, 2147483648
    %v1633 = vor.u32 1.1754944e-38, %v1632
    %v1634 = vsel %vm1631, %v1633, %v1629
    %v1635 = vmul.f32 1.0, %v1634
    %v1636 = vtanh.pop %v1615
    %1638 = vrot.lane.b32.xlu0 %v1616, 32
    %v1639 = vpop.permute.xlu0 %1638
    %v1641 = vmul.f32 %v1635, %v1639
    %1643 = vrot.lane.b32.xlu0 %v1636, 64
    %v1644 = vpop.permute.xlu0 %1643
    %v1646 = vmul.f32 %v1635, %v1644
    %1648 = vrot.lane.b32.xlu0 %v1646, 32
    %v1649 = vpop.permute.xlu0 %1648
    %v1651 = vadd.f32 %v1641, %v1649
    %v1652 = vtanh.pop %v1651
    %1654 = vrot.lane.b32.xlu0 %v1652, 64
    %v1655 = vpop.permute.xlu0 %1654
    %v1657 = vmul.f32 %v1635, %v1655
    %1659 = vrot.lane.b32.xlu0 %v1657, 32
    %v1660 = vpop.permute.xlu0 %1659
    %1662 = vst.msk [vmem:[%s163] sm:$0xff] %vm66, %v1660
    %1664 = vrot.lane.b32.xlu0 %v1651, 96
    %v1665 = vpop.permute.xlu0 %1664
    %1667 = vst.msk [vmem:[%s219] sm:$0xff] %vm66, %v1665
    %v1668 = vld [vmem:[%s14] sm:$0xff]
    %v1669 = vld [vmem:[%s14 + $0x8] sm:$0xff]
    %v1670 = vld [vmem:[%s14 + $0x10] sm:$0xff]
    %v1671 = vld [vmem:[%s14 + $0x18] sm:$0xff]
    %v1672 = vld [vmem:[%s15] sm:$0x1]
    %v1674 = vperm.slane %v1672, 0
    %v1676 = vsel %vm66, %v1660, 0
    %1678 = vmatpush.msra.mxu0 0.0
    %1679 = vmatpush.msra.mxu0 0.0
    %1680 = vmatpush.msra.mxu0 0.0
    %1681 = vmatpush.msra.mxu0 0.0
    %1682 = vmatpush.msra.mxu0 0.0
    %1683 = vmatpush.msra.mxu0 0.0
    %1684 = vmatpush.msra.mxu0 0.0
    %1685 = vmatpush.msra.mxu0 0.0
    %1686 = vmatpush.msra.mxu0 0.0
    %1687 = vmatpush.msra.mxu0 0.0
    %1688 = vmatpush.msra.mxu0 0.0
    %1689 = vmatpush.msra.mxu0 0.0
    %1690 = vmatpush.msra.mxu0 %v1671
    %1691 = vmatpush.msra.mxu0 %v1670
    %1692 = vmatpush.msra.mxu0 %v1669
    %1693 = vmatpush.msra.mxu0 %v1668
    %1694 = vmatmul.f32.gmra.mxu0 %v1676
    %v1695 = vpop.f32.mrf.mxu0
    %v1696 = vadd.f32 %v1674, %v1695
    %1697 = vdwg.mxu0
    %s1698 = scalar_lea.vmem %s16, 8
    %1699 = vst [vmem:[%s1698] sm:$0xff] %v1696
    %s1700 = sld [smem:[#allocation5]]
    %p1701 = scmp.eq.s32.totalorder %s1700, 1
    // Predicated region
    $region70: #{seq2seq_forward.1} parent=1 // pred_check
      %p1702 = pneg %p1701
    $region71: #{seq2seq_forward.1} parent=1 // pred_check_branch
      %1704 = sbr.rel (%p1702) target = $region73
    $region72: #{seq2seq_forward.1} parent=1 // pred_region
      %s1705 = scalar_lea.vmem %s1, 8
      %v1706 = vld [vmem:[%s1705] sm:$0xff]
      %1707 = vst [vmem:[#allocation4] sm:$0xff] %v1706
    $region73: #{seq2seq_forward.1} parent=1 // pred_fallthru
      _
    %p1708 = scmp.eq.s32.totalorder %s1700, 0
    // Predicated region
    $region74: #{seq2seq_forward.1} parent=1 // pred_check
      %p1709 = pneg %p1708
    $region75: #{seq2seq_forward.1} parent=1 // pred_check_branch
      %1711 = sbr.rel (%p1709) target = $region77
    $region76: #{seq2seq_forward.1} parent=1 // pred_region
      %vm1712 = vcmp.lt.s32.totalorder %v1469, 24
      %v1713 = vsel %vm1712, %v1696, -1e+30
      %1714 = vmax.xlane.f32.xlu0 %v1713
      %v1715 = vpop.xlane.xlu0 %1714
      %vm1716 = vcmp.eq.f32.partialorder %v1713, %v1715
      %v1717 = vsel %vm1716, %v1469, 128
      %v1718 = vand.u32 %v1717, 65535
      %v1719 = vshra.s32 %v1717, 16
      %v1720 = vcvt.s32.f32 %v1718
      %v1721 = vcvt.s32.f32 %v1719
      %1722 = vmin.xlane.f32.xlu0 %v1721
      %v1723 = vpop.xlane.xlu0 %1722
      %vm1724 = vcmp.eq.f32.partialorder %v1721, %v1723
      %v1725 = vsel %vm1724, %v1720, inf
      %1726 = vmin.xlane.f32.xlu0 %v1725
      %v1727 = vpop.xlane.xlu0 %1726
      %v1728 = vcvt.f32.s32 %v1727
      %v1729 = vcvt.f32.s32 %v1723
      %v1730 = vshll.u32 %v1729, 16
      %v1731 = vadd.s32 %v1730, %v1728
      %vm1732 = vcmp.eq.s32.totalorder %v1469, %v1731
      %v1733 = vsel %vm1732, 1, 0
      %v1734 = vcvt.s32.f32 %v1733
      %v1735 = vld [vmem:[%s13] sm:$0xff]
      %v1736 = vld [vmem:[%s13 + $0x8] sm:$0xff]
      %v1737 = vld [vmem:[%s13 + $0x10] sm:$0xff]
      %v1738 = vld [vmem:[%s13 + $0x18] sm:$0xff]
      %v1739 = vld [vmem:[%s13 + $0x20] sm:$0xff]
      %v1740 = vld [vmem:[%s13 + $0x28] sm:$0xff]
      %v1741 = vld [vmem:[%s13 + $0x30] sm:$0xff]
      %v1742 = vld [vmem:[%s13 + $0x38] sm:$0xff]
      %v1743 = vld [vmem:[%s13 + $0x40] sm:$0xff]
      %v1744 = vld [vmem:[%s13 + $0x48] sm:$0xff]
      %v1745 = vld [vmem:[%s13 + $0x50] sm:$0xff]
      %v1746 = vld [vmem:[%s13 + $0x58] sm:$0xff]
      %v1747 = vld [vmem:[%s13 + $0x60] sm:$0xff]
      %v1748 = vld [vmem:[%s13 + $0x68] sm:$0xff]
      %v1749 = vld [vmem:[%s13 + $0x70] sm:$0xff]
      %v1750 = vld [vmem:[%s13 + $0x78] sm:$0xff]
      %1751 = vmatpush.msra.mxu0 %v1750
      %1752 = vmatpush.msra.mxu0 %v1749
      %1753 = vmatpush.msra.mxu0 %v1748
      %1754 = vmatpush.msra.mxu0 %v1747
      %1755 = vmatpush.msra.mxu0 %v1746
      %1756 = vmatpush.msra.mxu0 %v1745
      %1757 = vmatpush.msra.mxu0 %v1744
      %1758 = vmatpush.msra.mxu0 %v1743
      %1759 = vmatpush.msra.mxu0 %v1742
      %1760 = vmatpush.msra.mxu0 %v1741
      %1761 = vmatpush.msra.mxu0 %v1740
      %1762 = vmatpush.msra.mxu0 %v1739
      %1763 = vmatpush.msra.mxu0 %v1738
      %1764 = vmatpush.msra.mxu0 %v1737
      %1765 = vmatpush.msra.mxu0 %v1736
      %1766 = vmatpush.msra.mxu0 %v1735
      %1767 = vmatmul.f32.gmra.mxu0 %v1734
      %v1768 = vpop.f32.mrf.mxu0
      %v1769 = vadd.f32 0.0, %v1768
      %1770 = vdwg.mxu0
      %1771 = vst [vmem:[#allocation4] sm:$0xff] %v1769
    $region77: #{seq2seq_forward.1} parent=1 // pred_fallthru
      _
    %v1772 = vld [vmem:[#allocation4] sm:$0xff]
    %v1773 = vld [vmem:[#allocation2] sm:$0xff]
    %v1774 = vld [vmem:[%s8] sm:$0xff]
    %v1775 = vld [vmem:[%s8 + $0x8] sm:$0xff]
    %v1776 = vld [vmem:[%s8 + $0x10] sm:$0xff]
    %v1777 = vld [vmem:[%s8 + $0x18] sm:$0xff]
    %v1779 = vsel %vm66, %v1773, 0
    %1781 = vmatpush.msra.mxu0 0.0
    %1782 = vmatpush.msra.mxu0 0.0
    %1783 = vmatpush.msra.mxu0 0.0
    %1784 = vmatpush.msra.mxu0 0.0
    %1785 = vmatpush.msra.mxu0 0.0
    %1786 = vmatpush.msra.mxu0 0.0
    %1787 = vmatpush.msra.mxu0 0.0
    %1788 = vmatpush.msra.mxu0 0.0
    %1789 = vmatpush.msra.mxu0 0.0
    %1790 = vmatpush.msra.mxu0 0.0
    %1791 = vmatpush.msra.mxu0 0.0
    %1792 = vmatpush.msra.mxu0 0.0
    %1793 = vmatpush.msra.mxu0 %v1777
    %1794 = vmatpush.msra.mxu0 %v1776
    %1795 = vmatpush.msra.mxu0 %v1775
    %1796 = vmatpush.msra.mxu0 %v1774
    %1797 = vmatmul.f32.gmra.mxu0 %v1779
    %v1798 = vpop.f32.mrf.mxu0
    %v1799 = vadd.f32 0.0, %v1798
    %1800 = vdwg.mxu0
    %v1801 = vadd.f32 %v1772, %v1799
    %v1802 = vld [vmem:[%s9] sm:$0x1]
    %v1804 = vperm.slane %v1802, 0
    %v1806 = vadd.f32 %v1801, %v1804
    %v1807 = vld [vmem:[#allocation3] sm:$0xff]
    %v1808 = vxor.u32 %v1806, 2147483648
    %v1809 = vmul.f32 %v1808, 1.442695
    %v1810 = vpow.pop %v1809
    %v1811 = vadd.f32 %v1810, 1.0
    %v1812 = vrcp.pop %v1811
    %v1813 = vmul.f32 %v1811, %v1812
    %v1814 = vsub.f32 1.0, %v1813
    %v1815 = vmul.f32 %v1812, %v1814
    %v1816 = vadd.f32 %v1812, %v1815
    %vm1817 = vweird.f32 %v1811
    %vm1818 = vweird.f32 %v1812
    %vm1819 = vmor %vm1817, %vm1818
    %v1820 = vsel %vm1819, %v1812, %v1816
    %v1821 = vand.u32 2147483647, %v1811
    %vm1822 = vcmp.eq.f32.partialorder %v1821, 8.507059e+37
    %v1823 = vand.u32 %v1811, 2147483648
    %v1824 = vor.u32 1.1754944e-38, %v1823
    %v1825 = vsel %vm1822, %v1824, %v1820
    %v1826 = vmul.f32 1.0, %v1825
    %v1827 = vtanh.pop %v1806
    %1829 = vrot.lane.b32.xlu0 %v1807, 32
    %v1830 = vpop.permute.xlu0 %1829
    %v1832 = vmul.f32 %v1826, %v1830
    %1834 = vrot.lane.b32.xlu0 %v1827, 64
    %v1835 = vpop.permute.xlu0 %1834
    %v1837 = vmul.f32 %v1826, %v1835
    %1839 = vrot.lane.b32.xlu0 %v1837, 32
    %v1840 = vpop.permute.xlu0 %1839
    %v1842 = vadd.f32 %v1832, %v1840
    %v1843 = vtanh.pop %v1842
    %1845 = vrot.lane.b32.xlu0 %v1843, 64
    %v1846 = vpop.permute.xlu0 %1845
    %v1848 = vmul.f32 %v1826, %v1846
    %1850 = vrot.lane.b32.xlu0 %v1848, 32
    %v1851 = vpop.permute.xlu0 %1850
    %1853 = vst.msk [vmem:[#allocation2] sm:$0xff] %vm66, %v1851
    %1855 = vrot.lane.b32.xlu0 %v1842, 96
    %v1856 = vpop.permute.xlu0 %1855
    %1858 = vst.msk [vmem:[#allocation3] sm:$0xff] %vm66, %v1856
    %v1859 = vld [vmem:[%s10] sm:$0xff]
    %v1860 = vld [vmem:[%s10 + $0x8] sm:$0xff]
    %v1861 = vld [vmem:[%s10 + $0x10] sm:$0xff]
    %v1862 = vld [vmem:[%s10 + $0x18] sm:$0xff]
    %v1863 = vld [vmem:[%s163] sm:$0xff]
    %v1864 = vld [vmem:[%s11] sm:$0xff]
    %v1865 = vld [vmem:[%s11 + $0x8] sm:$0xff]
    %v1866 = vld [vmem:[%s11 + $0x10] sm:$0xff]
    %v1867 = vld [vmem:[%s11 + $0x18] sm:$0xff]
    %v1869 = vsel %vm66, %v1863, 0
    %1871 = vmatpush.msra.mxu0 0.0
    %1872 = vmatpush.msra.mxu0 0.0
    %1873 = vmatpush.msra.mxu0 0.0
    %1874 = vmatpush.msra.mxu0 0.0
    %1875 = vmatpush.msra.mxu0 0.0
    %1876 = vmatpush.msra.mxu0 0.0
    %1877 = vmatpush.msra.mxu0 0.0
    %1878 = vmatpush.msra.mxu0 0.0
    %1879 = vmatpush.msra.mxu0 0.0
    %1880 = vmatpush.msra.mxu0 0.0
    %1881 = vmatpush.msra.mxu0 0.0
    %1882 = vmatpush.msra.mxu0 0.0
    %1883 = vmatpush.msra.mxu0 %v1867
    %1884 = vmatpush.msra.mxu0 %v1866
    %1885 = vmatpush.msra.mxu0 %v1865
    %1886 = vmatpush.msra.mxu0 %v1864
    %1887 = vmatmul.f32.gmra.mxu0 %v1869
    %v1888 = vpop.f32.mrf.mxu0
    %v1889 = vadd.f32 0.0, %v1888
    %1890 = vdwg.mxu0
    %v1891 = vsel %vm66, %v1851, 0
    %1893 = vmatpush.msra.mxu0 0.0
    %1894 = vmatpush.msra.mxu0 0.0
    %1895 = vmatpush.msra.mxu0 0.0
    %1896 = vmatpush.msra.mxu0 0.0
    %1897 = vmatpush.msra.mxu0 0.0
    %1898 = vmatpush.msra.mxu0 0.0
    %1899 = vmatpush.msra.mxu0 0.0
    %1900 = vmatpush.msra.mxu0 0.0
    %1901 = vmatpush.msra.mxu0 0.0
    %1902 = vmatpush.msra.mxu0 0.0
    %1903 = vmatpush.msra.mxu0 0.0
    %1904 = vmatpush.msra.mxu0 0.0
    %1905 = vmatpush.msra.mxu0 %v1862
    %1906 = vmatpush.msra.mxu0 %v1861
    %1907 = vmatpush.msra.mxu0 %v1860
    %1908 = vmatpush.msra.mxu0 %v1859
    %1909 = vmatmul.f32.gmra.mxu0 %v1891
    %v1910 = vpop.f32.mrf.mxu0
    %v1911 = vadd.f32 %v1889, %v1910
    %1912 = vdwg.mxu0
    %v1913 = vld [vmem:[%s12] sm:$0x1]
    %v1915 = vperm.slane %v1913, 0
    %v1917 = vadd.f32 %v1911, %v1915
    %v1918 = vld [vmem:[%s219] sm:$0xff]
    %v1919 = vxor.u32 %v1917, 2147483648
    %v1920 = vmul.f32 %v1919, 1.442695
    %v1921 = vpow.pop %v1920
    %v1922 = vadd.f32 %v1921, 1.0
    %v1923 = vrcp.pop %v1922
    %v1924 = vmul.f32 %v1922, %v1923
    %v1925 = vsub.f32 1.0, %v1924
    %v1926 = vmul.f32 %v1923, %v1925
    %v1927 = vadd.f32 %v1923, %v1926
    %vm1928 = vweird.f32 %v1922
    %vm1929 = vweird.f32 %v1923
    %vm1930 = vmor %vm1928, %vm1929
    %v1931 = vsel %vm1930, %v1923, %v1927
    %v1932 = vand.u32 2147483647, %v1922
    %vm1933 = vcmp.eq.f32.partialorder %v1932, 8.507059e+37
    %v1934 = vand.u32 %v1922, 2147483648
    %v1935 = vor.u32 1.1754944e-38, %v1934
    %v1936 = vsel %vm1933, %v1935, %v1931
    %v1937 = vmul.f32 1.0, %v1936
    %v1938 = vtanh.pop %v1917
    %1940 = vrot.lane.b32.xlu0 %v1918, 32
    %v1941 = vpop.permute.xlu0 %1940
    %v1943 = vmul.f32 %v1937, %v1941
    %1945 = vrot.lane.b32.xlu0 %v1938, 64
    %v1946 = vpop.permute.xlu0 %1945
    %v1948 = vmul.f32 %v1937, %v1946
    %1950 = vrot.lane.b32.xlu0 %v1948, 32
    %v1951 = vpop.permute.xlu0 %1950
    %v1953 = vadd.f32 %v1943, %v1951
    %v1954 = vtanh.pop %v1953
    %1956 = vrot.lane.b32.xlu0 %v1954, 64
    %v1957 = vpop.permute.xlu0 %1956
    %v1959 = vmul.f32 %v1937, %v1957
    %1961 = vrot.lane.b32.xlu0 %v1959, 32
    %v1962 = vpop.permute.xlu0 %1961
    %1964 = vst.msk [vmem:[%s163] sm:$0xff] %vm66, %v1962
    %1966 = vrot.lane.b32.xlu0 %v1953, 96
    %v1967 = vpop.permute.xlu0 %1966
    %1969 = vst.msk [vmem:[%s219] sm:$0xff] %vm66, %v1967
    %v1970 = vld [vmem:[%s14] sm:$0xff]
    %v1971 = vld [vmem:[%s14 + $0x8] sm:$0xff]
    %v1972 = vld [vmem:[%s14 + $0x10] sm:$0xff]
    %v1973 = vld [vmem:[%s14 + $0x18] sm:$0xff]
    %v1974 = vld [vmem:[%s15] sm:$0x1]
    %v1976 = vperm.slane %v1974, 0
    %v1978 = vsel %vm66, %v1962, 0
    %1980 = vmatpush.msra.mxu0 0.0
    %1981 = vmatpush.msra.mxu0 0.0
    %1982 = vmatpush.msra.mxu0 0.0
    %1983 = vmatpush.msra.mxu0 0.0
    %1984 = vmatpush.msra.mxu0 0.0
    %1985 = vmatpush.msra.mxu0 0.0
    %1986 = vmatpush.msra.mxu0 0.0
    %1987 = vmatpush.msra.mxu0 0.0
    %1988 = vmatpush.msra.mxu0 0.0
    %1989 = vmatpush.msra.mxu0 0.0
    %1990 = vmatpush.msra.mxu0 0.0
    %1991 = vmatpush.msra.mxu0 0.0
    %1992 = vmatpush.msra.mxu0 %v1973
    %1993 = vmatpush.msra.mxu0 %v1972
    %1994 = vmatpush.msra.mxu0 %v1971
    %1995 = vmatpush.msra.mxu0 %v1970
    %1996 = vmatmul.f32.gmra.mxu0 %v1978
    %v1997 = vpop.f32.mrf.mxu0
    %v1998 = vadd.f32 %v1976, %v1997
    %1999 = vdwg.mxu0
    %s2000 = scalar_lea.vmem %s16, 16
    %2001 = vst [vmem:[%s2000] sm:$0xff] %v1998
    %s2002 = sld [smem:[#allocation5 + $0x1]]
    %p2003 = scmp.eq.s32.totalorder %s2002, 1
    // Predicated region
    $region78: #{seq2seq_forward.1} parent=1 // pred_check
      %p2004 = pneg %p2003
    $region79: #{seq2seq_forward.1} parent=1 // pred_check_branch
      %2006 = sbr.rel (%p2004) target = $region81
    $region80: #{seq2seq_forward.1} parent=1 // pred_region
      %s2007 = scalar_lea.vmem %s1, 16
      %v2008 = vld [vmem:[%s2007] sm:$0xff]
      %2009 = vst [vmem:[#allocation4] sm:$0xff] %v2008
    $region81: #{seq2seq_forward.1} parent=1 // pred_fallthru
      _
    %p2010 = scmp.eq.s32.totalorder %s2002, 0
    // Predicated region
    $region82: #{seq2seq_forward.1} parent=1 // pred_check
      %p2011 = pneg %p2010
    $region83: #{seq2seq_forward.1} parent=1 // pred_check_branch
      %2013 = sbr.rel (%p2011) target = $region85
    $region84: #{seq2seq_forward.1} parent=1 // pred_region
      %vm2014 = vcmp.lt.s32.totalorder %v1469, 24
      %v2015 = vsel %vm2014, %v1998, -1e+30
      %2016 = vmax.xlane.f32.xlu0 %v2015
      %v2017 = vpop.xlane.xlu0 %2016
      %vm2018 = vcmp.eq.f32.partialorder %v2015, %v2017
      %v2019 = vsel %vm2018, %v1469, 128
      %v2020 = vand.u32 %v2019, 65535
      %v2021 = vshra.s32 %v2019, 16
      %v2022 = vcvt.s32.f32 %v2020
      %v2023 = vcvt.s32.f32 %v2021
      %2024 = vmin.xlane.f32.xlu0 %v2023
      %v2025 = vpop.xlane.xlu0 %2024
      %vm2026 = vcmp.eq.f32.partialorder %v2023, %v2025
      %v2027 = vsel %vm2026, %v2022, inf
      %2028 = vmin.xlane.f32.xlu0 %v2027
      %v2029 = vpop.xlane.xlu0 %2028
      %v2030 = vcvt.f32.s32 %v2029
      %v2031 = vcvt.f32.s32 %v2025
      %v2032 = vshll.u32 %v2031, 16
      %v2033 = vadd.s32 %v2032, %v2030
      %vm2034 = vcmp.eq.s32.totalorder %v1469, %v2033
      %v2035 = vsel %vm2034, 1, 0
      %v2036 = vcvt.s32.f32 %v2035
      %v2037 = vld [vmem:[%s13] sm:$0xff]
      %v2038 = vld [vmem:[%s13 + $0x8] sm:$0xff]
      %v2039 = vld [vmem:[%s13 + $0x10] sm:$0xff]
      %v2040 = vld [vmem:[%s13 + $0x18] sm:$0xff]
      %v2041 = vld [vmem:[%s13 + $0x20] sm:$0xff]
      %v2042 = vld [vmem:[%s13 + $0x28] sm:$0xff]
      %v2043 = vld [vmem:[%s13 + $0x30] sm:$0xff]
      %v2044 = vld [vmem:[%s13 + $0x38] sm:$0xff]
      %v2045 = vld [vmem:[%s13 + $0x40] sm:$0xff]
      %v2046 = vld [vmem:[%s13 + $0x48] sm:$0xff]
      %v2047 = vld [vmem:[%s13 + $0x50] sm:$0xff]
      %v2048 = vld [vmem:[%s13 + $0x58] sm:$0xff]
      %v2049 = vld [vmem:[%s13 + $0x60] sm:$0xff]
      %v2050 = vld [vmem:[%s13 + $0x68] sm:$0xff]
      %v2051 = vld [vmem:[%s13 + $0x70] sm:$0xff]
      %v2052 = vld [vmem:[%s13 + $0x78] sm:$0xff]
      %2053 = vmatpush.msra.mxu0 %v2052
      %2054 = vmatpush.msra.mxu0 %v2051
      %2055 = vmatpush.msra.mxu0 %v2050
      %2056 = vmatpush.msra.mxu0 %v2049
      %2057 = vmatpush.msra.mxu0 %v2048
      %2058 = vmatpush.msra.mxu0 %v2047
      %2059 = vmatpush.msra.mxu0 %v2046
      %2060 = vmatpush.msra.mxu0 %v2045
      %2061 = vmatpush.msra.mxu0 %v2044
      %2062 = vmatpush.msra.mxu0 %v2043
      %2063 = vmatpush.msra.mxu0 %v2042
      %2064 = vmatpush.msra.mxu0 %v2041
      %2065 = vmatpush.msra.mxu0 %v2040
      %2066 = vmatpush.msra.mxu0 %v2039
      %2067 = vmatpush.msra.mxu0 %v2038
      %2068 = vmatpush.msra.mxu0 %v2037
      %2069 = vmatmul.f32.gmra.mxu0 %v2036
      %v2070 = vpop.f32.mrf.mxu0
      %v2071 = vadd.f32 0.0, %v2070
      %2072 = vdwg.mxu0
      %2073 = vst [vmem:[#allocation4] sm:$0xff] %v2071
    $region85: #{seq2seq_forward.1} parent=1 // pred_fallthru
      _
    %v2074 = vld [vmem:[#allocation4] sm:$0xff]
    %v2075 = vld [vmem:[#allocation2] sm:$0xff]
    %v2076 = vld [vmem:[%s8] sm:$0xff]
    %v2077 = vld [vmem:[%s8 + $0x8] sm:$0xff]
    %v2078 = vld [vmem:[%s8 + $0x10] sm:$0xff]
    %v2079 = vld [vmem:[%s8 + $0x18] sm:$0xff]
    %v2081 = vsel %vm66, %v2075, 0
    %2083 = vmatpush.msra.mxu0 0.0
    %2084 = vmatpush.msra.mxu0 0.0
    %2085 = vmatpush.msra.mxu0 0.0
    %2086 = vmatpush.msra.mxu0 0.0
    %2087 = vmatpush.msra.mxu0 0.0
    %2088 = vmatpush.msra.mxu0 0.0
    %2089 = vmatpush.msra.mxu0 0.0
    %2090 = vmatpush.msra.mxu0 0.0
    %2091 = vmatpush.msra.mxu0 0.0
    %2092 = vmatpush.msra.mxu0 0.0
    %2093 = vmatpush.msra.mxu0 0.0
    %2094 = vmatpush.msra.mxu0 0.0
    %2095 = vmatpush.msra.mxu0 %v2079
    %2096 = vmatpush.msra.mxu0 %v2078
    %2097 = vmatpush.msra.mxu0 %v2077
    %2098 = vmatpush.msra.mxu0 %v2076
    %2099 = vmatmul.f32.gmra.mxu0 %v2081
    %v2100 = vpop.f32.mrf.mxu0
    %v2101 = vadd.f32 0.0, %v2100
    %2102 = vdwg.mxu0
    %v2103 = vadd.f32 %v2074, %v2101
    %v2104 = vld [vmem:[%s9] sm:$0x1]
    %v2106 = vperm.slane %v2104, 0
    %v2108 = vadd.f32 %v2103, %v2106
    %v2109 = vld [vmem:[#allocation3] sm:$0xff]
    %v2110 = vxor.u32 %v2108, 2147483648
    %v2111 = vmul.f32 %v2110, 1.442695
    %v2112 = vpow.pop %v2111
    %v2113 = vadd.f32 %v2112, 1.0
    %v2114 = vrcp.pop %v2113
    %v2115 = vmul.f32 %v2113, %v2114
    %v2116 = vsub.f32 1.0, %v2115
    %v2117 = vmul.f32 %v2114, %v2116
    %v2118 = vadd.f32 %v2114, %v2117
    %vm2119 = vweird.f32 %v2113
    %vm2120 = vweird.f32 %v2114
    %vm2121 = vmor %vm2119, %vm2120
    %v2122 = vsel %vm2121, %v2114, %v2118
    %v2123 = vand.u32 2147483647, %v2113
    %vm2124 = vcmp.eq.f32.partialorder %v2123, 8.507059e+37
    %v2125 = vand.u32 %v2113, 2147483648
    %v2126 = vor.u32 1.1754944e-38, %v2125
    %v2127 = vsel %vm2124, %v2126, %v2122
    %v2128 = vmul.f32 1.0, %v2127
    %v2129 = vtanh.pop %v2108
    %2131 = vrot.lane.b32.xlu0 %v2109, 32
    %v2132 = vpop.permute.xlu0 %2131
    %v2134 = vmul.f32 %v2128, %v2132
    %2136 = vrot.lane.b32.xlu0 %v2129, 64
    %v2137 = vpop.permute.xlu0 %2136
    %v2139 = vmul.f32 %v2128, %v2137
    %2141 = vrot.lane.b32.xlu0 %v2139, 32
    %v2142 = vpop.permute.xlu0 %2141
    %v2144 = vadd.f32 %v2134, %v2142
    %v2145 = vtanh.pop %v2144
    %2147 = vrot.lane.b32.xlu0 %v2145, 64
    %v2148 = vpop.permute.xlu0 %2147
    %v2150 = vmul.f32 %v2128, %v2148
    %2152 = vrot.lane.b32.xlu0 %v2150, 32
    %v2153 = vpop.permute.xlu0 %2152
    %2155 = vst.msk [vmem:[#allocation2] sm:$0xff] %vm66, %v2153
    %2157 = vrot.lane.b32.xlu0 %v2144, 96
    %v2158 = vpop.permute.xlu0 %2157
    %2160 = vst.msk [vmem:[#allocation3] sm:$0xff] %vm66, %v2158
    %v2161 = vld [vmem:[%s10] sm:$0xff]
    %v2162 = vld [vmem:[%s10 + $0x8] sm:$0xff]
    %v2163 = vld [vmem:[%s10 + $0x10] sm:$0xff]
    %v2164 = vld [vmem:[%s10 + $0x18] sm:$0xff]
    %v2165 = vld [vmem:[%s163] sm:$0xff]
    %v2166 = vld [vmem:[%s11] sm:$0xff]
    %v2167 = vld [vmem:[%s11 + $0x8] sm:$0xff]
    %v2168 = vld [vmem:[%s11 + $0x10] sm:$0xff]
    %v2169 = vld [vmem:[%s11 + $0x18] sm:$0xff]
    %v2171 = vsel %vm66, %v2165, 0
    %2173 = vmatpush.msra.mxu0 0.0
    %2174 = vmatpush.msra.mxu0 0.0
    %2175 = vmatpush.msra.mxu0 0.0
    %2176 = vmatpush.msra.mxu0 0.0
    %2177 = vmatpush.msra.mxu0 0.0
    %2178 = vmatpush.msra.mxu0 0.0
    %2179 = vmatpush.msra.mxu0 0.0
    %2180 = vmatpush.msra.mxu0 0.0
    %2181 = vmatpush.msra.mxu0 0.0
    %2182 = vmatpush.msra.mxu0 0.0
    %2183 = vmatpush.msra.mxu0 0.0
    %2184 = vmatpush.msra.mxu0 0.0
    %2185 = vmatpush.msra.mxu0 %v2169
    %2186 = vmatpush.msra.mxu0 %v2168
    %2187 = vmatpush.msra.mxu0 %v2167
    %2188 = vmatpush.msra.mxu0 %v2166
    %2189 = vmatmul.f32.gmra.mxu0 %v2171
    %v2190 = vpop.f32.mrf.mxu0
    %v2191 = vadd.f32 0.0, %v2190
    %2192 = vdwg.mxu0
    %v2193 = vsel %vm66, %v2153, 0
    %2195 = vmatpush.msra.mxu0 0.0
    %2196 = vmatpush.msra.mxu0 0.0
    %2197 = vmatpush.msra.mxu0 0.0
    %2198 = vmatpush.msra.mxu0 0.0
    %2199 = vmatpush.msra.mxu0 0.0
    %2200 = vmatpush.msra.mxu0 0.0
    %2201 = vmatpush.msra.mxu0 0.0
    %2202 = vmatpush.msra.mxu0 0.0
    %2203 = vmatpush.msra.mxu0 0.0
    %2204 = vmatpush.msra.mxu0 0.0
    %2205 = vmatpush.msra.mxu0 0.0
    %2206 = vmatpush.msra.mxu0 0.0
    %2207 = vmatpush.msra.mxu0 %v2164
    %2208 = vmatpush.msra.mxu0 %v2163
    %2209 = vmatpush.msra.mxu0 %v2162
    %2210 = vmatpush.msra.mxu0 %v2161
    %2211 = vmatmul.f32.gmra.mxu0 %v2193
    %v2212 = vpop.f32.mrf.mxu0
    %v2213 = vadd.f32 %v2191, %v2212
    %2214 = vdwg.mxu0
    %v2215 = vld [vmem:[%s12] sm:$0x1]
    %v2217 = vperm.slane %v2215, 0
    %v2219 = vadd.f32 %v2213, %v2217
    %v2220 = vld [vmem:[%s219] sm:$0xff]
    %v2221 = vxor.u32 %v2219, 2147483648
    %v2222 = vmul.f32 %v2221, 1.442695
    %v2223 = vpow.pop %v2222
    %v2224 = vadd.f32 %v2223, 1.0
    %v2225 = vrcp.pop %v2224
    %v2226 = vmul.f32 %v2224, %v2225
    %v2227 = vsub.f32 1.0, %v2226
    %v2228 = vmul.f32 %v2225, %v2227
    %v2229 = vadd.f32 %v2225, %v2228
    %vm2230 = vweird.f32 %v2224
    %vm2231 = vweird.f32 %v2225
    %vm2232 = vmor %vm2230, %vm2231
    %v2233 = vsel %vm2232, %v2225, %v2229
    %v2234 = vand.u32 2147483647, %v2224
    %vm2235 = vcmp.eq.f32.partialorder %v2234, 8.507059e+37
    %v2236 = vand.u32 %v2224, 2147483648
    %v2237 = vor.u32 1.1754944e-38, %v2236
    %v2238 = vsel %vm2235, %v2237, %v2233
    %v2239 = vmul.f32 1.0, %v2238
    %v2240 = vtanh.pop %v2219
    %2242 = vrot.lane.b32.xlu0 %v2220, 32
    %v2243 = vpop.permute.xlu0 %2242
    %v2245 = vmul.f32 %v2239, %v2243
    %2247 = vrot.lane.b32.xlu0 %v2240, 64
    %v2248 = vpop.permute.xlu0 %2247
    %v2250 = vmul.f32 %v2239, %v2248
    %2252 = vrot.lane.b32.xlu0 %v2250, 32
    %v2253 = vpop.permute.xlu0 %2252
    %v2255 = vadd.f32 %v2245, %v2253
    %v2256 = vtanh.pop %v2255
    %2258 = vrot.lane.b32.xlu0 %v2256, 64
    %v2259 = vpop.permute.xlu0 %2258
    %v2261 = vmul.f32 %v2239, %v2259
    %2263 = vrot.lane.b32.xlu0 %v2261, 32
    %v2264 = vpop.permute.xlu0 %2263
    %2266 = vst.msk [vmem:[%s163] sm:$0xff] %vm66, %v2264
    %2268 = vrot.lane.b32.xlu0 %v2255, 96
    %v2269 = vpop.permute.xlu0 %2268
    %2271 = vst.msk [vmem:[%s219] sm:$0xff] %vm66, %v2269
    %v2272 = vld [vmem:[%s14] sm:$0xff]
    %v2273 = vld [vmem:[%s14 + $0x8] sm:$0xff]
    %v2274 = vld [vmem:[%s14 + $0x10] sm:$0xff]
    %v2275 = vld [vmem:[%s14 + $0x18] sm:$0xff]
    %v2276 = vld [vmem:[%s15] sm:$0x1]
    %v2278 = vperm.slane %v2276, 0
    %v2280 = vsel %vm66, %v2264, 0
    %2282 = vmatpush.msra.mxu0 0.0
    %2283 = vmatpush.msra.mxu0 0.0
    %2284 = vmatpush.msra.mxu0 0.0
    %2285 = vmatpush.msra.mxu0 0.0
    %2286 = vmatpush.msra.mxu0 0.0
    %2287 = vmatpush.msra.mxu0 0.0
    %2288 = vmatpush.msra.mxu0 0.0
    %2289 = vmatpush.msra.mxu0 0.0
    %2290 = vmatpush.msra.mxu0 0.0
    %2291 = vmatpush.msra.mxu0 0.0
    %2292 = vmatpush.msra.mxu0 0.0
    %2293 = vmatpush.msra.mxu0 0.0
    %2294 = vmatpush.msra.mxu0 %v2275
    %2295 = vmatpush.msra.mxu0 %v2274
    %2296 = vmatpush.msra.mxu0 %v2273
    %2297 = vmatpush.msra.mxu0 %v2272
    %2298 = vmatmul.f32.gmra.mxu0 %v2280
    %v2299 = vpop.f32.mrf.mxu0
    %v2300 = vadd.f32 %v2278, %v2299
    %2301 = vdwg.mxu0
    %s2302 = scalar_lea.vmem %s16, 24
    %2303 = vst [vmem:[%s2302] sm:$0xff] %v2300
    %s2304 = sld [smem:[#allocation5 + $0x2]]
    %p2305 = scmp.eq.s32.totalorder %s2304, 1
    // Predicated region
    $region86: #{seq2seq_forward.1} parent=1 // pred_check
      %p2306 = pneg %p2305
    $region87: #{seq2seq_forward.1} parent=1 // pred_check_branch
      %2308 = sbr.rel (%p2306) target = $region89
    $region88: #{seq2seq_forward.1} parent=1 // pred_region
      %s2309 = scalar_lea.vmem %s1, 24
      %v2310 = vld [vmem:[%s2309] sm:$0xff]
      %2311 = vst [vmem:[#allocation4] sm:$0xff] %v2310
    $region89: #{seq2seq_forward.1} parent=1 // pred_fallthru
      _
    %p2312 = scmp.eq.s32.totalorder %s2304, 0
    // Predicated region
    $region90: #{seq2seq_forward.1} parent=1 // pred_check
      %p2313 = pneg %p2312
    $region91: #{seq2seq_forward.1} parent=1 // pred_check_branch
      %2315 = sbr.rel (%p2313) target = $region93
    $region92: #{seq2seq_forward.1} parent=1 // pred_region
      %vm2316 = vcmp.lt.s32.totalorder %v1469, 24
      %v2317 = vsel %vm2316, %v2300, -1e+30
      %2318 = vmax.xlane.f32.xlu0 %v2317
      %v2319 = vpop.xlane.xlu0 %2318
      %vm2320 = vcmp.eq.f32.partialorder %v2317, %v2319
      %v2321 = vsel %vm2320, %v1469, 128
      %v2322 = vand.u32 %v2321, 65535
      %v2323 = vshra.s32 %v2321, 16
      %v2324 = vcvt.s32.f32 %v2322
      %v2325 = vcvt.s32.f32 %v2323
      %2326 = vmin.xlane.f32.xlu0 %v2325
      %v2327 = vpop.xlane.xlu0 %2326
      %vm2328 = vcmp.eq.f32.partialorder %v2325, %v2327
      %v2329 = vsel %vm2328, %v2324, inf
      %2330 = vmin.xlane.f32.xlu0 %v2329
      %v2331 = vpop.xlane.xlu0 %2330
      %v2332 = vcvt.f32.s32 %v2331
      %v2333 = vcvt.f32.s32 %v2327
      %v2334 = vshll.u32 %v2333, 16
      %v2335 = vadd.s32 %v2334, %v2332
      %vm2336 = vcmp.eq.s32.totalorder %v1469, %v2335
      %v2337 = vsel %vm2336, 1, 0
      %v2338 = vcvt.s32.f32 %v2337
      %v2339 = vld [vmem:[%s13] sm:$0xff]
      %v2340 = vld [vmem:[%s13 + $0x8] sm:$0xff]
      %v2341 = vld [vmem:[%s13 + $0x10] sm:$0xff]
      %v2342 = vld [vmem:[%s13 + $0x18] sm:$0xff]
      %v2343 = vld [vmem:[%s13 + $0x20] sm:$0xff]
      %v2344 = vld [vmem:[%s13 + $0x28] sm:$0xff]
      %v2345 = vld [vmem:[%s13 + $0x30] sm:$0xff]
      %v2346 = vld [vmem:[%s13 + $0x38] sm:$0xff]
      %v2347 = vld [vmem:[%s13 + $0x40] sm:$0xff]
      %v2348 = vld [vmem:[%s13 + $0x48] sm:$0xff]
      %v2349 = vld [vmem:[%s13 + $0x50] sm:$0xff]
      %v2350 = vld [vmem:[%s13 + $0x58] sm:$0xff]
      %v2351 = vld [vmem:[%s13 + $0x60] sm:$0xff]
      %v2352 = vld [vmem:[%s13 + $0x68] sm:$0xff]
      %v2353 = vld [vmem:[%s13 + $0x70] sm:$0xff]
      %v2354 = vld [vmem:[%s13 + $0x78] sm:$0xff]
      %2355 = vmatpush.msra.mxu0 %v2354
      %2356 = vmatpush.msra.mxu0 %v2353
      %2357 = vmatpush.msra.mxu0 %v2352
      %2358 = vmatpush.msra.mxu0 %v2351
      %2359 = vmatpush.msra.mxu0 %v2350
      %2360 = vmatpush.msra.mxu0 %v2349
      %2361 = vmatpush.msra.mxu0 %v2348
      %2362 = vmatpush.msra.mxu0 %v2347
      %2363 = vmatpush.msra.mxu0 %v2346
      %2364 = vmatpush.msra.mxu0 %v2345
      %2365 = vmatpush.msra.mxu0 %v2344
      %2366 = vmatpush.msra.mxu0 %v2343
      %2367 = vmatpush.msra.mxu0 %v2342
      %2368 = vmatpush.msra.mxu0 %v2341
      %2369 = vmatpush.msra.mxu0 %v2340
      %2370 = vmatpush.msra.mxu0 %v2339
      %2371 = vmatmul.f32.gmra.mxu0 %v2338
      %v2372 = vpop.f32.mrf.mxu0
      %v2373 = vadd.f32 0.0, %v2372
      %2374 = vdwg.mxu0
      %2375 = vst [vmem:[#allocation4] sm:$0xff] %v2373
    $region93: #{seq2seq_forward.1} parent=1 // pred_fallthru
      _
    %v2376 = vld [vmem:[#allocation4] sm:$0xff]
    %v2377 = vld [vmem:[#allocation2] sm:$0xff]
    %v2378 = vld [vmem:[%s8] sm:$0xff]
    %v2379 = vld [vmem:[%s8 + $0x8] sm:$0xff]
    %v2380 = vld [vmem:[%s8 + $0x10] sm:$0xff]
    %v2381 = vld [vmem:[%s8 + $0x18] sm:$0xff]
    %v2383 = vsel %vm66, %v2377, 0
    %2385 = vmatpush.msra.mxu0 0.0
    %2386 = vmatpush.msra.mxu0 0.0
    %2387 = vmatpush.msra.mxu0 0.0
    %2388 = vmatpush.msra.mxu0 0.0
    %2389 = vmatpush.msra.mxu0 0.0
    %2390 = vmatpush.msra.mxu0 0.0
    %2391 = vmatpush.msra.mxu0 0.0
    %2392 = vmatpush.msra.mxu0 0.0
    %2393 = vmatpush.msra.mxu0 0.0
    %2394 = vmatpush.msra.mxu0 0.0
    %2395 = vmatpush.msra.mxu0 0.0
    %2396 = vmatpush.msra.mxu0 0.0
    %2397 = vmatpush.msra.mxu0 %v2381
    %2398 = vmatpush.msra.mxu0 %v2380
    %2399 = vmatpush.msra.mxu0 %v2379
    %2400 = vmatpush.msra.mxu0 %v2378
    %2401 = vmatmul.f32.gmra.mxu0 %v2383
    %v2402 = vpop.f32.mrf.mxu0
    %v2403 = vadd.f32 0.0, %v2402
    %2404 = vdwg.mxu0
    %v2405 = vadd.f32 %v2376, %v2403
    %v2406 = vld [vmem:[%s9] sm:$0x1]
    %v2408 = vperm.slane %v2406, 0
    %v2410 = vadd.f32 %v2405, %v2408
    %v2411 = vld [vmem:[#allocation3] sm:$0xff]
    %v2412 = vxor.u32 %v2410, 2147483648
    %v2413 = vmul.f32 %v2412, 1.442695
    %v2414 = vpow.pop %v2413
    %v2415 = vadd.f32 %v2414, 1.0
    %v2416 = vrcp.pop %v2415
    %v2417 = vmul.f32 %v2415, %v2416
    %v2418 = vsub.f32 1.0, %v2417
    %v2419 = vmul.f32 %v2416, %v2418
    %v2420 = vadd.f32 %v2416, %v2419
    %vm2421 = vweird.f32 %v2415
    %vm2422 = vweird.f32 %v2416
    %vm2423 = vmor %vm2421, %vm2422
    %v2424 = vsel %vm2423, %v2416, %v2420
    %v2425 = vand.u32 2147483647, %v2415
    %vm2426 = vcmp.eq.f32.partialorder %v2425, 8.507059e+37
    %v2427 = vand.u32 %v2415, 2147483648
    %v2428 = vor.u32 1.1754944e-38, %v2427
    %v2429 = vsel %vm2426, %v2428, %v2424
    %v2430 = vmul.f32 1.0, %v2429
    %v2431 = vtanh.pop %v2410
    %2433 = vrot.lane.b32.xlu0 %v2411, 32
    %v2434 = vpop.permute.xlu0 %2433
    %v2436 = vmul.f32 %v2430, %v2434
    %2438 = vrot.lane.b32.xlu0 %v2431, 64
    %v2439 = vpop.permute.xlu0 %2438
    %v2441 = vmul.f32 %v2430, %v2439
    %2443 = vrot.lane.b32.xlu0 %v2441, 32
    %v2444 = vpop.permute.xlu0 %2443
    %v2446 = vadd.f32 %v2436, %v2444
    %v2447 = vtanh.pop %v2446
    %2449 = vrot.lane.b32.xlu0 %v2447, 64
    %v2450 = vpop.permute.xlu0 %2449
    %v2452 = vmul.f32 %v2430, %v2450
    %2454 = vrot.lane.b32.xlu0 %v2452, 32
    %v2455 = vpop.permute.xlu0 %2454
    %2457 = vst.msk [vmem:[#allocation2] sm:$0xff] %vm66, %v2455
    %2459 = vrot.lane.b32.xlu0 %v2446, 96
    %v2460 = vpop.permute.xlu0 %2459
    %2462 = vst.msk [vmem:[#allocation3] sm:$0xff] %vm66, %v2460
    %v2463 = vld [vmem:[%s10] sm:$0xff]
    %v2464 = vld [vmem:[%s10 + $0x8] sm:$0xff]
    %v2465 = vld [vmem:[%s10 + $0x10] sm:$0xff]
    %v2466 = vld [vmem:[%s10 + $0x18] sm:$0xff]
    %v2467 = vld [vmem:[%s163] sm:$0xff]
    %v2468 = vld [vmem:[%s11] sm:$0xff]
    %v2469 = vld [vmem:[%s11 + $0x8] sm:$0xff]
    %v2470 = vld [vmem:[%s11 + $0x10] sm:$0xff]
    %v2471 = vld [vmem:[%s11 + $0x18] sm:$0xff]
    %v2473 = vsel %vm66, %v2467, 0
    %2475 = vmatpush.msra.mxu0 0.0
    %2476 = vmatpush.msra.mxu0 0.0
    %2477 = vmatpush.msra.mxu0 0.0
    %2478 = vmatpush.msra.mxu0 0.0
    %2479 = vmatpush.msra.mxu0 0.0
    %2480 = vmatpush.msra.mxu0 0.0
    %2481 = vmatpush.msra.mxu0 0.0
    %2482 = vmatpush.msra.mxu0 0.0
    %2483 = vmatpush.msra.mxu0 0.0
    %2484 = vmatpush.msra.mxu0 0.0
    %2485 = vmatpush.msra.mxu0 0.0
    %2486 = vmatpush.msra.mxu0 0.0
    %2487 = vmatpush.msra.mxu0 %v2471
    %2488 = vmatpush.msra.mxu0 %v2470
    %2489 = vmatpush.msra.mxu0 %v2469
    %2490 = vmatpush.msra.mxu0 %v2468
    %2491 = vmatmul.f32.gmra.mxu0 %v2473
    %v2492 = vpop.f32.mrf.mxu0
    %v2493 = vadd.f32 0.0, %v2492
    %2494 = vdwg.mxu0
    %v2495 = vsel %vm66, %v2455, 0
    %2497 = vmatpush.msra.mxu0 0.0
    %2498 = vmatpush.msra.mxu0 0.0
    %2499 = vmatpush.msra.mxu0 0.0
    %2500 = vmatpush.msra.mxu0 0.0
    %2501 = vmatpush.msra.mxu0 0.0
    %2502 = vmatpush.msra.mxu0 0.0
    %2503 = vmatpush.msra.mxu0 0.0
    %2504 = vmatpush.msra.mxu0 0.0
    %2505 = vmatpush.msra.mxu0 0.0
    %2506 = vmatpush.msra.mxu0 0.0
    %2507 = vmatpush.msra.mxu0 0.0
    %2508 = vmatpush.msra.mxu0 0.0
    %2509 = vmatpush.msra.mxu0 %v2466
    %2510 = vmatpush.msra.mxu0 %v2465
    %2511 = vmatpush.msra.mxu0 %v2464
    %2512 = vmatpush.msra.mxu0 %v2463
    %2513 = vmatmul.f32.gmra.mxu0 %v2495
    %v2514 = vpop.f32.mrf.mxu0
    %v2515 = vadd.f32 %v2493, %v2514
    %2516 = vdwg.mxu0
    %v2517 = vld [vmem:[%s12] sm:$0x1]
    %v2519 = vperm.slane %v2517, 0
    %v2521 = vadd.f32 %v2515, %v2519
    %v2522 = vld [vmem:[%s219] sm:$0xff]
    %v2523 = vxor.u32 %v2521, 2147483648
    %v2524 = vmul.f32 %v2523, 1.442695
    %v2525 = vpow.pop %v2524
    %v2526 = vadd.f32 %v2525, 1.0
    %v2527 = vrcp.pop %v2526
    %v2528 = vmul.f32 %v2526, %v2527
    %v2529 = vsub.f32 1.0, %v2528
    %v2530 = vmul.f32 %v2527, %v2529
    %v2531 = vadd.f32 %v2527, %v2530
    %vm2532 = vweird.f32 %v2526
    %vm2533 = vweird.f32 %v2527
    %vm2534 = vmor %vm2532, %vm2533
    %v2535 = vsel %vm2534, %v2527, %v2531
    %v2536 = vand.u32 2147483647, %v2526
    %vm2537 = vcmp.eq.f32.partialorder %v2536, 8.507059e+37
    %v2538 = vand.u32 %v2526, 2147483648
    %v2539 = vor.u32 1.1754944e-38, %v2538
    %v2540 = vsel %vm2537, %v2539, %v2535
    %v2541 = vmul.f32 1.0, %v2540
    %v2542 = vtanh.pop %v2521
    %2544 = vrot.lane.b32.xlu0 %v2522, 32
    %v2545 = vpop.permute.xlu0 %2544
    %v2547 = vmul.f32 %v2541, %v2545
    %2549 = vrot.lane.b32.xlu0 %v2542, 64
    %v2550 = vpop.permute.xlu0 %2549
    %v2552 = vmul.f32 %v2541, %v2550
    %2554 = vrot.lane.b32.xlu0 %v2552, 32
    %v2555 = vpop.permute.xlu0 %2554
    %v2557 = vadd.f32 %v2547, %v2555
    %v2558 = vtanh.pop %v2557
    %2560 = vrot.lane.b32.xlu0 %v2558, 64
    %v2561 = vpop.permute.xlu0 %2560
    %v2563 = vmul.f32 %v2541, %v2561
    %2565 = vrot.lane.b32.xlu0 %v2563, 32
    %v2566 = vpop.permute.xlu0 %2565
    %2568 = vst.msk [vmem:[%s163] sm:$0xff] %vm66, %v2566
    %2570 = vrot.lane.b32.xlu0 %v2557, 96
    %v2571 = vpop.permute.xlu0 %2570
    %2573 = vst.msk [vmem:[%s219] sm:$0xff] %vm66, %v2571
    %v2574 = vld [vmem:[%s14] sm:$0xff]
    %v2575 = vld [vmem:[%s14 + $0x8] sm:$0xff]
    %v2576 = vld [vmem:[%s14 + $0x10] sm:$0xff]
    %v2577 = vld [vmem:[%s14 + $0x18] sm:$0xff]
    %v2578 = vld [vmem:[%s15] sm:$0x1]
    %v2580 = vperm.slane %v2578, 0
    %v2582 = vsel %vm66, %v2566, 0
    %2584 = vmatpush.msra.mxu0 0.0
    %2585 = vmatpush.msra.mxu0 0.0
    %2586 = vmatpush.msra.mxu0 0.0
    %2587 = vmatpush.msra.mxu0 0.0
    %2588 = vmatpush.msra.mxu0 0.0
    %2589 = vmatpush.msra.mxu0 0.0
    %2590 = vmatpush.msra.mxu0 0.0
    %2591 = vmatpush.msra.mxu0 0.0
    %2592 = vmatpush.msra.mxu0 0.0
    %2593 = vmatpush.msra.mxu0 0.0
    %2594 = vmatpush.msra.mxu0 0.0
    %2595 = vmatpush.msra.mxu0 0.0
    %2596 = vmatpush.msra.mxu0 %v2577
    %2597 = vmatpush.msra.mxu0 %v2576
    %2598 = vmatpush.msra.mxu0 %v2575
    %2599 = vmatpush.msra.mxu0 %v2574
    %2600 = vmatmul.f32.gmra.mxu0 %v2582
    %v2601 = vpop.f32.mrf.mxu0
    %v2602 = vadd.f32 %v2580, %v2601
    %2603 = vdwg.mxu0
    %s2604 = scalar_lea.vmem %s16, 32
    %2605 = vst [vmem:[%s2604] sm:$0xff] %v2602
    %s2606 = sld [smem:[#allocation5 + $0x3]]
    %p2607 = scmp.eq.s32.totalorder %s2606, 1
    // Predicated region
    $region94: #{seq2seq_forward.1} parent=1 // pred_check
      %p2608 = pneg %p2607
    $region95: #{seq2seq_forward.1} parent=1 // pred_check_branch
      %2610 = sbr.rel (%p2608) target = $region97
    $region96: #{seq2seq_forward.1} parent=1 // pred_region
      %s2611 = scalar_lea.vmem %s1, 32
      %v2612 = vld [vmem:[%s2611] sm:$0xff]
      %2613 = vst [vmem:[#allocation4] sm:$0xff] %v2612
    $region97: #{seq2seq_forward.1} parent=1 // pred_fallthru
      _
    %p2614 = scmp.eq.s32.totalorder %s2606, 0
    // Predicated region
    $region98: #{seq2seq_forward.1} parent=1 // pred_check
      %p2615 = pneg %p2614
    $region99: #{seq2seq_forward.1} parent=1 // pred_check_branch
      %2617 = sbr.rel (%p2615) target = $region101
    $region100: #{seq2seq_forward.1} parent=1 // pred_region
      %vm2618 = vcmp.lt.s32.totalorder %v1469, 24
      %v2619 = vsel %vm2618, %v2602, -1e+30
      %2620 = vmax.xlane.f32.xlu0 %v2619
      %v2621 = vpop.xlane.xlu0 %2620
      %vm2622 = vcmp.eq.f32.partialorder %v2619, %v2621
      %v2623 = vsel %vm2622, %v1469, 128
      %v2624 = vand.u32 %v2623, 65535
      %v2625 = vshra.s32 %v2623, 16
      %v2626 = vcvt.s32.f32 %v2624
      %v2627 = vcvt.s32.f32 %v2625
      %2628 = vmin.xlane.f32.xlu0 %v2627
      %v2629 = vpop.xlane.xlu0 %2628
      %vm2630 = vcmp.eq.f32.partialorder %v2627, %v2629
      %v2631 = vsel %vm2630, %v2626, inf
      %2632 = vmin.xlane.f32.xlu0 %v2631
      %v2633 = vpop.xlane.xlu0 %2632
      %v2634 = vcvt.f32.s32 %v2633
      %v2635 = vcvt.f32.s32 %v2629
      %v2636 = vshll.u32 %v2635, 16
      %v2637 = vadd.s32 %v2636, %v2634
      %vm2638 = vcmp.eq.s32.totalorder %v1469, %v2637
      %v2639 = vsel %vm2638, 1, 0
      %v2640 = vcvt.s32.f32 %v2639
      %v2641 = vld [vmem:[%s13] sm:$0xff]
      %v2642 = vld [vmem:[%s13 + $0x8] sm:$0xff]
      %v2643 = vld [vmem:[%s13 + $0x10] sm:$0xff]
      %v2644 = vld [vmem:[%s13 + $0x18] sm:$0xff]
      %v2645 = vld [vmem:[%s13 + $0x20] sm:$0xff]
      %v2646 = vld [vmem:[%s13 + $0x28] sm:$0xff]
      %v2647 = vld [vmem:[%s13 + $0x30] sm:$0xff]
      %v2648 = vld [vmem:[%s13 + $0x38] sm:$0xff]
      %v2649 = vld [vmem:[%s13 + $0x40] sm:$0xff]
      %v2650 = vld [vmem:[%s13 + $0x48] sm:$0xff]
      %v2651 = vld [vmem:[%s13 + $0x50] sm:$0xff]
      %v2652 = vld [vmem:[%s13 + $0x58] sm:$0xff]
      %v2653 = vld [vmem:[%s13 + $0x60] sm:$0xff]
      %v2654 = vld [vmem:[%s13 + $0x68] sm:$0xff]
      %v2655 = vld [vmem:[%s13 + $0x70] sm:$0xff]
      %v2656 = vld [vmem:[%s13 + $0x78] sm:$0xff]
      %2657 = vmatpush.msra.mxu0 %v2656
      %2658 = vmatpush.msra.mxu0 %v2655
      %2659 = vmatpush.msra.mxu0 %v2654
      %2660 = vmatpush.msra.mxu0 %v2653
      %2661 = vmatpush.msra.mxu0 %v2652
      %2662 = vmatpush.msra.mxu0 %v2651
      %2663 = vmatpush.msra.mxu0 %v2650
      %2664 = vmatpush.msra.mxu0 %v2649
      %2665 = vmatpush.msra.mxu0 %v2648
      %2666 = vmatpush.msra.mxu0 %v2647
      %2667 = vmatpush.msra.mxu0 %v2646
      %2668 = vmatpush.msra.mxu0 %v2645
      %2669 = vmatpush.msra.mxu0 %v2644
      %2670 = vmatpush.msra.mxu0 %v2643
      %2671 = vmatpush.msra.mxu0 %v2642
      %2672 = vmatpush.msra.mxu0 %v2641
      %2673 = vmatmul.f32.gmra.mxu0 %v2640
      %v2674 = vpop.f32.mrf.mxu0
      %v2675 = vadd.f32 0.0, %v2674
      %2676 = vdwg.mxu0
      %2677 = vst [vmem:[#allocation4] sm:$0xff] %v2675
    $region101: #{seq2seq_forward.1} parent=1 // pred_fallthru
      _
    %v2678 = vld [vmem:[#allocation4] sm:$0xff]
    %v2679 = vld [vmem:[#allocation2] sm:$0xff]
    %v2680 = vld [vmem:[%s8] sm:$0xff]
    %v2681 = vld [vmem:[%s8 + $0x8] sm:$0xff]
    %v2682 = vld [vmem:[%s8 + $0x10] sm:$0xff]
    %v2683 = vld [vmem:[%s8 + $0x18] sm:$0xff]
    %v2685 = vsel %vm66, %v2679, 0
    %2687 = vmatpush.msra.mxu0 0.0
    %2688 = vmatpush.msra.mxu0 0.0
    %2689 = vmatpush.msra.mxu0 0.0
    %2690 = vmatpush.msra.mxu0 0.0
    %2691 = vmatpush.msra.mxu0 0.0
    %2692 = vmatpush.msra.mxu0 0.0
    %2693 = vmatpush.msra.mxu0 0.0
    %2694 = vmatpush.msra.mxu0 0.0
    %2695 = vmatpush.msra.mxu0 0.0
    %2696 = vmatpush.msra.mxu0 0.0
    %2697 = vmatpush.msra.mxu0 0.0
    %2698 = vmatpush.msra.mxu0 0.0
    %2699 = vmatpush.msra.mxu0 %v2683
    %2700 = vmatpush.msra.mxu0 %v2682
    %2701 = vmatpush.msra.mxu0 %v2681
    %2702 = vmatpush.msra.mxu0 %v2680
    %2703 = vmatmul.f32.gmra.mxu0 %v2685
    %v2704 = vpop.f32.mrf.mxu0
    %v2705 = vadd.f32 0.0, %v2704
    %2706 = vdwg.mxu0
    %v2707 = vadd.f32 %v2678, %v2705
    %v2708 = vld [vmem:[%s9] sm:$0x1]
    %v2710 = vperm.slane %v2708, 0
    %v2712 = vadd.f32 %v2707, %v2710
    %v2713 = vld [vmem:[#allocation3] sm:$0xff]
    %v2714 = vxor.u32 %v2712, 2147483648
    %v2715 = vmul.f32 %v2714, 1.442695
    %v2716 = vpow.pop %v2715
    %v2717 = vadd.f32 %v2716, 1.0
    %v2718 = vrcp.pop %v2717
    %v2719 = vmul.f32 %v2717, %v2718
    %v2720 = vsub.f32 1.0, %v2719
    %v2721 = vmul.f32 %v2718, %v2720
    %v2722 = vadd.f32 %v2718, %v2721
    %vm2723 = vweird.f32 %v2717
    %vm2724 = vweird.f32 %v2718
    %vm2725 = vmor %vm2723, %vm2724
    %v2726 = vsel %vm2725, %v2718, %v2722
    %v2727 = vand.u32 2147483647, %v2717
    %vm2728 = vcmp.eq.f32.partialorder %v2727, 8.507059e+37
    %v2729 = vand.u32 %v2717, 2147483648
    %v2730 = vor.u32 1.1754944e-38, %v2729
    %v2731 = vsel %vm2728, %v2730, %v2726
    %v2732 = vmul.f32 1.0, %v2731
    %v2733 = vtanh.pop %v2712
    %2735 = vrot.lane.b32.xlu0 %v2713, 32
    %v2736 = vpop.permute.xlu0 %2735
    %v2738 = vmul.f32 %v2732, %v2736
    %2740 = vrot.lane.b32.xlu0 %v2733, 64
    %v2741 = vpop.permute.xlu0 %2740
    %v2743 = vmul.f32 %v2732, %v2741
    %2745 = vrot.lane.b32.xlu0 %v2743, 32
    %v2746 = vpop.permute.xlu0 %2745
    %v2748 = vadd.f32 %v2738, %v2746
    %v2749 = vtanh.pop %v2748
    %2751 = vrot.lane.b32.xlu0 %v2749, 64
    %v2752 = vpop.permute.xlu0 %2751
    %v2754 = vmul.f32 %v2732, %v2752
    %2756 = vrot.lane.b32.xlu0 %v2754, 32
    %v2757 = vpop.permute.xlu0 %2756
    %2759 = vst.msk [vmem:[#allocation2] sm:$0xff] %vm66, %v2757
    %2761 = vrot.lane.b32.xlu0 %v2748, 96
    %v2762 = vpop.permute.xlu0 %2761
    %2764 = vst.msk [vmem:[#allocation3] sm:$0xff] %vm66, %v2762
    %v2765 = vld [vmem:[%s10] sm:$0xff]
    %v2766 = vld [vmem:[%s10 + $0x8] sm:$0xff]
    %v2767 = vld [vmem:[%s10 + $0x10] sm:$0xff]
    %v2768 = vld [vmem:[%s10 + $0x18] sm:$0xff]
    %v2769 = vld [vmem:[%s163] sm:$0xff]
    %v2770 = vld [vmem:[%s11] sm:$0xff]
    %v2771 = vld [vmem:[%s11 + $0x8] sm:$0xff]
    %v2772 = vld [vmem:[%s11 + $0x10] sm:$0xff]
    %v2773 = vld [vmem:[%s11 + $0x18] sm:$0xff]
    %v2775 = vsel %vm66, %v2769, 0
    %2777 = vmatpush.msra.mxu0 0.0
    %2778 = vmatpush.msra.mxu0 0.0
    %2779 = vmatpush.msra.mxu0 0.0
    %2780 = vmatpush.msra.mxu0 0.0
    %2781 = vmatpush.msra.mxu0 0.0
    %2782 = vmatpush.msra.mxu0 0.0
    %2783 = vmatpush.msra.mxu0 0.0
    %2784 = vmatpush.msra.mxu0 0.0
    %2785 = vmatpush.msra.mxu0 0.0
    %2786 = vmatpush.msra.mxu0 0.0
    %2787 = vmatpush.msra.mxu0 0.0
    %2788 = vmatpush.msra.mxu0 0.0
    %2789 = vmatpush.msra.mxu0 %v2773
    %2790 = vmatpush.msra.mxu0 %v2772
    %2791 = vmatpush.msra.mxu0 %v2771
    %2792 = vmatpush.msra.mxu0 %v2770
    %2793 = vmatmul.f32.gmra.mxu0 %v2775
    %v2794 = vpop.f32.mrf.mxu0
    %v2795 = vadd.f32 0.0, %v2794
    %2796 = vdwg.mxu0
    %v2797 = vsel %vm66, %v2757, 0
    %2799 = vmatpush.msra.mxu0 0.0
    %2800 = vmatpush.msra.mxu0 0.0
    %2801 = vmatpush.msra.mxu0 0.0
    %2802 = vmatpush.msra.mxu0 0.0
    %2803 = vmatpush.msra.mxu0 0.0
    %2804 = vmatpush.msra.mxu0 0.0
    %2805 = vmatpush.msra.mxu0 0.0
    %2806 = vmatpush.msra.mxu0 0.0
    %2807 = vmatpush.msra.mxu0 0.0
    %2808 = vmatpush.msra.mxu0 0.0
    %2809 = vmatpush.msra.mxu0 0.0
    %2810 = vmatpush.msra.mxu0 0.0
    %2811 = vmatpush.msra.mxu0 %v2768
    %2812 = vmatpush.msra.mxu0 %v2767
    %2813 = vmatpush.msra.mxu0 %v2766
    %2814 = vmatpush.msra.mxu0 %v2765
    %2815 = vmatmul.f32.gmra.mxu0 %v2797
    %v2816 = vpop.f32.mrf.mxu0
    %v2817 = vadd.f32 %v2795, %v2816
    %2818 = vdwg.mxu0
    %v2819 = vld [vmem:[%s12] sm:$0x1]
    %v2821 = vperm.slane %v2819, 0
    %v2823 = vadd.f32 %v2817, %v2821
    %v2824 = vld [vmem:[%s219] sm:$0xff]
    %v2825 = vxor.u32 %v2823, 2147483648
    %v2826 = vmul.f32 %v2825, 1.442695
    %v2827 = vpow.pop %v2826
    %v2828 = vadd.f32 %v2827, 1.0
    %v2829 = vrcp.pop %v2828
    %v2830 = vmul.f32 %v2828, %v2829
    %v2831 = vsub.f32 1.0, %v2830
    %v2832 = vmul.f32 %v2829, %v2831
    %v2833 = vadd.f32 %v2829, %v2832
    %vm2834 = vweird.f32 %v2828
    %vm2835 = vweird.f32 %v2829
    %vm2836 = vmor %vm2834, %vm2835
    %v2837 = vsel %vm2836, %v2829, %v2833
    %v2838 = vand.u32 2147483647, %v2828
    %vm2839 = vcmp.eq.f32.partialorder %v2838, 8.507059e+37
    %v2840 = vand.u32 %v2828, 2147483648
    %v2841 = vor.u32 1.1754944e-38, %v2840
    %v2842 = vsel %vm2839, %v2841, %v2837
    %v2843 = vmul.f32 1.0, %v2842
    %v2844 = vtanh.pop %v2823
    %2846 = vrot.lane.b32.xlu0 %v2824, 32
    %v2847 = vpop.permute.xlu0 %2846
    %v2849 = vmul.f32 %v2843, %v2847
    %2851 = vrot.lane.b32.xlu0 %v2844, 64
    %v2852 = vpop.permute.xlu0 %2851
    %v2854 = vmul.f32 %v2843, %v2852
    %2856 = vrot.lane.b32.xlu0 %v2854, 32
    %v2857 = vpop.permute.xlu0 %2856
    %v2859 = vadd.f32 %v2849, %v2857
    %v2860 = vtanh.pop %v2859
    %2862 = vrot.lane.b32.xlu0 %v2860, 64
    %v2863 = vpop.permute.xlu0 %2862
    %v2865 = vmul.f32 %v2843, %v2863
    %2867 = vrot.lane.b32.xlu0 %v2865, 32
    %v2868 = vpop.permute.xlu0 %2867
    %2870 = vst.msk [vmem:[%s163] sm:$0xff] %vm66, %v2868
    %2872 = vrot.lane.b32.xlu0 %v2859, 96
    %v2873 = vpop.permute.xlu0 %2872
    %2875 = vst.msk [vmem:[%s219] sm:$0xff] %vm66, %v2873
    %v2876 = vld [vmem:[%s14] sm:$0xff]
    %v2877 = vld [vmem:[%s14 + $0x8] sm:$0xff]
    %v2878 = vld [vmem:[%s14 + $0x10] sm:$0xff]
    %v2879 = vld [vmem:[%s14 + $0x18] sm:$0xff]
    %v2880 = vld [vmem:[%s15] sm:$0x1]
    %v2882 = vperm.slane %v2880, 0
    %v2884 = vsel %vm66, %v2868, 0
    %2886 = vmatpush.msra.mxu0 0.0
    %2887 = vmatpush.msra.mxu0 0.0
    %2888 = vmatpush.msra.mxu0 0.0
    %2889 = vmatpush.msra.mxu0 0.0
    %2890 = vmatpush.msra.mxu0 0.0
    %2891 = vmatpush.msra.mxu0 0.0
    %2892 = vmatpush.msra.mxu0 0.0
    %2893 = vmatpush.msra.mxu0 0.0
    %2894 = vmatpush.msra.mxu0 0.0
    %2895 = vmatpush.msra.mxu0 0.0
    %2896 = vmatpush.msra.mxu0 0.0
    %2897 = vmatpush.msra.mxu0 0.0
    %2898 = vmatpush.msra.mxu0 %v2879
    %2899 = vmatpush.msra.mxu0 %v2878
    %2900 = vmatpush.msra.mxu0 %v2877
    %2901 = vmatpush.msra.mxu0 %v2876
    %2902 = vmatmul.f32.gmra.mxu0 %v2884
    %v2903 = vpop.f32.mrf.mxu0
    %v2904 = vadd.f32 %v2882, %v2903
    %2905 = vdwg.mxu0
    %s2906 = scalar_lea.vmem %s16, 40
    %2907 = vst [vmem:[%s2906] sm:$0xff] %v2904
    %s2908 = sld [smem:[#allocation5 + $0x4]]
    %p2909 = scmp.eq.s32.totalorder %s2908, 1
    // Predicated region
    $region102: #{seq2seq_forward.1} parent=1 // pred_check
      %p2910 = pneg %p2909
    $region103: #{seq2seq_forward.1} parent=1 // pred_check_branch
      %2912 = sbr.rel (%p2910) target = $region105
    $region104: #{seq2seq_forward.1} parent=1 // pred_region
      %s2913 = scalar_lea.vmem %s1, 40
      %v2914 = vld [vmem:[%s2913] sm:$0xff]
      %2915 = vst [vmem:[#allocation4] sm:$0xff] %v2914
    $region105: #{seq2seq_forward.1} parent=1 // pred_fallthru
      _
    %p2916 = scmp.eq.s32.totalorder %s2908, 0
    // Predicated region
    $region106: #{seq2seq_forward.1} parent=1 // pred_check
      %p2917 = pneg %p2916
    $region107: #{seq2seq_forward.1} parent=1 // pred_check_branch
      %2919 = sbr.rel (%p2917) target = $region109
    $region108: #{seq2seq_forward.1} parent=1 // pred_region
      %vm2920 = vcmp.lt.s32.totalorder %v1469, 24
      %v2921 = vsel %vm2920, %v2904, -1e+30
      %2922 = vmax.xlane.f32.xlu0 %v2921
      %v2923 = vpop.xlane.xlu0 %2922
      %vm2924 = vcmp.eq.f32.partialorder %v2921, %v2923
      %v2925 = vsel %vm2924, %v1469, 128
      %v2926 = vand.u32 %v2925, 65535
      %v2927 = vshra.s32 %v2925, 16
      %v2928 = vcvt.s32.f32 %v2926
      %v2929 = vcvt.s32.f32 %v2927
      %2930 = vmin.xlane.f32.xlu0 %v2929
      %v2931 = vpop.xlane.xlu0 %2930
      %vm2932 = vcmp.eq.f32.partialorder %v2929, %v2931
      %v2933 = vsel %vm2932, %v2928, inf
      %2934 = vmin.xlane.f32.xlu0 %v2933
      %v2935 = vpop.xlane.xlu0 %2934
      %v2936 = vcvt.f32.s32 %v2935
      %v2937 = vcvt.f32.s32 %v2931
      %v2938 = vshll.u32 %v2937, 16
      %v2939 = vadd.s32 %v2938, %v2936
      %vm2940 = vcmp.eq.s32.totalorder %v1469, %v2939
      %v2941 = vsel %vm2940, 1, 0
      %v2942 = vcvt.s32.f32 %v2941
      %v2943 = vld [vmem:[%s13] sm:$0xff]
      %v2944 = vld [vmem:[%s13 + $0x8] sm:$0xff]
      %v2945 = vld [vmem:[%s13 + $0x10] sm:$0xff]
      %v2946 = vld [vmem:[%s13 + $0x18] sm:$0xff]
      %v2947 = vld [vmem:[%s13 + $0x20] sm:$0xff]
      %v2948 = vld [vmem:[%s13 + $0x28] sm:$0xff]
      %v2949 = vld [vmem:[%s13 + $0x30] sm:$0xff]
      %v2950 = vld [vmem:[%s13 + $0x38] sm:$0xff]
      %v2951 = vld [vmem:[%s13 + $0x40] sm:$0xff]
      %v2952 = vld [vmem:[%s13 + $0x48] sm:$0xff]
      %v2953 = vld [vmem:[%s13 + $0x50] sm:$0xff]
      %v2954 = vld [vmem:[%s13 + $0x58] sm:$0xff]
      %v2955 = vld [vmem:[%s13 + $0x60] sm:$0xff]
      %v2956 = vld [vmem:[%s13 + $0x68] sm:$0xff]
      %v2957 = vld [vmem:[%s13 + $0x70] sm:$0xff]
      %v2958 = vld [vmem:[%s13 + $0x78] sm:$0xff]
      %2959 = vmatpush.msra.mxu0 %v2958
      %2960 = vmatpush.msra.mxu0 %v2957
      %2961 = vmatpush.msra.mxu0 %v2956
      %2962 = vmatpush.msra.mxu0 %v2955
      %2963 = vmatpush.msra.mxu0 %v2954
      %2964 = vmatpush.msra.mxu0 %v2953
      %2965 = vmatpush.msra.mxu0 %v2952
      %2966 = vmatpush.msra.mxu0 %v2951
      %2967 = vmatpush.msra.mxu0 %v2950
      %2968 = vmatpush.msra.mxu0 %v2949
      %2969 = vmatpush.msra.mxu0 %v2948
      %2970 = vmatpush.msra.mxu0 %v2947
      %2971 = vmatpush.msra.mxu0 %v2946
      %2972 = vmatpush.msra.mxu0 %v2945
      %2973 = vmatpush.msra.mxu0 %v2944
      %2974 = vmatpush.msra.mxu0 %v2943
      %2975 = vmatmul.f32.gmra.mxu0 %v2942
      %v2976 = vpop.f32.mrf.mxu0
      %v2977 = vadd.f32 0.0, %v2976
      %2978 = vdwg.mxu0
      %2979 = vst [vmem:[#allocation4] sm:$0xff] %v2977
    $region109: #{seq2seq_forward.1} parent=1 // pred_fallthru
      _
    %v2980 = vld [vmem:[#allocation4] sm:$0xff]
    %v2981 = vld [vmem:[#allocation2] sm:$0xff]
    %v2982 = vld [vmem:[%s8] sm:$0xff]
    %v2983 = vld [vmem:[%s8 + $0x8] sm:$0xff]
    %v2984 = vld [vmem:[%s8 + $0x10] sm:$0xff]
    %v2985 = vld [vmem:[%s8 + $0x18] sm:$0xff]
    %v2987 = vsel %vm66, %v2981, 0
    %2989 = vmatpush.msra.mxu0 0.0
    %2990 = vmatpush.msra.mxu0 0.0
    %2991 = vmatpush.msra.mxu0 0.0
    %2992 = vmatpush.msra.mxu0 0.0
    %2993 = vmatpush.msra.mxu0 0.0
    %2994 = vmatpush.msra.mxu0 0.0
    %2995 = vmatpush.msra.mxu0 0.0
    %2996 = vmatpush.msra.mxu0 0.0
    %2997 = vmatpush.msra.mxu0 0.0
    %2998 = vmatpush.msra.mxu0 0.0
    %2999 = vmatpush.msra.mxu0 0.0
    %3000 = vmatpush.msra.mxu0 0.0
    %3001 = vmatpush.msra.mxu0 %v2985
    %3002 = vmatpush.msra.mxu0 %v2984
    %3003 = vmatpush.msra.mxu0 %v2983
    %3004 = vmatpush.msra.mxu0 %v2982
    %3005 = vmatmul.f32.gmra.mxu0 %v2987
    %v3006 = vpop.f32.mrf.mxu0
    %v3007 = vadd.f32 0.0, %v3006
    %3008 = vdwg.mxu0
    %v3009 = vadd.f32 %v2980, %v3007
    %v3010 = vld [vmem:[%s9] sm:$0x1]
    %v3012 = vperm.slane %v3010, 0
    %v3014 = vadd.f32 %v3009, %v3012
    %v3015 = vld [vmem:[#allocation3] sm:$0xff]
    %v3016 = vxor.u32 %v3014, 2147483648
    %v3017 = vmul.f32 %v3016, 1.442695
    %v3018 = vpow.pop %v3017
    %v3019 = vadd.f32 %v3018, 1.0
    %v3020 = vrcp.pop %v3019
    %v3021 = vmul.f32 %v3019, %v3020
    %v3022 = vsub.f32 1.0, %v3021
    %v3023 = vmul.f32 %v3020, %v3022
    %v3024 = vadd.f32 %v3020, %v3023
    %vm3025 = vweird.f32 %v3019
    %vm3026 = vweird.f32 %v3020
    %vm3027 = vmor %vm3025, %vm3026
    %v3028 = vsel %vm3027, %v3020, %v3024
    %v3029 = vand.u32 2147483647, %v3019
    %vm3030 = vcmp.eq.f32.partialorder %v3029, 8.507059e+37
    %v3031 = vand.u32 %v3019, 2147483648
    %v3032 = vor.u32 1.1754944e-38, %v3031
    %v3033 = vsel %vm3030, %v3032, %v3028
    %v3034 = vmul.f32 1.0, %v3033
    %v3035 = vtanh.pop %v3014
    %3037 = vrot.lane.b32.xlu0 %v3015, 32
    %v3038 = vpop.permute.xlu0 %3037
    %v3040 = vmul.f32 %v3034, %v3038
    %3042 = vrot.lane.b32.xlu0 %v3035, 64
    %v3043 = vpop.permute.xlu0 %3042
    %v3045 = vmul.f32 %v3034, %v3043
    %3047 = vrot.lane.b32.xlu0 %v3045, 32
    %v3048 = vpop.permute.xlu0 %3047
    %v3050 = vadd.f32 %v3040, %v3048
    %v3051 = vtanh.pop %v3050
    %3053 = vrot.lane.b32.xlu0 %v3051, 64
    %v3054 = vpop.permute.xlu0 %3053
    %v3056 = vmul.f32 %v3034, %v3054
    %3058 = vrot.lane.b32.xlu0 %v3056, 32
    %v3059 = vpop.permute.xlu0 %3058
    %3061 = vst.msk [vmem:[#allocation2] sm:$0xff] %vm66, %v3059
    %3063 = vrot.lane.b32.xlu0 %v3050, 96
    %v3064 = vpop.permute.xlu0 %3063
    %3066 = vst.msk [vmem:[#allocation3] sm:$0xff] %vm66, %v3064
    %v3067 = vld [vmem:[%s10] sm:$0xff]
    %v3068 = vld [vmem:[%s10 + $0x8] sm:$0xff]
    %v3069 = vld [vmem:[%s10 + $0x10] sm:$0xff]
    %v3070 = vld [vmem:[%s10 + $0x18] sm:$0xff]
    %v3071 = vld [vmem:[%s163] sm:$0xff]
    %v3072 = vld [vmem:[%s11] sm:$0xff]
    %v3073 = vld [vmem:[%s11 + $0x8] sm:$0xff]
    %v3074 = vld [vmem:[%s11 + $0x10] sm:$0xff]
    %v3075 = vld [vmem:[%s11 + $0x18] sm:$0xff]
    %v3077 = vsel %vm66, %v3071, 0
    %3079 = vmatpush.msra.mxu0 0.0
    %3080 = vmatpush.msra.mxu0 0.0
    %3081 = vmatpush.msra.mxu0 0.0
    %3082 = vmatpush.msra.mxu0 0.0
    %3083 = vmatpush.msra.mxu0 0.0
    %3084 = vmatpush.msra.mxu0 0.0
    %3085 = vmatpush.msra.mxu0 0.0
    %3086 = vmatpush.msra.mxu0 0.0
    %3087 = vmatpush.msra.mxu0 0.0
    %3088 = vmatpush.msra.mxu0 0.0
    %3089 = vmatpush.msra.mxu0 0.0
    %3090 = vmatpush.msra.mxu0 0.0
    %3091 = vmatpush.msra.mxu0 %v3075
    %3092 = vmatpush.msra.mxu0 %v3074
    %3093 = vmatpush.msra.mxu0 %v3073
    %3094 = vmatpush.msra.mxu0 %v3072
    %3095 = vmatmul.f32.gmra.mxu0 %v3077
    %v3096 = vpop.f32.mrf.mxu0
    %v3097 = vadd.f32 0.0, %v3096
    %3098 = vdwg.mxu0
    %v3099 = vsel %vm66, %v3059, 0
    %3101 = vmatpush.msra.mxu0 0.0
    %3102 = vmatpush.msra.mxu0 0.0
    %3103 = vmatpush.msra.mxu0 0.0
    %3104 = vmatpush.msra.mxu0 0.0
    %3105 = vmatpush.msra.mxu0 0.0
    %3106 = vmatpush.msra.mxu0 0.0
    %3107 = vmatpush.msra.mxu0 0.0
    %3108 = vmatpush.msra.mxu0 0.0
    %3109 = vmatpush.msra.mxu0 0.0
    %3110 = vmatpush.msra.mxu0 0.0
    %3111 = vmatpush.msra.mxu0 0.0
    %3112 = vmatpush.msra.mxu0 0.0
    %3113 = vmatpush.msra.mxu0 %v3070
    %3114 = vmatpush.msra.mxu0 %v3069
    %3115 = vmatpush.msra.mxu0 %v3068
    %3116 = vmatpush.msra.mxu0 %v3067
    %3117 = vmatmul.f32.gmra.mxu0 %v3099
    %v3118 = vpop.f32.mrf.mxu0
    %v3119 = vadd.f32 %v3097, %v3118
    %3120 = vdwg.mxu0
    %v3121 = vld [vmem:[%s12] sm:$0x1]
    %v3123 = vperm.slane %v3121, 0
    %v3125 = vadd.f32 %v3119, %v3123
    %v3126 = vld [vmem:[%s219] sm:$0xff]
    %v3127 = vxor.u32 %v3125, 2147483648
    %v3128 = vmul.f32 %v3127, 1.442695
    %v3129 = vpow.pop %v3128
    %v3130 = vadd.f32 %v3129, 1.0
    %v3131 = vrcp.pop %v3130
    %v3132 = vmul.f32 %v3130, %v3131
    %v3133 = vsub.f32 1.0, %v3132
    %v3134 = vmul.f32 %v3131, %v3133
    %v3135 = vadd.f32 %v3131, %v3134
    %vm3136 = vweird.f32 %v3130
    %vm3137 = vweird.f32 %v3131
    %vm3138 = vmor %vm3136, %vm3137
    %v3139 = vsel %vm3138, %v3131, %v3135
    %v3140 = vand.u32 2147483647, %v3130
    %vm3141 = vcmp.eq.f32.partialorder %v3140, 8.507059e+37
    %v3142 = vand.u32 %v3130, 2147483648
    %v3143 = vor.u32 1.1754944e-38, %v3142
    %v3144 = vsel %vm3141, %v3143, %v3139
    %v3145 = vmul.f32 1.0, %v3144
    %v3146 = vtanh.pop %v3125
    %3148 = vrot.lane.b32.xlu0 %v3126, 32
    %v3149 = vpop.permute.xlu0 %3148
    %v3151 = vmul.f32 %v3145, %v3149
    %3153 = vrot.lane.b32.xlu0 %v3146, 64
    %v3154 = vpop.permute.xlu0 %3153
    %v3156 = vmul.f32 %v3145, %v3154
    %3158 = vrot.lane.b32.xlu0 %v3156, 32
    %v3159 = vpop.permute.xlu0 %3158
    %v3161 = vadd.f32 %v3151, %v3159
    %v3162 = vtanh.pop %v3161
    %3164 = vrot.lane.b32.xlu0 %v3162, 64
    %v3165 = vpop.permute.xlu0 %3164
    %v3167 = vmul.f32 %v3145, %v3165
    %3169 = vrot.lane.b32.xlu0 %v3167, 32
    %v3170 = vpop.permute.xlu0 %3169
    %3172 = vst.msk [vmem:[%s163] sm:$0xff] %vm66, %v3170
    %3174 = vrot.lane.b32.xlu0 %v3161, 96
    %v3175 = vpop.permute.xlu0 %3174
    %3177 = vst.msk [vmem:[%s219] sm:$0xff] %vm66, %v3175
    %v3178 = vld [vmem:[%s14] sm:$0xff]
    %v3179 = vld [vmem:[%s14 + $0x8] sm:$0xff]
    %v3180 = vld [vmem:[%s14 + $0x10] sm:$0xff]
    %v3181 = vld [vmem:[%s14 + $0x18] sm:$0xff]
    %v3182 = vld [vmem:[%s15] sm:$0x1]
    %v3184 = vperm.slane %v3182, 0
    %v3186 = vsel %vm66, %v3170, 0
    %3188 = vmatpush.msra.mxu0 0.0
    %3189 = vmatpush.msra.mxu0 0.0
    %3190 = vmatpush.msra.mxu0 0.0
    %3191 = vmatpush.msra.mxu0 0.0
    %3192 = vmatpush.msra.mxu0 0.0
    %3193 = vmatpush.msra.mxu0 0.0
    %3194 = vmatpush.msra.mxu0 0.0
    %3195 = vmatpush.msra.mxu0 0.0
    %3196 = vmatpush.msra.mxu0 0.0
    %3197 = vmatpush.msra.mxu0 0.0
    %3198 = vmatpush.msra.mxu0 0.0
    %3199 = vmatpush.msra.mxu0 0.0
    %3200 = vmatpush.msra.mxu0 %v3181
    %3201 = vmatpush.msra.mxu0 %v3180
    %3202 = vmatpush.msra.mxu0 %v3179
    %3203 = vmatpush.msra.mxu0 %v3178
    %3204 = vmatmul.f32.gmra.mxu0 %v3186
    %v3205 = vpop.f32.mrf.mxu0
    %v3206 = vadd.f32 %v3184, %v3205
    %3207 = vdwg.mxu0
    %s3208 = scalar_lea.vmem %s16, 48
    %3209 = vst [vmem:[%s3208] sm:$0xff] %v3206
    %s3210 = sld [smem:[#allocation5 + $0x5]]
    %p3211 = scmp.eq.s32.totalorder %s3210, 1
    // Predicated region
    $region110: #{seq2seq_forward.1} parent=1 // pred_check
      %p3212 = pneg %p3211
    $region111: #{seq2seq_forward.1} parent=1 // pred_check_branch
      %3214 = sbr.rel (%p3212) target = $region113
    $region112: #{seq2seq_forward.1} parent=1 // pred_region
      %s3215 = scalar_lea.vmem %s1, 48
      %v3216 = vld [vmem:[%s3215] sm:$0xff]
      %3217 = vst [vmem:[#allocation4] sm:$0xff] %v3216
    $region113: #{seq2seq_forward.1} parent=1 // pred_fallthru
      _
    %p3218 = scmp.eq.s32.totalorder %s3210, 0
    // Predicated region
    $region114: #{seq2seq_forward.1} parent=1 // pred_check
      %p3219 = pneg %p3218
    $region115: #{seq2seq_forward.1} parent=1 // pred_check_branch
      %3221 = sbr.rel (%p3219) target = $region117
    $region116: #{seq2seq_forward.1} parent=1 // pred_region
      %vm3222 = vcmp.lt.s32.totalorder %v1469, 24
      %v3223 = vsel %vm3222, %v3206, -1e+30
      %3224 = vmax.xlane.f32.xlu0 %v3223
      %v3225 = vpop.xlane.xlu0 %3224
      %vm3226 = vcmp.eq.f32.partialorder %v3223, %v3225
      %v3227 = vsel %vm3226, %v1469, 128
      %v3228 = vand.u32 %v3227, 65535
      %v3229 = vshra.s32 %v3227, 16
      %v3230 = vcvt.s32.f32 %v3228
      %v3231 = vcvt.s32.f32 %v3229
      %3232 = vmin.xlane.f32.xlu0 %v3231
      %v3233 = vpop.xlane.xlu0 %3232
      %vm3234 = vcmp.eq.f32.partialorder %v3231, %v3233
      %v3235 = vsel %vm3234, %v3230, inf
      %3236 = vmin.xlane.f32.xlu0 %v3235
      %v3237 = vpop.xlane.xlu0 %3236
      %v3238 = vcvt.f32.s32 %v3237
      %v3239 = vcvt.f32.s32 %v3233
      %v3240 = vshll.u32 %v3239, 16
      %v3241 = vadd.s32 %v3240, %v3238
      %vm3242 = vcmp.eq.s32.totalorder %v1469, %v3241
      %v3243 = vsel %vm3242, 1, 0
      %v3244 = vcvt.s32.f32 %v3243
      %v3245 = vld [vmem:[%s13] sm:$0xff]
      %v3246 = vld [vmem:[%s13 + $0x8] sm:$0xff]
      %v3247 = vld [vmem:[%s13 + $0x10] sm:$0xff]
      %v3248 = vld [vmem:[%s13 + $0x18] sm:$0xff]
      %v3249 = vld [vmem:[%s13 + $0x20] sm:$0xff]
      %v3250 = vld [vmem:[%s13 + $0x28] sm:$0xff]
      %v3251 = vld [vmem:[%s13 + $0x30] sm:$0xff]
      %v3252 = vld [vmem:[%s13 + $0x38] sm:$0xff]
      %v3253 = vld [vmem:[%s13 + $0x40] sm:$0xff]
      %v3254 = vld [vmem:[%s13 + $0x48] sm:$0xff]
      %v3255 = vld [vmem:[%s13 + $0x50] sm:$0xff]
      %v3256 = vld [vmem:[%s13 + $0x58] sm:$0xff]
      %v3257 = vld [vmem:[%s13 + $0x60] sm:$0xff]
      %v3258 = vld [vmem:[%s13 + $0x68] sm:$0xff]
      %v3259 = vld [vmem:[%s13 + $0x70] sm:$0xff]
      %v3260 = vld [vmem:[%s13 + $0x78] sm:$0xff]
      %3261 = vmatpush.msra.mxu0 %v3260
      %3262 = vmatpush.msra.mxu0 %v3259
      %3263 = vmatpush.msra.mxu0 %v3258
      %3264 = vmatpush.msra.mxu0 %v3257
      %3265 = vmatpush.msra.mxu0 %v3256
      %3266 = vmatpush.msra.mxu0 %v3255
      %3267 = vmatpush.msra.mxu0 %v3254
      %3268 = vmatpush.msra.mxu0 %v3253
      %3269 = vmatpush.msra.mxu0 %v3252
      %3270 = vmatpush.msra.mxu0 %v3251
      %3271 = vmatpush.msra.mxu0 %v3250
      %3272 = vmatpush.msra.mxu0 %v3249
      %3273 = vmatpush.msra.mxu0 %v3248
      %3274 = vmatpush.msra.mxu0 %v3247
      %3275 = vmatpush.msra.mxu0 %v3246
      %3276 = vmatpush.msra.mxu0 %v3245
      %3277 = vmatmul.f32.gmra.mxu0 %v3244
      %v3278 = vpop.f32.mrf.mxu0
      %v3279 = vadd.f32 0.0, %v3278
      %3280 = vdwg.mxu0
      %3281 = vst [vmem:[#allocation4] sm:$0xff] %v3279
    $region117: #{seq2seq_forward.1} parent=1 // pred_fallthru
      _
    %v3282 = vld [vmem:[#allocation4] sm:$0xff]
    %v3283 = vld [vmem:[#allocation2] sm:$0xff]
    %v3284 = vld [vmem:[%s8] sm:$0xff]
    %v3285 = vld [vmem:[%s8 + $0x8] sm:$0xff]
    %v3286 = vld [vmem:[%s8 + $0x10] sm:$0xff]
    %v3287 = vld [vmem:[%s8 + $0x18] sm:$0xff]
    %v3289 = vsel %vm66, %v3283, 0
    %3291 = vmatpush.msra.mxu0 0.0
    %3292 = vmatpush.msra.mxu0 0.0
    %3293 = vmatpush.msra.mxu0 0.0
    %3294 = vmatpush.msra.mxu0 0.0
    %3295 = vmatpush.msra.mxu0 0.0
    %3296 = vmatpush.msra.mxu0 0.0
    %3297 = vmatpush.msra.mxu0 0.0
    %3298 = vmatpush.msra.mxu0 0.0
    %3299 = vmatpush.msra.mxu0 0.0
    %3300 = vmatpush.msra.mxu0 0.0
    %3301 = vmatpush.msra.mxu0 0.0
    %3302 = vmatpush.msra.mxu0 0.0
    %3303 = vmatpush.msra.mxu0 %v3287
    %3304 = vmatpush.msra.mxu0 %v3286
    %3305 = vmatpush.msra.mxu0 %v3285
    %3306 = vmatpush.msra.mxu0 %v3284
    %3307 = vmatmul.f32.gmra.mxu0 %v3289
    %v3308 = vpop.f32.mrf.mxu0
    %v3309 = vadd.f32 0.0, %v3308
    %3310 = vdwg.mxu0
    %v3311 = vadd.f32 %v3282, %v3309
    %v3312 = vld [vmem:[%s9] sm:$0x1]
    %v3314 = vperm.slane %v3312, 0
    %v3316 = vadd.f32 %v3311, %v3314
    %v3317 = vld [vmem:[#allocation3] sm:$0xff]
    %v3318 = vxor.u32 %v3316, 2147483648
    %v3319 = vmul.f32 %v3318, 1.442695
    %v3320 = vpow.pop %v3319
    %v3321 = vadd.f32 %v3320, 1.0
    %v3322 = vrcp.pop %v3321
    %v3323 = vmul.f32 %v3321, %v3322
    %v3324 = vsub.f32 1.0, %v3323
    %v3325 = vmul.f32 %v3322, %v3324
    %v3326 = vadd.f32 %v3322, %v3325
    %vm3327 = vweird.f32 %v3321
    %vm3328 = vweird.f32 %v3322
    %vm3329 = vmor %vm3327, %vm3328
    %v3330 = vsel %vm3329, %v3322, %v3326
    %v3331 = vand.u32 2147483647, %v3321
    %vm3332 = vcmp.eq.f32.partialorder %v3331, 8.507059e+37
    %v3333 = vand.u32 %v3321, 2147483648
    %v3334 = vor.u32 1.1754944e-38, %v3333
    %v3335 = vsel %vm3332, %v3334, %v3330
    %v3336 = vmul.f32 1.0, %v3335
    %v3337 = vtanh.pop %v3316
    %3339 = vrot.lane.b32.xlu0 %v3317, 32
    %v3340 = vpop.permute.xlu0 %3339
    %v3342 = vmul.f32 %v3336, %v3340
    %3344 = vrot.lane.b32.xlu0 %v3337, 64
    %v3345 = vpop.permute.xlu0 %3344
    %v3347 = vmul.f32 %v3336, %v3345
    %3349 = vrot.lane.b32.xlu0 %v3347, 32
    %v3350 = vpop.permute.xlu0 %3349
    %v3352 = vadd.f32 %v3342, %v3350
    %v3353 = vtanh.pop %v3352
    %3355 = vrot.lane.b32.xlu0 %v3353, 64
    %v3356 = vpop.permute.xlu0 %3355
    %v3358 = vmul.f32 %v3336, %v3356
    %3360 = vrot.lane.b32.xlu0 %v3358, 32
    %v3361 = vpop.permute.xlu0 %3360
    %3363 = vst.msk [vmem:[#allocation2] sm:$0xff] %vm66, %v3361
    %3365 = vrot.lane.b32.xlu0 %v3352, 96
    %v3366 = vpop.permute.xlu0 %3365
    %3368 = vst.msk [vmem:[#allocation3] sm:$0xff] %vm66, %v3366
    %v3369 = vld [vmem:[%s10] sm:$0xff]
    %v3370 = vld [vmem:[%s10 + $0x8] sm:$0xff]
    %v3371 = vld [vmem:[%s10 + $0x10] sm:$0xff]
    %v3372 = vld [vmem:[%s10 + $0x18] sm:$0xff]
    %v3373 = vld [vmem:[%s163] sm:$0xff]
    %v3374 = vld [vmem:[%s11] sm:$0xff]
    %v3375 = vld [vmem:[%s11 + $0x8] sm:$0xff]
    %v3376 = vld [vmem:[%s11 + $0x10] sm:$0xff]
    %v3377 = vld [vmem:[%s11 + $0x18] sm:$0xff]
    %v3379 = vsel %vm66, %v3373, 0
    %3381 = vmatpush.msra.mxu0 0.0
    %3382 = vmatpush.msra.mxu0 0.0
    %3383 = vmatpush.msra.mxu0 0.0
    %3384 = vmatpush.msra.mxu0 0.0
    %3385 = vmatpush.msra.mxu0 0.0
    %3386 = vmatpush.msra.mxu0 0.0
    %3387 = vmatpush.msra.mxu0 0.0
    %3388 = vmatpush.msra.mxu0 0.0
    %3389 = vmatpush.msra.mxu0 0.0
    %3390 = vmatpush.msra.mxu0 0.0
    %3391 = vmatpush.msra.mxu0 0.0
    %3392 = vmatpush.msra.mxu0 0.0
    %3393 = vmatpush.msra.mxu0 %v3377
    %3394 = vmatpush.msra.mxu0 %v3376
    %3395 = vmatpush.msra.mxu0 %v3375
    %3396 = vmatpush.msra.mxu0 %v3374
    %3397 = vmatmul.f32.gmra.mxu0 %v3379
    %v3398 = vpop.f32.mrf.mxu0
    %v3399 = vadd.f32 0.0, %v3398
    %3400 = vdwg.mxu0
    %v3401 = vsel %vm66, %v3361, 0
    %3403 = vmatpush.msra.mxu0 0.0
    %3404 = vmatpush.msra.mxu0 0.0
    %3405 = vmatpush.msra.mxu0 0.0
    %3406 = vmatpush.msra.mxu0 0.0
    %3407 = vmatpush.msra.mxu0 0.0
    %3408 = vmatpush.msra.mxu0 0.0
    %3409 = vmatpush.msra.mxu0 0.0
    %3410 = vmatpush.msra.mxu0 0.0
    %3411 = vmatpush.msra.mxu0 0.0
    %3412 = vmatpush.msra.mxu0 0.0
    %3413 = vmatpush.msra.mxu0 0.0
    %3414 = vmatpush.msra.mxu0 0.0
    %3415 = vmatpush.msra.mxu0 %v3372
    %3416 = vmatpush.msra.mxu0 %v3371
    %3417 = vmatpush.msra.mxu0 %v3370
    %3418 = vmatpush.msra.mxu0 %v3369
    %3419 = vmatmul.f32.gmra.mxu0 %v3401
    %v3420 = vpop.f32.mrf.mxu0
    %v3421 = vadd.f32 %v3399, %v3420
    %3422 = vdwg.mxu0
    %v3423 = vld [vmem:[%s12] sm:$0x1]
    %v3425 = vperm.slane %v3423, 0
    %v3427 = vadd.f32 %v3421, %v3425
    %v3428 = vld [vmem:[%s219] sm:$0xff]
    %v3429 = vxor.u32 %v3427, 2147483648
    %v3430 = vmul.f32 %v3429, 1.442695
    %v3431 = vpow.pop %v3430
    %v3432 = vadd.f32 %v3431, 1.0
    %v3433 = vrcp.pop %v3432
    %v3434 = vmul.f32 %v3432, %v3433
    %v3435 = vsub.f32 1.0, %v3434
    %v3436 = vmul.f32 %v3433, %v3435
    %v3437 = vadd.f32 %v3433, %v3436
    %vm3438 = vweird.f32 %v3432
    %vm3439 = vweird.f32 %v3433
    %vm3440 = vmor %vm3438, %vm3439
    %v3441 = vsel %vm3440, %v3433, %v3437
    %v3442 = vand.u32 2147483647, %v3432
    %vm3443 = vcmp.eq.f32.partialorder %v3442, 8.507059e+37
    %v3444 = vand.u32 %v3432, 2147483648
    %v3445 = vor.u32 1.1754944e-38, %v3444
    %v3446 = vsel %vm3443, %v3445, %v3441
    %v3447 = vmul.f32 1.0, %v3446
    %v3448 = vtanh.pop %v3427
    %3450 = vrot.lane.b32.xlu0 %v3428, 32
    %v3451 = vpop.permute.xlu0 %3450
    %v3453 = vmul.f32 %v3447, %v3451
    %3455 = vrot.lane.b32.xlu0 %v3448, 64
    %v3456 = vpop.permute.xlu0 %3455
    %v3458 = vmul.f32 %v3447, %v3456
    %3460 = vrot.lane.b32.xlu0 %v3458, 32
    %v3461 = vpop.permute.xlu0 %3460
    %v3463 = vadd.f32 %v3453, %v3461
    %v3464 = vtanh.pop %v3463
    %3466 = vrot.lane.b32.xlu0 %v3464, 64
    %v3467 = vpop.permute.xlu0 %3466
    %v3469 = vmul.f32 %v3447, %v3467
    %3471 = vrot.lane.b32.xlu0 %v3469, 32
    %v3472 = vpop.permute.xlu0 %3471
    %3474 = vst.msk [vmem:[%s163] sm:$0xff] %vm66, %v3472
    %3476 = vrot.lane.b32.xlu0 %v3463, 96
    %v3477 = vpop.permute.xlu0 %3476
    %3479 = vst.msk [vmem:[%s219] sm:$0xff] %vm66, %v3477
    %v3480 = vld [vmem:[%s14] sm:$0xff]
    %v3481 = vld [vmem:[%s14 + $0x8] sm:$0xff]
    %v3482 = vld [vmem:[%s14 + $0x10] sm:$0xff]
    %v3483 = vld [vmem:[%s14 + $0x18] sm:$0xff]
    %v3484 = vld [vmem:[%s15] sm:$0x1]
    %v3486 = vperm.slane %v3484, 0
    %v3488 = vsel %vm66, %v3472, 0
    %3490 = vmatpush.msra.mxu0 0.0
    %3491 = vmatpush.msra.mxu0 0.0
    %3492 = vmatpush.msra.mxu0 0.0
    %3493 = vmatpush.msra.mxu0 0.0
    %3494 = vmatpush.msra.mxu0 0.0
    %3495 = vmatpush.msra.mxu0 0.0
    %3496 = vmatpush.msra.mxu0 0.0
    %3497 = vmatpush.msra.mxu0 0.0
    %3498 = vmatpush.msra.mxu0 0.0
    %3499 = vmatpush.msra.mxu0 0.0
    %3500 = vmatpush.msra.mxu0 0.0
    %3501 = vmatpush.msra.mxu0 0.0
    %3502 = vmatpush.msra.mxu0 %v3483
    %3503 = vmatpush.msra.mxu0 %v3482
    %3504 = vmatpush.msra.mxu0 %v3481
    %3505 = vmatpush.msra.mxu0 %v3480
    %3506 = vmatmul.f32.gmra.mxu0 %v3488
    %v3507 = vpop.f32.mrf.mxu0
    %v3508 = vadd.f32 %v3486, %v3507
    %3509 = vdwg.mxu0
    %s3510 = scalar_lea.vmem %s16, 56
    %3511 = vst [vmem:[%s3510] sm:$0xff] %v3508
    // Predicated region
    $region118: #{seq2seq_forward.1} parent=1 // pred_check
      _
    $region119: #{seq2seq_forward.1} parent=1 // pred_check_branch
      %3513 = sbr.rel (0) target = $region121
    $region120: #{seq2seq_forward.1} parent=1 // pred_region
      _
    $region121: #{seq2seq_forward.1} parent=1 // pred_fallthru
      _
    // Predicated region
    $region122: #{seq2seq_forward.1} parent=1 // pred_check
      _
    $region123: #{seq2seq_forward.1} parent=1 // pred_check_branch
      %3515 = sbr.rel (0) target = $region125
    $region124: #{seq2seq_forward.1} parent=1 // pred_region
      _
    $region125: #{seq2seq_forward.1} parent=1 // pred_fallthru
      _
    %3516 = vsyncpa [#allocation6], 1

</llo_original>
